<compile_context>
chip_gen: v6e
topology: v6e:2x2x1
jax: 0.10.0
libtpu: 0.0.40
codegen_flags: <defaults>
</compile_context>

<pallas_src>
import functools

import jax
import jax.numpy as jnp
from jax import lax
from jax.experimental import pallas as pl
from jax.experimental.pallas import tpu as pltpu

_EPS = 1e-5
_LANE = 128
_VMEM_LIMIT = 48 * 1024 * 1024


def _ceil_to(x, m):
    return (x + m - 1) // m * m


def _row_spec(tm, cols):
    return pl.BlockSpec((tm, cols), lambda i: (i, 0))


def _const_spec(rows, cols):
    return pl.BlockSpec((rows, cols), lambda i: (0, 0))


# --------------------------- Pallas kernels ---------------------------------

def _make_matmul_stats_kernel(fuse_norm, tm, m_true):
    """(optional BN+ReLU of input) -> bf16 matmul -> y tile + per-tile channel stats."""

    def kernel(*refs):
        if fuse_norm:
            x_ref, sc_ref, sh_ref, w_ref, y_ref, sum_ref, ssq_ref = refs
            a = jnp.maximum(x_ref[...] * sc_ref[...] + sh_ref[...], 0.0)
            if m_true % tm != 0:
                # Zero out padded rows so they don't pollute this stage's stats.
                row = (pl.program_id(0) * tm
                       + lax.broadcasted_iota(jnp.int32, (tm, 1), 0))
                a = jnp.where(row < m_true, a, 0.0)
            a = a.astype(jnp.bfloat16)
        else:
            x_ref, w_ref, y_ref, sum_ref, ssq_ref = refs
            a = x_ref[...]

        y = jnp.dot(a, w_ref[...], preferred_element_type=jnp.float32)
        y_ref[...] = y
        # Per-tile partial sums; reduced over tiles in the wrapper (keeps the
        # grid axis "parallel" instead of an in-kernel accumulator).
        sum_ref[...] = jnp.sum(y, axis=0, keepdims=True)
        ssq_ref[...] = jnp.sum(y * y, axis=0, keepdims=True)

    return kernel


def _norm_relu_kernel(y_ref, sc_ref, sh_ref, o_ref):
    o_ref[...] = jnp.maximum(
        y_ref[...] * sc_ref[...] + sh_ref[...], 0.0).astype(o_ref.dtype)


def _make_final_kernel(res_is_normed):
    """BN3 + (BN of downsample residual | identity residual) + add + ReLU."""

    def kernel(*refs):
        if res_is_normed:
            y_ref, sc_ref, sh_ref, r_ref, rsc_ref, rsh_ref, o_ref = refs
            res = r_ref[...] * rsc_ref[...] + rsh_ref[...]
        else:
            y_ref, sc_ref, sh_ref, r_ref, o_ref = refs
            res = r_ref[...]
        out = y_ref[...] * sc_ref[...] + sh_ref[...] + res
        o_ref[...] = jnp.maximum(out, 0.0).astype(o_ref.dtype)

    return kernel


# --------------------------- pallas_call wrappers ---------------------------

def matmul_stats(x2d, w_bf16, *, m_true, tm, scale=None, shift=None):
    """Row-tiled matmul (+ optional fused BN+ReLU on the input); returns
    (y, per_tile_sum, per_tile_sumsq)."""
    Mp, Kp = x2d.shape
    Cp = w_bf16.shape[1]
    n_tiles = Mp // tm
    fuse = scale is not None
    kernel = _make_matmul_stats_kernel(fuse, tm, m_true)

    in_specs = [_row_spec(tm, Kp)]
    args = [x2d]
    if fuse:
        in_specs += [_const_spec(1, Kp), _const_spec(1, Kp)]
        args += [scale.reshape(1, Kp), shift.reshape(1, Kp)]
    in_specs.append(_const_spec(Kp, Cp))
    args.append(w_bf16)

    return pl.pallas_call(
        kernel,
        out_shape=(jax.ShapeDtypeStruct((Mp, Cp), jnp.float32),
                   jax.ShapeDtypeStruct((n_tiles, Cp), jnp.float32),
                   jax.ShapeDtypeStruct((n_tiles, Cp), jnp.float32)),
        grid_spec=pltpu.PrefetchScalarGridSpec(
            num_scalar_prefetch=0,
            grid=(n_tiles,),
            in_specs=in_specs,
            out_specs=(_row_spec(tm, Cp),
                       pl.BlockSpec((1, Cp), lambda i: (i, 0)),
                       pl.BlockSpec((1, Cp), lambda i: (i, 0)))),
        compiler_params=pltpu.CompilerParams(
            dimension_semantics=("parallel",),
            vmem_limit_bytes=_VMEM_LIMIT),
    )(*args)


def bn_scale_shift(psum, pssq, gamma, beta, m_true):
    """Fold per-tile partials into per-channel scale/shift (training-mode BN)."""
    s = jnp.sum(psum, axis=0)
    sq = jnp.sum(pssq, axis=0)
    mean = s / m_true
    # E[y^2]-E[y]^2 in f32: acceptable here; padded channels give var=0.
    var = jnp.maximum(sq / m_true - mean * mean, 0.0)
    scale = gamma * lax.rsqrt(var + _EPS)
    shift = beta - mean * scale
    return scale, shift


def norm_relu(y, scale, shift, *, tm, out_dtype):
    Mp, Cp = y.shape
    n_tiles = Mp // tm
    return pl.pallas_call(
        _norm_relu_kernel,
        out_shape=jax.ShapeDtypeStruct((Mp, Cp), out_dtype),
        grid_spec=pltpu.PrefetchScalarGridSpec(
            num_scalar_prefetch=0,
            grid=(n_tiles,),
            in_specs=[_row_spec(tm, Cp), _const_spec(1, Cp), _const_spec(1, Cp)],
            out_specs=_row_spec(tm, Cp)),
        compiler_params=pltpu.CompilerParams(
            dimension_semantics=("parallel",),
            vmem_limit_bytes=_VMEM_LIMIT),
    )(y, scale.reshape(1, Cp), shift.reshape(1, Cp))


def final_norm_residual(y, scale, shift, residual, res_scale=None,
                        res_shift=None, *, tm):
    Mp, Cp = y.shape
    n_tiles = Mp // tm
    res_is_normed = res_scale is not None
    kernel = _make_final_kernel(res_is_normed)

    in_specs = [_row_spec(tm, Cp), _const_spec(1, Cp), _const_spec(1, Cp),
                _row_spec(tm, Cp)]
    args = [y, scale.reshape(1, Cp), shift.reshape(1, Cp), residual]
    if res_is_normed:
        in_specs += [_const_spec(1, Cp), _const_spec(1, Cp)]
        args += [res_scale.reshape(1, Cp), res_shift.reshape(1, Cp)]

    return pl.pallas_call(
        kernel,
        out_shape=jax.ShapeDtypeStruct((Mp, Cp), jnp.float32),
        grid_spec=pltpu.PrefetchScalarGridSpec(
            num_scalar_prefetch=0,
            grid=(n_tiles,),
            in_specs=in_specs,
            out_specs=_row_spec(tm, Cp)),
        compiler_params=pltpu.CompilerParams(
            dimension_semantics=("parallel",),
            vmem_limit_bytes=_VMEM_LIMIT),
    )(*args)


# --------------------------- glue (layout only) ------------------------------

def _im2col_3x3(x_nhwc, stride):
    """3x3 padded patch extraction (bf16). Returns (N*Ho*Wo, 9*C)."""
    # TODO(synk): replace this materialized im2col with per-row-tile halo DMA
    # (manual pltpu.make_async_copy of the padded window) to cut ~9x HBM traffic.
    N, H, W, C = x_nhwc.shape
    xp = jnp.pad(x_nhwc, ((0, 0), (1, 1), (1, 1), (0, 0)))
    Ho = (H + 2 - 3) // stride + 1
    Wo = (W + 2 - 3) // stride + 1
    patches = [xp[:, dh:dh + stride * Ho:stride, dw:dw + stride * Wo:stride, :]
               for dh in range(3) for dw in range(3)]
    col = jnp.concatenate(patches, axis=-1)  # (N, Ho, Wo, 9*C)
    return col.reshape(N * Ho * Wo, 9 * C), Ho, Wo


def bottleneck_forward(x_nchw, params, *, stride, downsampling, expansion):
    """Full Bottleneck forward. x_nchw: (N, Cin, H, W) f32 -> (N, 4*places, Ho, Wo)."""
    x = jnp.transpose(x_nchw, (0, 2, 3, 1)).astype(jnp.float32)  # NHWC
    N, H, W, Cin = x.shape
    places = params["w1"].shape[1]
    Cout = places * expansion
    if not downsampling:
        assert stride == 1 and Cin == Cout, (
            "identity residual requires stride == 1 and in_places == places*expansion")

    f32, bf16 = jnp.float32, jnp.bfloat16
    Cin_p = _ceil_to(Cin, _LANE)
    Cm_p = _ceil_to(places, _LANE)
    Co_p = _ceil_to(Cout, _LANE)

    Ho = (H + 2 - 3) // stride + 1
    Wo = (W + 2 - 3) // stride + 1
    M1, M3 = N * H * W, N * Ho * Wo
    tm1 = min(512, _ceil_to(M1, 8))
    tm3 = min(512, _ceil_to(M3, 8))
    M1p, M3p = _ceil_to(M1, tm1), _ceil_to(M3, tm3)

    def pad2d(a, rows, cols, dtype):
        r, c = a.shape
        return jnp.pad(a, ((0, rows - r), (0, cols - c))).astype(dtype)

    def pad1d(v, n):
        return jnp.pad(v.astype(f32), (0, n - v.shape[0]))

    # weights: bf16, zero-padded to lane multiples (padded channels stay zero)
    w1 = pad2d(params["w1"], Cin_p, Cm_p, bf16)
    w2r = jnp.pad(params["w2"].reshape(9, places, places),
                  ((0, 0), (0, Cm_p - places), (0, Cm_p - places)))
    w2 = w2r.reshape(9 * Cm_p, Cm_p).astype(bf16)
    w3 = pad2d(params["w3"], Cm_p, Co_p, bf16)
    g1, b1 = pad1d(params["g1"], Cm_p), pad1d(params["b1"], Cm_p)
    g2, b2 = pad1d(params["g2"], Cm_p), pad1d(params["b2"], Cm_p)
    g3, b3 = pad1d(params["g3"], Co_p), pad1d(params["b3"], Co_p)

    # ---- stage 1: 1x1 conv (tiled matmul) + channel stats ----
    x1 = pad2d(x.reshape(M1, Cin), M1p, Cin_p, bf16)
    y1, s1, q1 = matmul_stats(x1, w1, m_true=M1, tm=tm1)
    sc1, sh1 = bn_scale_shift(s1, q1, g1, b1, M1)

    # BN1 + ReLU (bf16 output feeding im2col; padded channels remain 0)
    a1 = norm_relu(y1, sc1, sh1, tm=tm1, out_dtype=bf16)[:M1]
    a1 = a1.reshape(N, H, W, Cm_p)

    # ---- stage 2: 3x3 conv (im2col matmul) + channel stats ----
    col, _, _ = _im2col_3x3(a1, stride)
    col = pad2d(col, M3p, 9 * Cm_p, bf16)
    y2, s2, q2 = matmul_stats(col, w2, m_true=M3, tm=tm3)
    sc2, sh2 = bn_scale_shift(s2, q2, g2, b2, M3)

    # ---- residual path ----
    if downsampling:
        wd = pad2d(params["wd"], Cin_p, Co_p, bf16)
        gd, bd = pad1d(params["gd"], Co_p), pad1d(params["bd"], Co_p)
        xd = pad2d(x[:, ::stride, ::stride, :].reshape(M3, Cin), M3p, Cin_p, bf16)
        yd, sd, qd = matmul_stats(xd, wd, m_true=M3, tm=tm3)
        rsc, rsh = bn_scale_shift(sd, qd, gd, bd, M3)
        residual = yd
    else:
        residual = pad2d(x.reshape(M3, Cin), M3p, Co_p, f32)
        rsc, rsh = None, None

    # ---- stage 3: BN2+ReLU fused into the 1x1 conv matmul + stats ----
    y3, s3, q3 = matmul_stats(y2, w3, m_true=M3, tm=tm3, scale=sc2, shift=sh2)
    sc3, sh3 = bn_scale_shift(s3, q3, g3, b3, M3)

    # ---- final: BN3 + (BN_d) residual add + ReLU, fused elementwise ----
    out = final_norm_residual(y3, sc3, sh3, residual, rsc, rsh, tm=tm3)
    out = out[:M3, :Cout].reshape(N, Ho, Wo, Cout)
    return jnp.transpose(out, (0, 3, 1, 2))  # back to NCHW


def init_params(key, in_places, places, expansion):
    ks = jax.random.split(key, 12)
    f32 = jnp.float32

    def w_init(k, shape, fan_in):
        return jax.random.normal(k, shape, f32) * (1.0 / jnp.sqrt(fan_in))

    return {
        # conv weights stored ready for matmul: (K, Cout)
        "w1": w_init(ks[0], (in_places, places), in_places),
        "w2": w_init(ks[1], (3, 3, places, places), 9 * places),
        "w3": w_init(ks[2], (places, places * expansion), places),
        "wd": w_init(ks[3], (in_places, places * expansion), in_places),
        # BN affine parameters
        "g1": 1.0 + 0.1 * jax.random.normal(ks[4], (places,), f32),
        "b1": 0.1 * jax.random.normal(ks[5], (places,), f32),
        "g2": 1.0 + 0.1 * jax.random.normal(ks[6], (places,), f32),
        "b2": 0.1 * jax.random.normal(ks[7], (places,), f32),
        "g3": 1.0 + 0.1 * jax.random.normal(ks[8], (places * expansion,), f32),
        "b3": 0.1 * jax.random.normal(ks[9], (places * expansion,), f32),
        "gd": 1.0 + 0.1 * jax.random.normal(ks[10], (places * expansion,), f32),
        "bd": 0.1 * jax.random.normal(ks[11], (places * expansion,), f32),
    }


if __name__ == "__main__":
    key = jax.random.PRNGKey(0)
    k_x, k_p = jax.random.split(key)

    # Small shapes: batch=2, in_places=4, places=4, spatial=16x16,
    # stride=2 with downsampling=True, expansion=4 -> output (2, 16, 8, 8).
    N, Cin, H, W = 2, 4, 16, 16
    places, stride, expansion, downsampling = 4, 2, 4, True

    x = jax.random.normal(k_x, (N, Cin, H, W), jnp.float32)
    params = init_params(k_p, Cin, places, expansion)

    fwd = jax.jit(functools.partial(
        bottleneck_forward, stride=stride,
        downsampling=downsampling, expansion=expansion))

    out = fwd(x, params)
    out = jax.block_until_ready(out)

    assert out.shape == (N, places * expansion, H // stride, W // stride), out.shape
    assert bool(jnp.all(jnp.isfinite(out)))
    assert bool(jnp.all(out >= 0.0))  # final ReLU

    print("KERNEL_OK")
</pallas_src>

<mosaic_0001>
module attributes {stable_mosaic.version = 11 : i64} {
  func.func @kernel(%arg0: i32, %arg1: memref<512x128xbf16, #tpu.memory_space<vmem>>, %arg2: memref<128x128xbf16, #tpu.memory_space<vmem>>, %arg3: memref<512x128xf32, #tpu.memory_space<vmem>>, %arg4: memref<1x128xf32, #tpu.memory_space<vmem>>, %arg5: memref<1x128xf32, #tpu.memory_space<vmem>>) attributes {dimension_semantics = [#tpu.dimension_semantics<parallel>], iteration_bounds = array<i64: 1>, scalar_prefetch = 0 : i64, scratch_operands = 0 : i64, tpu.core_type = #tpu.core_type<tc>, window_params = [{transform_indices = @transform_0, window_bounds = array<i64: 512, 128>}, {pipeline_mode = #tpu.pipeline_mode<synchronous>, transform_indices = @transform_1, window_bounds = array<i64: 128, 128>}, {transform_indices = @transform_2, window_bounds = array<i64: 512, 128>}, {transform_indices = @transform_3, window_bounds = array<i64: 1, 128>}, {transform_indices = @transform_4, window_bounds = array<i64: 1, 128>}]} {
    %c0 = arith.constant 0 : index
    %c0_0 = arith.constant 0 : index
    %0 = vector.load %arg1[%c0, %c0_0] : memref<512x128xbf16, #tpu.memory_space<vmem>>, vector<512x128xbf16>
    %c0_1 = arith.constant 0 : index
    %c0_2 = arith.constant 0 : index
    %1 = vector.load %arg2[%c0_1, %c0_2] : memref<128x128xbf16, #tpu.memory_space<vmem>>, vector<128x128xbf16>
    %cst = arith.constant dense<0.000000e+00> : vector<512x128xf32>
    %2 = tpu.matmul %0, %1, %cst {dimension_numbers = #tpu.dot_dimension_numbers<[1], [0], [0], [1], [0, 0, 1, 1], [], []>} : vector<512x128xbf16>, vector<128x128xbf16>, vector<512x128xf32> -> vector<512x128xf32>
    %c0_3 = arith.constant 0 : index
    %c0_4 = arith.constant 0 : index
    %3 = vector.load %arg3[%c0_3, %c0_4] : memref<512x128xf32, #tpu.memory_space<vmem>>, vector<512x128xf32>
    tpu.vector_store %arg3[%c0_3, %c0_4], %2 {strides = array<i32>} : memref<512x128xf32, #tpu.memory_space<vmem>>, vector<512x128xf32>,
    %cst_5 = arith.constant dense<0.000000e+00> : vector<128xf32>
    %4 = vector.multi_reduction <add>, %2, %cst_5 [0] : vector<512x128xf32> to vector<128xf32>
    %5 = vector.shape_cast %4 : vector<128xf32> to vector<1x128xf32>
    %c0_6 = arith.constant 0 : index
    %c0_7 = arith.constant 0 : index
    %6 = vector.load %arg4[%c0_6, %c0_7] : memref<1x128xf32, #tpu.memory_space<vmem>>, vector<1x128xf32>
    tpu.vector_store %arg4[%c0_6, %c0_7], %5 {strides = array<i32>} : memref<1x128xf32, #tpu.memory_space<vmem>>, vector<1x128xf32>,
    %7 = arith.mulf %2, %2 : vector<512x128xf32>
    %cst_8 = arith.constant dense<0.000000e+00> : vector<128xf32>
    %8 = vector.multi_reduction <add>, %7, %cst_8 [0] : vector<512x128xf32> to vector<128xf32>
    %9 = vector.shape_cast %8 : vector<128xf32> to vector<1x128xf32>
    %c0_9 = arith.constant 0 : index
    %c0_10 = arith.constant 0 : index
    %10 = vector.load %arg5[%c0_9, %c0_10] : memref<1x128xf32, #tpu.memory_space<vmem>>, vector<1x128xf32>
    tpu.vector_store %arg5[%c0_9, %c0_10], %9 {strides = array<i32>} : memref<1x128xf32, #tpu.memory_space<vmem>>, vector<1x128xf32>,
    return
  }
  func.func @transform_0(%arg0: i32) -> (i32, i32) {
    %c0_i32 = arith.constant 0 : i32
    %c0_i32_0 = arith.constant 0 : i32
    return %arg0, %c0_i32 : i32, i32
  }
  func.func @transform_1(%arg0: i32) -> (i32, i32) {
    %c0_i32 = arith.constant 0 : i32
    %c0_i32_0 = arith.constant 0 : i32
    %c0_i32_1 = arith.constant 0 : i32
    return %c0_i32, %c0_i32_0 : i32, i32
  }
  func.func @transform_2(%arg0: i32) -> (i32, i32) {
    %c0_i32 = arith.constant 0 : i32
    %c0_i32_0 = arith.constant 0 : i32
    return %arg0, %c0_i32 : i32, i32
  }
  func.func @transform_3(%arg0: i32) -> (i32, i32) {
    %c0_i32 = arith.constant 0 : i32
    %c0_i32_0 = arith.constant 0 : i32
    return %arg0, %c0_i32 : i32, i32
  }
  func.func @transform_4(%arg0: i32) -> (i32, i32) {
    %c0_i32 = arith.constant 0 : i32
    %c0_i32_0 = arith.constant 0 : i32
    return %arg0, %c0_i32 : i32, i32
  }
}

module attributes {stable_mosaic.version = 11 : i64} {
  func.func @_norm_relu_kernel(%arg0: i32, %arg1: memref<512x128xf32, #tpu.memory_space<vmem>>, %arg2: memref<1x128xf32, #tpu.memory_space<vmem>>, %arg3: memref<1x128xf32, #tpu.memory_space<vmem>>, %arg4: memref<512x128xbf16, #tpu.memory_space<vmem>>) attributes {dimension_semantics = [#tpu.dimension_semantics<parallel>], iteration_bounds = array<i64: 1>, scalar_prefetch = 0 : i64, scratch_operands = 0 : i64, tpu.core_type = #tpu.core_type<tc>, window_params = [{transform_indices = @transform_0, window_bounds = array<i64: 512, 128>}, {pipeline_mode = #tpu.pipeline_mode<synchronous>, transform_indices = @transform_1, window_bounds = array<i64: 1, 128>}, {pipeline_mode = #tpu.pipeline_mode<synchronous>, transform_indices = @transform_2, window_bounds = array<i64: 1, 128>}, {transform_indices = @transform_3, window_bounds = array<i64: 512, 128>}]} {
    %c0 = arith.constant 0 : index
    %c0_0 = arith.constant 0 : index
    %0 = vector.load %arg1[%c0, %c0_0] : memref<512x128xf32, #tpu.memory_space<vmem>>, vector<512x128xf32>
    %c0_1 = arith.constant 0 : index
    %c0_2 = arith.constant 0 : index
    %1 = vector.load %arg2[%c0_1, %c0_2] : memref<1x128xf32, #tpu.memory_space<vmem>>, vector<1x128xf32>
    %2 = vector.broadcast %1 : vector<1x128xf32> to vector<512x128xf32>
    %3 = arith.mulf %0, %2 : vector<512x128xf32>
    %c0_3 = arith.constant 0 : index
    %c0_4 = arith.constant 0 : index
    %4 = vector.load %arg3[%c0_3, %c0_4] : memref<1x128xf32, #tpu.memory_space<vmem>>, vector<1x128xf32>
    %5 = vector.broadcast %4 : vector<1x128xf32> to vector<512x128xf32>
    %6 = arith.addf %3, %5 : vector<512x128xf32>
    %cst = arith.constant 0.000000e+00 : f32
    %7 = vector.broadcast %cst : f32 to vector<512x128xf32>
    %8 = arith.maximumf %6, %7 : vector<512x128xf32>
    %9 = arith.truncf %8 : vector<512x128xf32> to vector<512x128xbf16>
    %c0_5 = arith.constant 0 : index
    %c0_6 = arith.constant 0 : index
    %10 = vector.load %arg4[%c0_5, %c0_6] : memref<512x128xbf16, #tpu.memory_space<vmem>>, vector<512x128xbf16>
    tpu.vector_store %arg4[%c0_5, %c0_6], %9 {strides = array<i32>} : memref<512x128xbf16, #tpu.memory_space<vmem>>, vector<512x128xbf16>,
    return
  }
  func.func @transform_0(%arg0: i32) -> (i32, i32) {
    %c0_i32 = arith.constant 0 : i32
    %c0_i32_0 = arith.constant 0 : i32
    return %arg0, %c0_i32 : i32, i32
  }
  func.func @transform_1(%arg0: i32) -> (i32, i32) {
    %c0_i32 = arith.constant 0 : i32
    %c0_i32_0 = arith.constant 0 : i32
    %c0_i32_1 = arith.constant 0 : i32
    return %c0_i32, %c0_i32_0 : i32, i32
  }
  func.func @transform_2(%arg0: i32) -> (i32, i32) {
    %c0_i32 = arith.constant 0 : i32
    %c0_i32_0 = arith.constant 0 : i32
    %c0_i32_1 = arith.constant 0 : i32
    return %c0_i32, %c0_i32_0 : i32, i32
  }
  func.func @transform_3(%arg0: i32) -> (i32, i32) {
    %c0_i32 = arith.constant 0 : i32
    %c0_i32_0 = arith.constant 0 : i32
    return %arg0, %c0_i32 : i32, i32
  }
}

module attributes {stable_mosaic.version = 11 : i64} {
  func.func @kernel(%arg0: i32, %arg1: memref<128x1152xbf16, #tpu.memory_space<vmem>>, %arg2: memref<1152x128xbf16, #tpu.memory_space<vmem>>, %arg3: memref<128x128xf32, #tpu.memory_space<vmem>>, %arg4: memref<1x128xf32, #tpu.memory_space<vmem>>, %arg5: memref<1x128xf32, #tpu.memory_space<vmem>>) attributes {dimension_semantics = [#tpu.dimension_semantics<parallel>], iteration_bounds = array<i64: 1>, scalar_prefetch = 0 : i64, scratch_operands = 0 : i64, tpu.core_type = #tpu.core_type<tc>, window_params = [{transform_indices = @transform_0, window_bounds = array<i64: 128, 1152>}, {pipeline_mode = #tpu.pipeline_mode<synchronous>, transform_indices = @transform_1, window_bounds = array<i64: 1152, 128>}, {transform_indices = @transform_2, window_bounds = array<i64: 128, 128>}, {transform_indices = @transform_3, window_bounds = array<i64: 1, 128>}, {transform_indices = @transform_4, window_bounds = array<i64: 1, 128>}]} {
    %c0 = arith.constant 0 : index
    %c0_0 = arith.constant 0 : index
    %0 = vector.load %arg1[%c0, %c0_0] : memref<128x1152xbf16, #tpu.memory_space<vmem>>, vector<128x1152xbf16>
    %c0_1 = arith.constant 0 : index
    %c0_2 = arith.constant 0 : index
    %1 = vector.load %arg2[%c0_1, %c0_2] : memref<1152x128xbf16, #tpu.memory_space<vmem>>, vector<1152x128xbf16>
    %cst = arith.constant dense<0.000000e+00> : vector<128x128xf32>
    %2 = tpu.matmul %0, %1, %cst {dimension_numbers = #tpu.dot_dimension_numbers<[1], [0], [0], [1], [0, 0, 1, 1], [], []>} : vector<128x1152xbf16>, vector<1152x128xbf16>, vector<128x128xf32> -> vector<128x128xf32>
    %c0_3 = arith.constant 0 : index
    %c0_4 = arith.constant 0 : index
    %3 = vector.load %arg3[%c0_3, %c0_4] : memref<128x128xf32, #tpu.memory_space<vmem>>, vector<128x128xf32>
    tpu.vector_store %arg3[%c0_3, %c0_4], %2 {strides = array<i32>} : memref<128x128xf32, #tpu.memory_space<vmem>>, vector<128x128xf32>,
    %cst_5 = arith.constant dense<0.000000e+00> : vector<128xf32>
    %4 = vector.multi_reduction <add>, %2, %cst_5 [0] : vector<128x128xf32> to vector<128xf32>
    %5 = vector.shape_cast %4 : vector<128xf32> to vector<1x128xf32>
    %c0_6 = arith.constant 0 : index
    %c0_7 = arith.constant 0 : index
    %6 = vector.load %arg4[%c0_6, %c0_7] : memref<1x128xf32, #tpu.memory_space<vmem>>, vector<1x128xf32>
    tpu.vector_store %arg4[%c0_6, %c0_7], %5 {strides = array<i32>} : memref<1x128xf32, #tpu.memory_space<vmem>>, vector<1x128xf32>,
    %7 = arith.mulf %2, %2 : vector<128x128xf32>
    %cst_8 = arith.constant dense<0.000000e+00> : vector<128xf32>
    %8 = vector.multi_reduction <add>, %7, %cst_8 [0] : vector<128x128xf32> to vector<128xf32>
    %9 = vector.shape_cast %8 : vector<128xf32> to vector<1x128xf32>
    %c0_9 = arith.constant 0 : index
    %c0_10 = arith.constant 0 : index
    %10 = vector.load %arg5[%c0_9, %c0_10] : memref<1x128xf32, #tpu.memory_space<vmem>>, vector<1x128xf32>
    tpu.vector_store %arg5[%c0_9, %c0_10], %9 {strides = array<i32>} : memref<1x128xf32, #tpu.memory_space<vmem>>, vector<1x128xf32>,
    return
  }
  func.func @transform_0(%arg0: i32) -> (i32, i32) {
    %c0_i32 = arith.constant 0 : i32
    %c0_i32_0 = arith.constant 0 : i32
    return %arg0, %c0_i32 : i32, i32
  }
  func.func @transform_1(%arg0: i32) -> (i32, i32) {
    %c0_i32 = arith.constant 0 : i32
    %c0_i32_0 = arith.constant 0 : i32
    %c0_i32_1 = arith.constant 0 : i32
    return %c0_i32, %c0_i32_0 : i32, i32
  }
  func.func @transform_2(%arg0: i32) -> (i32, i32) {
    %c0_i32 = arith.constant 0 : i32
    %c0_i32_0 = arith.constant 0 : i32
    return %arg0, %c0_i32 : i32, i32
  }
  func.func @transform_3(%arg0: i32) -> (i32, i32) {
    %c0_i32 = arith.constant 0 : i32
    %c0_i32_0 = arith.constant 0 : i32
    return %arg0, %c0_i32 : i32, i32
  }
  func.func @transform_4(%arg0: i32) -> (i32, i32) {
    %c0_i32 = arith.constant 0 : i32
    %c0_i32_0 = arith.constant 0 : i32
    return %arg0, %c0_i32 : i32, i32
  }
}

module attributes {stable_mosaic.version = 11 : i64} {
  func.func @kernel(%arg0: i32, %arg1: memref<128x128xf32, #tpu.memory_space<vmem>>, %arg2: memref<1x128xf32, #tpu.memory_space<vmem>>, %arg3: memref<1x128xf32, #tpu.memory_space<vmem>>, %arg4: memref<128x128xbf16, #tpu.memory_space<vmem>>, %arg5: memref<128x128xf32, #tpu.memory_space<vmem>>, %arg6: memref<1x128xf32, #tpu.memory_space<vmem>>, %arg7: memref<1x128xf32, #tpu.memory_space<vmem>>) attributes {dimension_semantics = [#tpu.dimension_semantics<parallel>], iteration_bounds = array<i64: 1>, scalar_prefetch = 0 : i64, scratch_operands = 0 : i64, tpu.core_type = #tpu.core_type<tc>, window_params = [{transform_indices = @transform_0, window_bounds = array<i64: 128, 128>}, {pipeline_mode = #tpu.pipeline_mode<synchronous>, transform_indices = @transform_1, window_bounds = array<i64: 1, 128>}, {pipeline_mode = #tpu.pipeline_mode<synchronous>, transform_indices = @transform_2, window_bounds = array<i64: 1, 128>}, {pipeline_mode = #tpu.pipeline_mode<synchronous>, transform_indices = @transform_3, window_bounds = array<i64: 128, 128>}, {transform_indices = @transform_4, window_bounds = array<i64: 128, 128>}, {transform_indices = @transform_5, window_bounds = array<i64: 1, 128>}, {transform_indices = @transform_6, window_bounds = array<i64: 1, 128>}]} {
    %c0 = arith.constant 0 : index
    %c0_0 = arith.constant 0 : index
    %0 = vector.load %arg1[%c0, %c0_0] : memref<128x128xf32, #tpu.memory_space<vmem>>, vector<128x128xf32>
    %c0_1 = arith.constant 0 : index
    %c0_2 = arith.constant 0 : index
    %1 = vector.load %arg2[%c0_1, %c0_2] : memref<1x128xf32, #tpu.memory_space<vmem>>, vector<1x128xf32>
    %2 = vector.broadcast %1 : vector<1x128xf32> to vector<128x128xf32>
    %3 = arith.mulf %0, %2 : vector<128x128xf32>
    %c0_3 = arith.constant 0 : index
    %c0_4 = arith.constant 0 : index
    %4 = vector.load %arg3[%c0_3, %c0_4] : memref<1x128xf32, #tpu.memory_space<vmem>>, vector<1x128xf32>
    %5 = vector.broadcast %4 : vector<1x128xf32> to vector<128x128xf32>
    %6 = arith.addf %3, %5 : vector<128x128xf32>
    %cst = arith.constant 0.000000e+00 : f32
    %7 = vector.broadcast %cst : f32 to vector<128x128xf32>
    %8 = arith.maximumf %6, %7 : vector<128x128xf32>
    %9 = arith.truncf %8 : vector<128x128xf32> to vector<128x128xbf16>
    %c0_5 = arith.constant 0 : index
    %c0_6 = arith.constant 0 : index
    %10 = vector.load %arg4[%c0_5, %c0_6] : memref<128x128xbf16, #tpu.memory_space<vmem>>, vector<128x128xbf16>
    %cst_7 = arith.constant dense<0.000000e+00> : vector<128x128xf32>
    %11 = tpu.matmul %9, %10, %cst_7 {dimension_numbers = #tpu.dot_dimension_numbers<[1], [0], [0], [1], [0, 0, 1, 1], [], []>} : vector<128x128xbf16>, vector<128x128xbf16>, vector<128x128xf32> -> vector<128x128xf32>
    %c0_8 = arith.constant 0 : index
    %c0_9 = arith.constant 0 : index
    %12 = vector.load %arg5[%c0_8, %c0_9] : memref<128x128xf32, #tpu.memory_space<vmem>>, vector<128x128xf32>
    tpu.vector_store %arg5[%c0_8, %c0_9], %11 {strides = array<i32>} : memref<128x128xf32, #tpu.memory_space<vmem>>, vector<128x128xf32>,
    %cst_10 = arith.constant dense<0.000000e+00> : vector<128xf32>
    %13 = vector.multi_reduction <add>, %11, %cst_10 [0] : vector<128x128xf32> to vector<128xf32>
    %14 = vector.shape_cast %13 : vector<128xf32> to vector<1x128xf32>
    %c0_11 = arith.constant 0 : index
    %c0_12 = arith.constant 0 : index
    %15 = vector.load %arg6[%c0_11, %c0_12] : memref<1x128xf32, #tpu.memory_space<vmem>>, vector<1x128xf32>
    tpu.vector_store %arg6[%c0_11, %c0_12], %14 {strides = array<i32>} : memref<1x128xf32, #tpu.memory_space<vmem>>, vector<1x128xf32>,
    %16 = arith.mulf %11, %11 : vector<128x128xf32>
    %cst_13 = arith.constant dense<0.000000e+00> : vector<128xf32>
    %17 = vector.multi_reduction <add>, %16, %cst_13 [0] : vector<128x128xf32> to vector<128xf32>
    %18 = vector.shape_cast %17 : vector<128xf32> to vector<1x128xf32>
    %c0_14 = arith.constant 0 : index
    %c0_15 = arith.constant 0 : index
    %19 = vector.load %arg7[%c0_14, %c0_15] : memref<1x128xf32, #tpu.memory_space<vmem>>, vector<1x128xf32>
    tpu.vector_store %arg7[%c0_14, %c0_15], %18 {strides = array<i32>} : memref<1x128xf32, #tpu.memory_space<vmem>>, vector<1x128xf32>,
    return
  }
  func.func @transform_0(%arg0: i32) -> (i32, i32) {
    %c0_i32 = arith.constant 0 : i32
    %c0_i32_0 = arith.constant 0 : i32
    return %arg0, %c0_i32 : i32, i32
  }
  func.func @transform_1(%arg0: i32) -> (i32, i32) {
    %c0_i32 = arith.constant 0 : i32
    %c0_i32_0 = arith.constant 0 : i32
    %c0_i32_1 = arith.constant 0 : i32
    return %c0_i32, %c0_i32_0 : i32, i32
  }
  func.func @transform_2(%arg0: i32) -> (i32, i32) {
    %c0_i32 = arith.constant 0 : i32
    %c0_i32_0 = arith.constant 0 : i32
    %c0_i32_1 = arith.constant 0 : i32
    return %c0_i32, %c0_i32_0 : i32, i32
  }
  func.func @transform_3(%arg0: i32) -> (i32, i32) {
    %c0_i32 = arith.constant 0 : i32
    %c0_i32_0 = arith.constant 0 : i32
    %c0_i32_1 = arith.constant 0 : i32
    return %c0_i32, %c0_i32_0 : i32, i32
  }
  func.func @transform_4(%arg0: i32) -> (i32, i32) {
    %c0_i32 = arith.constant 0 : i32
    %c0_i32_0 = arith.constant 0 : i32
    return %arg0, %c0_i32 : i32, i32
  }
  func.func @transform_5(%arg0: i32) -> (i32, i32) {
    %c0_i32 = arith.constant 0 : i32
    %c0_i32_0 = arith.constant 0 : i32
    return %arg0, %c0_i32 : i32, i32
  }
  func.func @transform_6(%arg0: i32) -> (i32, i32) {
    %c0_i32 = arith.constant 0 : i32
    %c0_i32_0 = arith.constant 0 : i32
    return %arg0, %c0_i32 : i32, i32
  }
}

module attributes {stable_mosaic.version = 11 : i64} {
  func.func @kernel(%arg0: i32, %arg1: memref<128x128xf32, #tpu.memory_space<vmem>>, %arg2: memref<1x128xf32, #tpu.memory_space<vmem>>, %arg3: memref<1x128xf32, #tpu.memory_space<vmem>>, %arg4: memref<128x128xf32, #tpu.memory_space<vmem>>, %arg5: memref<1x128xf32, #tpu.memory_space<vmem>>, %arg6: memref<1x128xf32, #tpu.memory_space<vmem>>, %arg7: memref<128x128xf32, #tpu.memory_space<vmem>>) attributes {dimension_semantics = [#tpu.dimension_semantics<parallel>], iteration_bounds = array<i64: 1>, scalar_prefetch = 0 : i64, scratch_operands = 0 : i64, tpu.core_type = #tpu.core_type<tc>, window_params = [{transform_indices = @transform_0, window_bounds = array<i64: 128, 128>}, {pipeline_mode = #tpu.pipeline_mode<synchronous>, transform_indices = @transform_1, window_bounds = array<i64: 1, 128>}, {pipeline_mode = #tpu.pipeline_mode<synchronous>, transform_indices = @transform_2, window_bounds = array<i64: 1, 128>}, {transform_indices = @transform_3, window_bounds = array<i64: 128, 128>}, {pipeline_mode = #tpu.pipeline_mode<synchronous>, transform_indices = @transform_4, window_bounds = array<i64: 1, 128>}, {pipeline_mode = #tpu.pipeline_mode<synchronous>, transform_indices = @transform_5, window_bounds = array<i64: 1, 128>}, {transform_indices = @transform_6, window_bounds = array<i64: 128, 128>}]} {
    %c0 = arith.constant 0 : index
    %c0_0 = arith.constant 0 : index
    %0 = vector.load %arg4[%c0, %c0_0] : memref<128x128xf32, #tpu.memory_space<vmem>>, vector<128x128xf32>
    %c0_1 = arith.constant 0 : index
    %c0_2 = arith.constant 0 : index
    %1 = vector.load %arg5[%c0_1, %c0_2] : memref<1x128xf32, #tpu.memory_space<vmem>>, vector<1x128xf32>
    %2 = vector.broadcast %1 : vector<1x128xf32> to vector<128x128xf32>
    %3 = arith.mulf %0, %2 : vector<128x128xf32>
    %c0_3 = arith.constant 0 : index
    %c0_4 = arith.constant 0 : index
    %4 = vector.load %arg6[%c0_3, %c0_4] : memref<1x128xf32, #tpu.memory_space<vmem>>, vector<1x128xf32>
    %5 = vector.broadcast %4 : vector<1x128xf32> to vector<128x128xf32>
    %6 = arith.addf %3, %5 : vector<128x128xf32>
    %c0_5 = arith.constant 0 : index
    %c0_6 = arith.constant 0 : index
    %7 = vector.load %arg1[%c0_5, %c0_6] : memref<128x128xf32, #tpu.memory_space<vmem>>, vector<128x128xf32>
    %c0_7 = arith.constant 0 : index
    %c0_8 = arith.constant 0 : index
    %8 = vector.load %arg2[%c0_7, %c0_8] : memref<1x128xf32, #tpu.memory_space<vmem>>, vector<1x128xf32>
    %9 = vector.broadcast %8 : vector<1x128xf32> to vector<128x128xf32>
    %10 = arith.mulf %7, %9 : vector<128x128xf32>
    %c0_9 = arith.constant 0 : index
    %c0_10 = arith.constant 0 : index
    %11 = vector.load %arg3[%c0_9, %c0_10] : memref<1x128xf32, #tpu.memory_space<vmem>>, vector<1x128xf32>
    %12 = vector.broadcast %11 : vector<1x128xf32> to vector<128x128xf32>
    %13 = arith.addf %10, %12 : vector<128x128xf32>
    %14 = arith.addf %13, %6 : vector<128x128xf32>
    %cst = arith.constant 0.000000e+00 : f32
    %15 = vector.broadcast %cst : f32 to vector<128x128xf32>
    %16 = arith.maximumf %14, %15 : vector<128x128xf32>
    %c0_11 = arith.constant 0 : index
    %c0_12 = arith.constant 0 : index
    %17 = vector.load %arg7[%c0_11, %c0_12] : memref<128x128xf32, #tpu.memory_space<vmem>>, vector<128x128xf32>
    tpu.vector_store %arg7[%c0_11, %c0_12], %16 {strides = array<i32>} : memref<128x128xf32, #tpu.memory_space<vmem>>, vector<128x128xf32>,
    return
  }
  func.func @transform_0(%arg0: i32) -> (i32, i32) {
    %c0_i32 = arith.constant 0 : i32
    %c0_i32_0 = arith.constant 0 : i32
    return %arg0, %c0_i32 : i32, i32
  }
  func.func @transform_1(%arg0: i32) -> (i32, i32) {
    %c0_i32 = arith.constant 0 : i32
    %c0_i32_0 = arith.constant 0 : i32
    %c0_i32_1 = arith.constant 0 : i32
    return %c0_i32, %c0_i32_0 : i32, i32
  }
  func.func @transform_2(%arg0: i32) -> (i32, i32) {
    %c0_i32 = arith.constant 0 : i32
    %c0_i32_0 = arith.constant 0 : i32
    %c0_i32_1 = arith.constant 0 : i32
    return %c0_i32, %c0_i32_0 : i32, i32
  }
  func.func @transform_3(%arg0: i32) -> (i32, i32) {
    %c0_i32 = arith.constant 0 : i32
    %c0_i32_0 = arith.constant 0 : i32
    return %arg0, %c0_i32 : i32, i32
  }
  func.func @transform_4(%arg0: i32) -> (i32, i32) {
    %c0_i32 = arith.constant 0 : i32
    %c0_i32_0 = arith.constant 0 : i32
    %c0_i32_1 = arith.constant 0 : i32
    return %c0_i32, %c0_i32_0 : i32, i32
  }
  func.func @transform_5(%arg0: i32) -> (i32, i32) {
    %c0_i32 = arith.constant 0 : i32
    %c0_i32_0 = arith.constant 0 : i32
    %c0_i32_1 = arith.constant 0 : i32
    return %c0_i32, %c0_i32_0 : i32, i32
  }
  func.func @transform_6(%arg0: i32) -> (i32, i32) {
    %c0_i32 = arith.constant 0 : i32
    %c0_i32_0 = arith.constant 0 : i32
    return %arg0, %c0_i32 : i32, i32
  }
}

module attributes {stable_mosaic.version = 11 : i64} {
  func.func @kernel(%arg0: i32, %arg1: memref<128x128xbf16, #tpu.memory_space<vmem>>, %arg2: memref<128x128xbf16, #tpu.memory_space<vmem>>, %arg3: memref<128x128xf32, #tpu.memory_space<vmem>>, %arg4: memref<1x128xf32, #tpu.memory_space<vmem>>, %arg5: memref<1x128xf32, #tpu.memory_space<vmem>>) attributes {dimension_semantics = [#tpu.dimension_semantics<parallel>], iteration_bounds = array<i64: 1>, scalar_prefetch = 0 : i64, scratch_operands = 0 : i64, tpu.core_type = #tpu.core_type<tc>, window_params = [{transform_indices = @transform_0, window_bounds = array<i64: 128, 128>}, {pipeline_mode = #tpu.pipeline_mode<synchronous>, transform_indices = @transform_1, window_bounds = array<i64: 128, 128>}, {transform_indices = @transform_2, window_bounds = array<i64: 128, 128>}, {transform_indices = @transform_3, window_bounds = array<i64: 1, 128>}, {transform_indices = @transform_4, window_bounds = array<i64: 1, 128>}]} {
    %c0 = arith.constant 0 : index
    %c0_0 = arith.constant 0 : index
    %0 = vector.load %arg1[%c0, %c0_0] : memref<128x128xbf16, #tpu.memory_space<vmem>>, vector<128x128xbf16>
    %c0_1 = arith.constant 0 : index
    %c0_2 = arith.constant 0 : index
    %1 = vector.load %arg2[%c0_1, %c0_2] : memref<128x128xbf16, #tpu.memory_space<vmem>>, vector<128x128xbf16>
    %cst = arith.constant dense<0.000000e+00> : vector<128x128xf32>
    %2 = tpu.matmul %0, %1, %cst {dimension_numbers = #tpu.dot_dimension_numbers<[1], [0], [0], [1], [0, 0, 1, 1], [], []>} : vector<128x128xbf16>, vector<128x128xbf16>, vector<128x128xf32> -> vector<128x128xf32>
    %c0_3 = arith.constant 0 : index
    %c0_4 = arith.constant 0 : index
    %3 = vector.load %arg3[%c0_3, %c0_4] : memref<128x128xf32, #tpu.memory_space<vmem>>, vector<128x128xf32>
    tpu.vector_store %arg3[%c0_3, %c0_4], %2 {strides = array<i32>} : memref<128x128xf32, #tpu.memory_space<vmem>>, vector<128x128xf32>,
    %cst_5 = arith.constant dense<0.000000e+00> : vector<128xf32>
    %4 = vector.multi_reduction <add>, %2, %cst_5 [0] : vector<128x128xf32> to vector<128xf32>
    %5 = vector.shape_cast %4 : vector<128xf32> to vector<1x128xf32>
    %c0_6 = arith.constant 0 : index
    %c0_7 = arith.constant 0 : index
    %6 = vector.load %arg4[%c0_6, %c0_7] : memref<1x128xf32, #tpu.memory_space<vmem>>, vector<1x128xf32>
    tpu.vector_store %arg4[%c0_6, %c0_7], %5 {strides = array<i32>} : memref<1x128xf32, #tpu.memory_space<vmem>>, vector<1x128xf32>,
    %7 = arith.mulf %2, %2 : vector<128x128xf32>
    %cst_8 = arith.constant dense<0.000000e+00> : vector<128xf32>
    %8 = vector.multi_reduction <add>, %7, %cst_8 [0] : vector<128x128xf32> to vector<128xf32>
    %9 = vector.shape_cast %8 : vector<128xf32> to vector<1x128xf32>
    %c0_9 = arith.constant 0 : index
    %c0_10 = arith.constant 0 : index
    %10 = vector.load %arg5[%c0_9, %c0_10] : memref<1x128xf32, #tpu.memory_space<vmem>>, vector<1x128xf32>
    tpu.vector_store %arg5[%c0_9, %c0_10], %9 {strides = array<i32>} : memref<1x128xf32, #tpu.memory_space<vmem>>, vector<1x128xf32>,
    return
  }
  func.func @transform_0(%arg0: i32) -> (i32, i32) {
    %c0_i32 = arith.constant 0 : i32
    %c0_i32_0 = arith.constant 0 : i32
    return %arg0, %c0_i32 : i32, i32
  }
  func.func @transform_1(%arg0: i32) -> (i32, i32) {
    %c0_i32 = arith.constant 0 : i32
    %c0_i32_0 = arith.constant 0 : i32
    %c0_i32_1 = arith.constant 0 : i32
    return %c0_i32, %c0_i32_0 : i32, i32
  }
  func.func @transform_2(%arg0: i32) -> (i32, i32) {
    %c0_i32 = arith.constant 0 : i32
    %c0_i32_0 = arith.constant 0 : i32
    return %arg0, %c0_i32 : i32, i32
  }
  func.func @transform_3(%arg0: i32) -> (i32, i32) {
    %c0_i32 = arith.constant 0 : i32
    %c0_i32_0 = arith.constant 0 : i32
    return %arg0, %c0_i32 : i32, i32
  }
  func.func @transform_4(%arg0: i32) -> (i32, i32) {
    %c0_i32 = arith.constant 0 : i32
    %c0_i32_0 = arith.constant 0 : i32
    return %arg0, %c0_i32 : i32, i32
  }
}

</mosaic_0001>

<llo_original>
// kernel: bottleneck_forward.7
$region0: #{bottleneck_forward.7}
  #allocation0 [shape = 'u32[]', space=smem, size = 0x4, offset = 0x4, fixed_abs, tag = 'smem constant byte address 0x4 - core index']
  #allocation1 [shape = 'u32[144,128]{1,0:T(1,128)}', space=vmem, size = 0x12000, scoped, tag = 'internal scratch']
  %s0 = inlined_call_operand.vmem [shape: f32[512,128], index: 0, kind: input, shape index: {}]
  %s1 = inlined_call_operand.vmem [shape: f32[1,128], index: 1, kind: input, shape index: {}]
  %s2 = inlined_call_operand.vmem [shape: f32[1,128], index: 2, kind: input, shape index: {}]
  %s3 = inlined_call_operand.vmem [shape: bf16[512,128], index: 3, kind: output, shape index: {}]
  %s4 = sld [smem:[#allocation0]]
  $region22: #{bottleneck_forward.7} parent=0
    _
  %s6 = ssub.s32 1, %s4
  %s7 = scalar_select 0, %s6, %s4
  // Predicated region
  $region2: #{bottleneck_forward.7} parent=0 // pred_check
    _
  $region3: #{bottleneck_forward.7} parent=0 // pred_check_branch
    %9 = sbr.rel (0) target = $region5
  $region4: #{bottleneck_forward.7} parent=0 // pred_region
    _
  $region5: #{bottleneck_forward.7} parent=0 // pred_fallthru
    _
  // Predicated region
  $region6: #{bottleneck_forward.7} parent=0 // pred_check
    _
  $region7: #{bottleneck_forward.7} parent=0 // pred_check_branch
    %11 = sbr.rel (0) target = $region9
  $region8: #{bottleneck_forward.7} parent=0 // pred_region
    _
  $region9: #{bottleneck_forward.7} parent=0 // pred_fallthru
    _
  // Predicated region
  $region10: #{bottleneck_forward.7} parent=0 // pred_check
    _
  $region11: #{bottleneck_forward.7} parent=0 // pred_check_branch
    %13 = sbr.rel (0) target = $region13
  $region12: #{bottleneck_forward.7} parent=0 // pred_region
    _
  $region13: #{bottleneck_forward.7} parent=0 // pred_fallthru
    _
  %v14 = vld [vmem:[%s0] sm:$0xff]
  %v15 = vld [vmem:[%s0 + $0x8] sm:$0xff]
  %v16 = vld [vmem:[%s0 + $0x10] sm:$0xff]
  %v17 = vld [vmem:[%s0 + $0x18] sm:$0xff]
  %v18 = vld [vmem:[%s0 + $0x20] sm:$0xff]
  %v19 = vld [vmem:[%s0 + $0x28] sm:$0xff]
  %v20 = vld [vmem:[%s0 + $0x30] sm:$0xff]
  %v21 = vld [vmem:[%s0 + $0x38] sm:$0xff]
  %v22 = vld [vmem:[%s0 + $0x40] sm:$0xff]
  %v23 = vld [vmem:[%s0 + $0x48] sm:$0xff]
  %v24 = vld [vmem:[%s0 + $0x50] sm:$0xff]
  %v25 = vld [vmem:[%s0 + $0x58] sm:$0xff]
  %v26 = vld [vmem:[%s0 + $0x60] sm:$0xff]
  %v27 = vld [vmem:[%s0 + $0x68] sm:$0xff]
  %v28 = vld [vmem:[%s0 + $0x70] sm:$0xff]
  %v29 = vld [vmem:[%s0 + $0x78] sm:$0xff]
  %v30 = vld [vmem:[%s0 + $0x80] sm:$0xff]
  %v31 = vld [vmem:[%s0 + $0x88] sm:$0xff]
  %v32 = vld [vmem:[%s0 + $0x90] sm:$0xff]
  %v33 = vld [vmem:[%s0 + $0x98] sm:$0xff]
  %v34 = vld [vmem:[%s0 + $0xa0] sm:$0xff]
  %v35 = vld [vmem:[%s0 + $0xa8] sm:$0xff]
  %v36 = vld [vmem:[%s0 + $0xb0] sm:$0xff]
  %v37 = vld [vmem:[%s0 + $0xb8] sm:$0xff]
  %v38 = vld [vmem:[%s0 + $0xc0] sm:$0xff]
  %v39 = vld [vmem:[%s0 + $0xc8] sm:$0xff]
  %v40 = vld [vmem:[%s0 + $0xd0] sm:$0xff]
  %v41 = vld [vmem:[%s0 + $0xd8] sm:$0xff]
  %v42 = vld [vmem:[%s0 + $0xe0] sm:$0xff]
  %v43 = vld [vmem:[%s0 + $0xe8] sm:$0xff]
  %v44 = vld [vmem:[%s0 + $0xf0] sm:$0xff]
  %v45 = vld [vmem:[%s0 + $0xf8] sm:$0xff]
  %v46 = vld [vmem:[%s0 + $0x100] sm:$0xff]
  %v47 = vld [vmem:[%s0 + $0x108] sm:$0xff]
  %v48 = vld [vmem:[%s0 + $0x110] sm:$0xff]
  %v49 = vld [vmem:[%s0 + $0x118] sm:$0xff]
  %v50 = vld [vmem:[%s0 + $0x120] sm:$0xff]
  %v51 = vld [vmem:[%s0 + $0x128] sm:$0xff]
  %v52 = vld [vmem:[%s0 + $0x130] sm:$0xff]
  %v53 = vld [vmem:[%s0 + $0x138] sm:$0xff]
  %v54 = vld [vmem:[%s0 + $0x140] sm:$0xff]
  %v55 = vld [vmem:[%s0 + $0x148] sm:$0xff]
  %v56 = vld [vmem:[%s0 + $0x150] sm:$0xff]
  %v57 = vld [vmem:[%s0 + $0x158] sm:$0xff]
  %v58 = vld [vmem:[%s0 + $0x160] sm:$0xff]
  %v59 = vld [vmem:[%s0 + $0x168] sm:$0xff]
  %v60 = vld [vmem:[%s0 + $0x170] sm:$0xff]
  %v61 = vld [vmem:[%s0 + $0x178] sm:$0xff]
  %v62 = vld [vmem:[%s0 + $0x180] sm:$0xff]
  %v63 = vld [vmem:[%s0 + $0x188] sm:$0xff]
  %v64 = vld [vmem:[%s0 + $0x190] sm:$0xff]
  %v65 = vld [vmem:[%s0 + $0x198] sm:$0xff]
  %v66 = vld [vmem:[%s0 + $0x1a0] sm:$0xff]
  %v67 = vld [vmem:[%s0 + $0x1a8] sm:$0xff]
  %v68 = vld [vmem:[%s0 + $0x1b0] sm:$0xff]
  %v69 = vld [vmem:[%s0 + $0x1b8] sm:$0xff]
  %v70 = vld [vmem:[%s0 + $0x1c0] sm:$0xff]
  %v71 = vld [vmem:[%s0 + $0x1c8] sm:$0xff]
  %v72 = vld [vmem:[%s0 + $0x1d0] sm:$0xff]
  %v73 = vld [vmem:[%s0 + $0x1d8] sm:$0xff]
  %v74 = vld [vmem:[%s0 + $0x1e0] sm:$0xff]
  %v75 = vld [vmem:[%s0 + $0x1e8] sm:$0xff]
  %v76 = vld [vmem:[%s0 + $0x1f0] sm:$0xff]
  %v77 = vld [vmem:[%s0 + $0x1f8] sm:$0xff]
  %v78 = vld [vmem:[%s1] sm:$0x1]
  %v80 = vlaneseq
  %v81 = vshrl.u32 %v80, 7
  %v82 = vsub.s32 0, %v81
  %v83 = vrot.slane %v78, %v82
  %v85 = vmul.f32 %v14, %v83
  %v86 = vmul.f32 %v15, %v83
  %v87 = vmul.f32 %v16, %v83
  %v88 = vmul.f32 %v17, %v83
  %v89 = vmul.f32 %v18, %v83
  %v90 = vmul.f32 %v19, %v83
  %v91 = vmul.f32 %v20, %v83
  %v92 = vmul.f32 %v21, %v83
  %v93 = vmul.f32 %v22, %v83
  %v94 = vmul.f32 %v23, %v83
  %v95 = vmul.f32 %v24, %v83
  %v96 = vmul.f32 %v25, %v83
  %v97 = vmul.f32 %v26, %v83
  %v98 = vmul.f32 %v27, %v83
  %v99 = vmul.f32 %v28, %v83
  %v100 = vmul.f32 %v29, %v83
  %v101 = vmul.f32 %v30, %v83
  %v102 = vmul.f32 %v31, %v83
  %v103 = vmul.f32 %v32, %v83
  %v104 = vmul.f32 %v33, %v83
  %v105 = vmul.f32 %v34, %v83
  %v106 = vmul.f32 %v35, %v83
  %v107 = vmul.f32 %v36, %v83
  %v108 = vmul.f32 %v37, %v83
  %v109 = vmul.f32 %v38, %v83
  %v110 = vmul.f32 %v39, %v83
  %v111 = vmul.f32 %v40, %v83
  %v112 = vmul.f32 %v41, %v83
  %v113 = vmul.f32 %v42, %v83
  %v114 = vmul.f32 %v43, %v83
  %v115 = vmul.f32 %v44, %v83
  %v116 = vmul.f32 %v45, %v83
  %v117 = vmul.f32 %v46, %v83
  %v118 = vmul.f32 %v47, %v83
  %v119 = vmul.f32 %v48, %v83
  %v120 = vmul.f32 %v49, %v83
  %v121 = vmul.f32 %v50, %v83
  %v122 = vmul.f32 %v51, %v83
  %v123 = vmul.f32 %v52, %v83
  %v124 = vmul.f32 %v53, %v83
  %v125 = vmul.f32 %v54, %v83
  %v126 = vmul.f32 %v55, %v83
  %v127 = vmul.f32 %v56, %v83
  %v128 = vmul.f32 %v57, %v83
  %v129 = vmul.f32 %v58, %v83
  %v130 = vmul.f32 %v59, %v83
  %v131 = vmul.f32 %v60, %v83
  %v132 = vmul.f32 %v61, %v83
  %v133 = vmul.f32 %v62, %v83
  %v134 = vmul.f32 %v63, %v83
  %v135 = vmul.f32 %v64, %v83
  %v136 = vmul.f32 %v65, %v83
  %v137 = vmul.f32 %v66, %v83
  %v138 = vmul.f32 %v67, %v83
  %v139 = vmul.f32 %v68, %v83
  %v140 = vmul.f32 %v69, %v83
  %v141 = vmul.f32 %v70, %v83
  %v142 = vmul.f32 %v71, %v83
  %v143 = vmul.f32 %v72, %v83
  %v144 = vmul.f32 %v73, %v83
  %v145 = vmul.f32 %v74, %v83
  %v146 = vmul.f32 %v75, %v83
  %v147 = vmul.f32 %v76, %v83
  %v148 = vmul.f32 %v77, %v83
  %v149 = vld [vmem:[%s2] sm:$0x1]
  %v151 = vlaneseq
  %v152 = vshrl.u32 %v151, 7
  %v153 = vsub.s32 0, %v152
  %v154 = vrot.slane %v149, %v153
  %v156 = vadd.f32 %v85, %v154
  %v157 = vadd.f32 %v86, %v154
  %v158 = vadd.f32 %v87, %v154
  %v159 = vadd.f32 %v88, %v154
  %v160 = vadd.f32 %v89, %v154
  %v161 = vadd.f32 %v90, %v154
  %v162 = vadd.f32 %v91, %v154
  %v163 = vadd.f32 %v92, %v154
  %v164 = vadd.f32 %v93, %v154
  %v165 = vadd.f32 %v94, %v154
  %v166 = vadd.f32 %v95, %v154
  %v167 = vadd.f32 %v96, %v154
  %v168 = vadd.f32 %v97, %v154
  %v169 = vadd.f32 %v98, %v154
  %v170 = vadd.f32 %v99, %v154
  %v171 = vadd.f32 %v100, %v154
  %v172 = vadd.f32 %v101, %v154
  %v173 = vadd.f32 %v102, %v154
  %v174 = vadd.f32 %v103, %v154
  %v175 = vadd.f32 %v104, %v154
  %v176 = vadd.f32 %v105, %v154
  %v177 = vadd.f32 %v106, %v154
  %v178 = vadd.f32 %v107, %v154
  %v179 = vadd.f32 %v108, %v154
  %v180 = vadd.f32 %v109, %v154
  %v181 = vadd.f32 %v110, %v154
  %v182 = vadd.f32 %v111, %v154
  %v183 = vadd.f32 %v112, %v154
  %v184 = vadd.f32 %v113, %v154
  %v185 = vadd.f32 %v114, %v154
  %v186 = vadd.f32 %v115, %v154
  %v187 = vadd.f32 %v116, %v154
  %v188 = vadd.f32 %v117, %v154
  %v189 = vadd.f32 %v118, %v154
  %v190 = vadd.f32 %v119, %v154
  %v191 = vadd.f32 %v120, %v154
  %v192 = vadd.f32 %v121, %v154
  %v193 = vadd.f32 %v122, %v154
  %v194 = vadd.f32 %v123, %v154
  %v195 = vadd.f32 %v124, %v154
  %v196 = vadd.f32 %v125, %v154
  %v197 = vadd.f32 %v126, %v154
  %v198 = vadd.f32 %v127, %v154
  %v199 = vadd.f32 %v128, %v154
  %v200 = vadd.f32 %v129, %v154
  %v201 = vadd.f32 %v130, %v154
  %v202 = vadd.f32 %v131, %v154
  %v203 = vadd.f32 %v132, %v154
  %v204 = vadd.f32 %v133, %v154
  %v205 = vadd.f32 %v134, %v154
  %v206 = vadd.f32 %v135, %v154
  %v207 = vadd.f32 %v136, %v154
  %v208 = vadd.f32 %v137, %v154
  %v209 = vadd.f32 %v138, %v154
  %v210 = vadd.f32 %v139, %v154
  %v211 = vadd.f32 %v140, %v154
  %v212 = vadd.f32 %v141, %v154
  %v213 = vadd.f32 %v142, %v154
  %v214 = vadd.f32 %v143, %v154
  %v215 = vadd.f32 %v144, %v154
  %v216 = vadd.f32 %v145, %v154
  %v217 = vadd.f32 %v146, %v154
  %v218 = vadd.f32 %v147, %v154
  %v219 = vadd.f32 %v148, %v154
  %v220 = vmax.f32 %v156, 0.0
  %v221 = vmax.f32 %v157, 0.0
  %v222 = vmax.f32 %v158, 0.0
  %v223 = vmax.f32 %v159, 0.0
  %v224 = vmax.f32 %v160, 0.0
  %v225 = vmax.f32 %v161, 0.0
  %v226 = vmax.f32 %v162, 0.0
  %v227 = vmax.f32 %v163, 0.0
  %v228 = vmax.f32 %v164, 0.0
  %v229 = vmax.f32 %v165, 0.0
  %v230 = vmax.f32 %v166, 0.0
  %v231 = vmax.f32 %v167, 0.0
  %v232 = vmax.f32 %v168, 0.0
  %v233 = vmax.f32 %v169, 0.0
  %v234 = vmax.f32 %v170, 0.0
  %v235 = vmax.f32 %v171, 0.0
  %v236 = vmax.f32 %v172, 0.0
  %v237 = vmax.f32 %v173, 0.0
  %v238 = vmax.f32 %v174, 0.0
  %v239 = vmax.f32 %v175, 0.0
  %v240 = vmax.f32 %v176, 0.0
  %v241 = vmax.f32 %v177, 0.0
  %v242 = vmax.f32 %v178, 0.0
  %v243 = vmax.f32 %v179, 0.0
  %v244 = vmax.f32 %v180, 0.0
  %v245 = vmax.f32 %v181, 0.0
  %v246 = vmax.f32 %v182, 0.0
  %v247 = vmax.f32 %v183, 0.0
  %v248 = vmax.f32 %v184, 0.0
  %v249 = vmax.f32 %v185, 0.0
  %v250 = vmax.f32 %v186, 0.0
  %v251 = vmax.f32 %v187, 0.0
  %v252 = vmax.f32 %v188, 0.0
  %v253 = vmax.f32 %v189, 0.0
  %v254 = vmax.f32 %v190, 0.0
  %v255 = vmax.f32 %v191, 0.0
  %v256 = vmax.f32 %v192, 0.0
  %v257 = vmax.f32 %v193, 0.0
  %v258 = vmax.f32 %v194, 0.0
  %v259 = vmax.f32 %v195, 0.0
  %v260 = vmax.f32 %v196, 0.0
  %v261 = vmax.f32 %v197, 0.0
  %v262 = vmax.f32 %v198, 0.0
  %v263 = vmax.f32 %v199, 0.0
  %v264 = vmax.f32 %v200, 0.0
  %v265 = vmax.f32 %v201, 0.0
  %v266 = vmax.f32 %v202, 0.0
  %v267 = vmax.f32 %v203, 0.0
  %v268 = vmax.f32 %v204, 0.0
  %v269 = vmax.f32 %v205, 0.0
  %v270 = vmax.f32 %v206, 0.0
  %v271 = vmax.f32 %v207, 0.0
  %v272 = vmax.f32 %v208, 0.0
  %v273 = vmax.f32 %v209, 0.0
  %v274 = vmax.f32 %v210, 0.0
  %v275 = vmax.f32 %v211, 0.0
  %v276 = vmax.f32 %v212, 0.0
  %v277 = vmax.f32 %v213, 0.0
  %v278 = vmax.f32 %v214, 0.0
  %v279 = vmax.f32 %v215, 0.0
  %v280 = vmax.f32 %v216, 0.0
  %v281 = vmax.f32 %v217, 0.0
  %v282 = vmax.f32 %v218, 0.0
  %v283 = vmax.f32 %v219, 0.0
  %v284 = vpack.c.bf16 %v221, %v220
  %v285 = vpack.c.bf16 %v223, %v222
  %v286 = vpack.c.bf16 %v225, %v224
  %v287 = vpack.c.bf16 %v227, %v226
  %v288 = vpack.c.bf16 %v229, %v228
  %v289 = vpack.c.bf16 %v231, %v230
  %v290 = vpack.c.bf16 %v233, %v232
  %v291 = vpack.c.bf16 %v235, %v234
  %v292 = vpack.c.bf16 %v237, %v236
  %v293 = vpack.c.bf16 %v239, %v238
  %v294 = vpack.c.bf16 %v241, %v240
  %v295 = vpack.c.bf16 %v243, %v242
  %v296 = vpack.c.bf16 %v245, %v244
  %v297 = vpack.c.bf16 %v247, %v246
  %v298 = vpack.c.bf16 %v249, %v248
  %v299 = vpack.c.bf16 %v251, %v250
  %v300 = vpack.c.bf16 %v253, %v252
  %v301 = vpack.c.bf16 %v255, %v254
  %v302 = vpack.c.bf16 %v257, %v256
  %v303 = vpack.c.bf16 %v259, %v258
  %v304 = vpack.c.bf16 %v261, %v260
  %v305 = vpack.c.bf16 %v263, %v262
  %v306 = vpack.c.bf16 %v265, %v264
  %v307 = vpack.c.bf16 %v267, %v266
  %v308 = vpack.c.bf16 %v269, %v268
  %v309 = vpack.c.bf16 %v271, %v270
  %v310 = vpack.c.bf16 %v273, %v272
  %v311 = vpack.c.bf16 %v275, %v274
  %v312 = vpack.c.bf16 %v277, %v276
  %v313 = vpack.c.bf16 %v279, %v278
  %v314 = vpack.c.bf16 %v281, %v280
  %v315 = vpack.c.bf16 %v283, %v282
  %v348 = vunpack.c.l.b16 %v284
  %v349 = vunpack.c.h.b16 %v284
  %v350 = vunpack.c.l.b16 %v285
  %v351 = vunpack.c.h.b16 %v285
  %v352 = vunpack.c.l.b16 %v286
  %v353 = vunpack.c.h.b16 %v286
  %v354 = vunpack.c.l.b16 %v287
  %v355 = vunpack.c.h.b16 %v287
  %v356 = vunpack.c.l.b16 %v288
  %v357 = vunpack.c.h.b16 %v288
  %v358 = vunpack.c.l.b16 %v289
  %v359 = vunpack.c.h.b16 %v289
  %v360 = vunpack.c.l.b16 %v290
  %v361 = vunpack.c.h.b16 %v290
  %v362 = vunpack.c.l.b16 %v291
  %v363 = vunpack.c.h.b16 %v291
  %v364 = vunpack.c.l.b16 %v292
  %v365 = vunpack.c.h.b16 %v292
  %v366 = vunpack.c.l.b16 %v293
  %v367 = vunpack.c.h.b16 %v293
  %v368 = vunpack.c.l.b16 %v294
  %v369 = vunpack.c.h.b16 %v294
  %v370 = vunpack.c.l.b16 %v295
  %v371 = vunpack.c.h.b16 %v295
  %v372 = vunpack.c.l.b16 %v296
  %v373 = vunpack.c.h.b16 %v296
  %v374 = vunpack.c.l.b16 %v297
  %v375 = vunpack.c.h.b16 %v297
  %v376 = vunpack.c.l.b16 %v298
  %v377 = vunpack.c.h.b16 %v298
  %v378 = vunpack.c.l.b16 %v299
  %v379 = vunpack.c.h.b16 %v299
  %v380 = vunpack.c.l.b16 %v300
  %v381 = vunpack.c.h.b16 %v300
  %v382 = vunpack.c.l.b16 %v301
  %v383 = vunpack.c.h.b16 %v301
  %v384 = vunpack.c.l.b16 %v302
  %v385 = vunpack.c.h.b16 %v302
  %v386 = vunpack.c.l.b16 %v303
  %v387 = vunpack.c.h.b16 %v303
  %v388 = vunpack.c.l.b16 %v304
  %v389 = vunpack.c.h.b16 %v304
  %v390 = vunpack.c.l.b16 %v305
  %v391 = vunpack.c.h.b16 %v305
  %v392 = vunpack.c.l.b16 %v306
  %v393 = vunpack.c.h.b16 %v306
  %v394 = vunpack.c.l.b16 %v307
  %v395 = vunpack.c.h.b16 %v307
  %v396 = vunpack.c.l.b16 %v308
  %v397 = vunpack.c.h.b16 %v308
  %v398 = vunpack.c.l.b16 %v309
  %v399 = vunpack.c.h.b16 %v309
  %v400 = vunpack.c.l.b16 %v310
  %v401 = vunpack.c.h.b16 %v310
  %v402 = vunpack.c.l.b16 %v311
  %v403 = vunpack.c.h.b16 %v311
  %v404 = vunpack.c.l.b16 %v312
  %v405 = vunpack.c.h.b16 %v312
  %v406 = vunpack.c.l.b16 %v313
  %v407 = vunpack.c.h.b16 %v313
  %v408 = vunpack.c.l.b16 %v314
  %v409 = vunpack.c.h.b16 %v314
  %v410 = vunpack.c.l.b16 %v315
  %v411 = vunpack.c.h.b16 %v315
  %v412 = vpack.c.b16 %v348, %v348
  %v413 = vpack.c.b16 %v349, %v349
  %v414 = vpack.c.b16 %v350, %v350
  %v415 = vpack.c.b16 %v351, %v351
  %v416 = vpack.c.b16 %v352, %v352
  %v417 = vpack.c.b16 %v353, %v353
  %v418 = vpack.c.b16 %v354, %v354
  %v419 = vpack.c.b16 %v355, %v355
  %v420 = vpack.c.b16 %v356, %v356
  %v421 = vpack.c.b16 %v357, %v357
  %v422 = vpack.c.b16 %v358, %v358
  %v423 = vpack.c.b16 %v359, %v359
  %v424 = vpack.c.b16 %v360, %v360
  %v425 = vpack.c.b16 %v361, %v361
  %v426 = vpack.c.b16 %v362, %v362
  %v427 = vpack.c.b16 %v363, %v363
  %v428 = vpack.c.b16 %v364, %v364
  %v429 = vpack.c.b16 %v365, %v365
  %v430 = vpack.c.b16 %v366, %v366
  %v431 = vpack.c.b16 %v367, %v367
  %v432 = vpack.c.b16 %v368, %v368
  %v433 = vpack.c.b16 %v369, %v369
  %v434 = vpack.c.b16 %v370, %v370
  %v435 = vpack.c.b16 %v371, %v371
  %v436 = vpack.c.b16 %v372, %v372
  %v437 = vpack.c.b16 %v373, %v373
  %v438 = vpack.c.b16 %v374, %v374
  %v439 = vpack.c.b16 %v375, %v375
  %v440 = vpack.c.b16 %v376, %v376
  %v441 = vpack.c.b16 %v377, %v377
  %v442 = vpack.c.b16 %v378, %v378
  %v443 = vpack.c.b16 %v379, %v379
  %v444 = vpack.c.b16 %v380, %v380
  %v445 = vpack.c.b16 %v381, %v381
  %v446 = vpack.c.b16 %v382, %v382
  %v447 = vpack.c.b16 %v383, %v383
  %v448 = vpack.c.b16 %v384, %v384
  %v449 = vpack.c.b16 %v385, %v385
  %v450 = vpack.c.b16 %v386, %v386
  %v451 = vpack.c.b16 %v387, %v387
  %v452 = vpack.c.b16 %v388, %v388
  %v453 = vpack.c.b16 %v389, %v389
  %v454 = vpack.c.b16 %v390, %v390
  %v455 = vpack.c.b16 %v391, %v391
  %v456 = vpack.c.b16 %v392, %v392
  %v457 = vpack.c.b16 %v393, %v393
  %v458 = vpack.c.b16 %v394, %v394
  %v459 = vpack.c.b16 %v395, %v395
  %v460 = vpack.c.b16 %v396, %v396
  %v461 = vpack.c.b16 %v397, %v397
  %v462 = vpack.c.b16 %v398, %v398
  %v463 = vpack.c.b16 %v399, %v399
  %v464 = vpack.c.b16 %v400, %v400
  %v465 = vpack.c.b16 %v401, %v401
  %v466 = vpack.c.b16 %v402, %v402
  %v467 = vpack.c.b16 %v403, %v403
  %v468 = vpack.c.b16 %v404, %v404
  %v469 = vpack.c.b16 %v405, %v405
  %v470 = vpack.c.b16 %v406, %v406
  %v471 = vpack.c.b16 %v407, %v407
  %v472 = vpack.c.b16 %v408, %v408
  %v473 = vpack.c.b16 %v409, %v409
  %v474 = vpack.c.b16 %v410, %v410
  %v475 = vpack.c.b16 %v411, %v411
  %540 = vst [vmem:[%s3] sm:$0xf] %v412
  %541 = vst [vmem:[%s3 + $0x4] sm:$0xf] %v413
  %542 = vst [vmem:[%s3 + $0x8] sm:$0xf] %v414
  %543 = vst [vmem:[%s3 + $0xc] sm:$0xf] %v415
  %544 = vst [vmem:[%s3 + $0x10] sm:$0xf] %v416
  %545 = vst [vmem:[%s3 + $0x14] sm:$0xf] %v417
  %546 = vst [vmem:[%s3 + $0x18] sm:$0xf] %v418
  %547 = vst [vmem:[%s3 + $0x1c] sm:$0xf] %v419
  %548 = vst [vmem:[%s3 + $0x20] sm:$0xf] %v420
  %549 = vst [vmem:[%s3 + $0x24] sm:$0xf] %v421
  %550 = vst [vmem:[%s3 + $0x28] sm:$0xf] %v422
  %551 = vst [vmem:[%s3 + $0x2c] sm:$0xf] %v423
  %552 = vst [vmem:[%s3 + $0x30] sm:$0xf] %v424
  %553 = vst [vmem:[%s3 + $0x34] sm:$0xf] %v425
  %554 = vst [vmem:[%s3 + $0x38] sm:$0xf] %v426
  %555 = vst [vmem:[%s3 + $0x3c] sm:$0xf] %v427
  %556 = vst [vmem:[%s3 + $0x40] sm:$0xf] %v428
  %557 = vst [vmem:[%s3 + $0x44] sm:$0xf] %v429
  %558 = vst [vmem:[%s3 + $0x48] sm:$0xf] %v430
  %559 = vst [vmem:[%s3 + $0x4c] sm:$0xf] %v431
  %560 = vst [vmem:[%s3 + $0x50] sm:$0xf] %v432
  %561 = vst [vmem:[%s3 + $0x54] sm:$0xf] %v433
  %562 = vst [vmem:[%s3 + $0x58] sm:$0xf] %v434
  %563 = vst [vmem:[%s3 + $0x5c] sm:$0xf] %v435
  %564 = vst [vmem:[%s3 + $0x60] sm:$0xf] %v436
  %565 = vst [vmem:[%s3 + $0x64] sm:$0xf] %v437
  %566 = vst [vmem:[%s3 + $0x68] sm:$0xf] %v438
  %567 = vst [vmem:[%s3 + $0x6c] sm:$0xf] %v439
  %568 = vst [vmem:[%s3 + $0x70] sm:$0xf] %v440
  %569 = vst [vmem:[%s3 + $0x74] sm:$0xf] %v441
  %570 = vst [vmem:[%s3 + $0x78] sm:$0xf] %v442
  %571 = vst [vmem:[%s3 + $0x7c] sm:$0xf] %v443
  %572 = vst [vmem:[%s3 + $0x80] sm:$0xf] %v444
  %573 = vst [vmem:[%s3 + $0x84] sm:$0xf] %v445
  %574 = vst [vmem:[%s3 + $0x88] sm:$0xf] %v446
  %575 = vst [vmem:[%s3 + $0x8c] sm:$0xf] %v447
  %576 = vst [vmem:[%s3 + $0x90] sm:$0xf] %v448
  %577 = vst [vmem:[%s3 + $0x94] sm:$0xf] %v449
  %578 = vst [vmem:[%s3 + $0x98] sm:$0xf] %v450
  %579 = vst [vmem:[%s3 + $0x9c] sm:$0xf] %v451
  %580 = vst [vmem:[%s3 + $0xa0] sm:$0xf] %v452
  %581 = vst [vmem:[%s3 + $0xa4] sm:$0xf] %v453
  %582 = vst [vmem:[%s3 + $0xa8] sm:$0xf] %v454
  %583 = vst [vmem:[%s3 + $0xac] sm:$0xf] %v455
  %584 = vst [vmem:[%s3 + $0xb0] sm:$0xf] %v456
  %585 = vst [vmem:[%s3 + $0xb4] sm:$0xf] %v457
  %586 = vst [vmem:[%s3 + $0xb8] sm:$0xf] %v458
  %587 = vst [vmem:[%s3 + $0xbc] sm:$0xf] %v459
  %588 = vst [vmem:[%s3 + $0xc0] sm:$0xf] %v460
  %589 = vst [vmem:[%s3 + $0xc4] sm:$0xf] %v461
  %590 = vst [vmem:[%s3 + $0xc8] sm:$0xf] %v462
  %591 = vst [vmem:[%s3 + $0xcc] sm:$0xf] %v463
  %592 = vst [vmem:[%s3 + $0xd0] sm:$0xf] %v464
  %593 = vst [vmem:[%s3 + $0xd4] sm:$0xf] %v465
  %594 = vst [vmem:[%s3 + $0xd8] sm:$0xf] %v466
  %595 = vst [vmem:[%s3 + $0xdc] sm:$0xf] %v467
  %596 = vst [vmem:[%s3 + $0xe0] sm:$0xf] %v468
  %597 = vst [vmem:[%s3 + $0xe4] sm:$0xf] %v469
  %598 = vst [vmem:[%s3 + $0xe8] sm:$0xf] %v470
  %599 = vst [vmem:[%s3 + $0xec] sm:$0xf] %v471
  %600 = vst [vmem:[%s3 + $0xf0] sm:$0xf] %v472
  %601 = vst [vmem:[%s3 + $0xf4] sm:$0xf] %v473
  %602 = vst [vmem:[%s3 + $0xf8] sm:$0xf] %v474
  %603 = vst [vmem:[%s3 + $0xfc] sm:$0xf] %v475
  // Predicated region
  $region14: #{bottleneck_forward.7} parent=0 // pred_check
    _
  $region15: #{bottleneck_forward.7} parent=0 // pred_check_branch
    %605 = sbr.rel (0) target = $region17
  $region16: #{bottleneck_forward.7} parent=0 // pred_region
    _
  $region17: #{bottleneck_forward.7} parent=0 // pred_fallthru
    _
  // Predicated region
  $region18: #{bottleneck_forward.7} parent=0 // pred_check
    _
  $region19: #{bottleneck_forward.7} parent=0 // pred_check_branch
    %607 = sbr.rel (0) target = $region21
  $region20: #{bottleneck_forward.7} parent=0 // pred_region
    _
  $region21: #{bottleneck_forward.7} parent=0 // pred_fallthru
    _

// kernel: bottleneck_forward.6
$region0: #{bottleneck_forward.6}
  #allocation0 [shape = 'u32[]', space=smem, size = 0x4, offset = 0x4, fixed_abs, tag = 'smem constant byte address 0x4 - core index']
  #allocation1 [shape = 'u32[144,128]{1,0:T(1,128)}', space=vmem, size = 0x12000, scoped, tag = 'internal scratch']
  %s0 = inlined_call_operand.vmem [shape: bf16[512,128], index: 0, kind: input, shape index: {}]
  %s1 = inlined_call_operand.vmem [shape: bf16[128,128], index: 1, kind: input, shape index: {}]
  %s2 = inlined_call_operand.vmem [shape: f32[512,128], index: 2, kind: output, shape index: {0}]
  %s3 = inlined_call_operand.vmem [shape: f32[1,128], index: 3, kind: output, shape index: {1}]
  %s4 = inlined_call_operand.vmem [shape: f32[1,128], index: 4, kind: output, shape index: {2}]
  %5 = xla_tuple %s2, %s3, %s4
  %s6 = sld [smem:[#allocation0]]
  $region34: #{bottleneck_forward.6} parent=0
    _
  %s8 = ssub.s32 1, %s6
  %s9 = scalar_select 0, %s8, %s6
  // Predicated region
  $region2: #{bottleneck_forward.6} parent=0 // pred_check
    _
  $region3: #{bottleneck_forward.6} parent=0 // pred_check_branch
    %11 = sbr.rel (0) target = $region5
  $region4: #{bottleneck_forward.6} parent=0 // pred_region
    _
  $region5: #{bottleneck_forward.6} parent=0 // pred_fallthru
    _
  // Predicated region
  $region6: #{bottleneck_forward.6} parent=0 // pred_check
    _
  $region7: #{bottleneck_forward.6} parent=0 // pred_check_branch
    %13 = sbr.rel (0) target = $region9
  $region8: #{bottleneck_forward.6} parent=0 // pred_region
    _
  $region9: #{bottleneck_forward.6} parent=0 // pred_fallthru
    _
  %v15 = vld [vmem:[%s0] sm:$0xf]
  %v16 = vld [vmem:[%s0 + $0x4] sm:$0xf]
  %v17 = vld [vmem:[%s0 + $0x8] sm:$0xf]
  %v18 = vld [vmem:[%s0 + $0xc] sm:$0xf]
  %v19 = vld [vmem:[%s0 + $0x10] sm:$0xf]
  %v20 = vld [vmem:[%s0 + $0x14] sm:$0xf]
  %v21 = vld [vmem:[%s0 + $0x18] sm:$0xf]
  %v22 = vld [vmem:[%s0 + $0x1c] sm:$0xf]
  %v23 = vld [vmem:[%s0 + $0x20] sm:$0xf]
  %v24 = vld [vmem:[%s0 + $0x24] sm:$0xf]
  %v25 = vld [vmem:[%s0 + $0x28] sm:$0xf]
  %v26 = vld [vmem:[%s0 + $0x2c] sm:$0xf]
  %v27 = vld [vmem:[%s0 + $0x30] sm:$0xf]
  %v28 = vld [vmem:[%s0 + $0x34] sm:$0xf]
  %v29 = vld [vmem:[%s0 + $0x38] sm:$0xf]
  %v30 = vld [vmem:[%s0 + $0x3c] sm:$0xf]
  %v31 = vld [vmem:[%s0 + $0x40] sm:$0xf]
  %v32 = vld [vmem:[%s0 + $0x44] sm:$0xf]
  %v33 = vld [vmem:[%s0 + $0x48] sm:$0xf]
  %v34 = vld [vmem:[%s0 + $0x4c] sm:$0xf]
  %v35 = vld [vmem:[%s0 + $0x50] sm:$0xf]
  %v36 = vld [vmem:[%s0 + $0x54] sm:$0xf]
  %v37 = vld [vmem:[%s0 + $0x58] sm:$0xf]
  %v38 = vld [vmem:[%s0 + $0x5c] sm:$0xf]
  %v39 = vld [vmem:[%s0 + $0x60] sm:$0xf]
  %v40 = vld [vmem:[%s0 + $0x64] sm:$0xf]
  %v41 = vld [vmem:[%s0 + $0x68] sm:$0xf]
  %v42 = vld [vmem:[%s0 + $0x6c] sm:$0xf]
  %v43 = vld [vmem:[%s0 + $0x70] sm:$0xf]
  %v44 = vld [vmem:[%s0 + $0x74] sm:$0xf]
  %v45 = vld [vmem:[%s0 + $0x78] sm:$0xf]
  %v46 = vld [vmem:[%s0 + $0x7c] sm:$0xf]
  %v47 = vld [vmem:[%s0 + $0x80] sm:$0xf]
  %v48 = vld [vmem:[%s0 + $0x84] sm:$0xf]
  %v49 = vld [vmem:[%s0 + $0x88] sm:$0xf]
  %v50 = vld [vmem:[%s0 + $0x8c] sm:$0xf]
  %v51 = vld [vmem:[%s0 + $0x90] sm:$0xf]
  %v52 = vld [vmem:[%s0 + $0x94] sm:$0xf]
  %v53 = vld [vmem:[%s0 + $0x98] sm:$0xf]
  %v54 = vld [vmem:[%s0 + $0x9c] sm:$0xf]
  %v55 = vld [vmem:[%s0 + $0xa0] sm:$0xf]
  %v56 = vld [vmem:[%s0 + $0xa4] sm:$0xf]
  %v57 = vld [vmem:[%s0 + $0xa8] sm:$0xf]
  %v58 = vld [vmem:[%s0 + $0xac] sm:$0xf]
  %v59 = vld [vmem:[%s0 + $0xb0] sm:$0xf]
  %v60 = vld [vmem:[%s0 + $0xb4] sm:$0xf]
  %v61 = vld [vmem:[%s0 + $0xb8] sm:$0xf]
  %v62 = vld [vmem:[%s0 + $0xbc] sm:$0xf]
  %v63 = vld [vmem:[%s0 + $0xc0] sm:$0xf]
  %v64 = vld [vmem:[%s0 + $0xc4] sm:$0xf]
  %v65 = vld [vmem:[%s0 + $0xc8] sm:$0xf]
  %v66 = vld [vmem:[%s0 + $0xcc] sm:$0xf]
  %v67 = vld [vmem:[%s0 + $0xd0] sm:$0xf]
  %v68 = vld [vmem:[%s0 + $0xd4] sm:$0xf]
  %v69 = vld [vmem:[%s0 + $0xd8] sm:$0xf]
  %v70 = vld [vmem:[%s0 + $0xdc] sm:$0xf]
  %v71 = vld [vmem:[%s0 + $0xe0] sm:$0xf]
  %v72 = vld [vmem:[%s0 + $0xe4] sm:$0xf]
  %v73 = vld [vmem:[%s0 + $0xe8] sm:$0xf]
  %v74 = vld [vmem:[%s0 + $0xec] sm:$0xf]
  %v75 = vld [vmem:[%s0 + $0xf0] sm:$0xf]
  %v76 = vld [vmem:[%s0 + $0xf4] sm:$0xf]
  %v77 = vld [vmem:[%s0 + $0xf8] sm:$0xf]
  %v78 = vld [vmem:[%s0 + $0xfc] sm:$0xf]
  %v79 = vld [vmem:[%s1] sm:$0xf]
  %v80 = vld [vmem:[%s1 + $0x4] sm:$0xf]
  %v81 = vld [vmem:[%s1 + $0x8] sm:$0xf]
  %v82 = vld [vmem:[%s1 + $0xc] sm:$0xf]
  %v83 = vld [vmem:[%s1 + $0x10] sm:$0xf]
  %v84 = vld [vmem:[%s1 + $0x14] sm:$0xf]
  %v85 = vld [vmem:[%s1 + $0x18] sm:$0xf]
  %v86 = vld [vmem:[%s1 + $0x1c] sm:$0xf]
  %v87 = vld [vmem:[%s1 + $0x20] sm:$0xf]
  %v88 = vld [vmem:[%s1 + $0x24] sm:$0xf]
  %v89 = vld [vmem:[%s1 + $0x28] sm:$0xf]
  %v90 = vld [vmem:[%s1 + $0x2c] sm:$0xf]
  %v91 = vld [vmem:[%s1 + $0x30] sm:$0xf]
  %v92 = vld [vmem:[%s1 + $0x34] sm:$0xf]
  %v93 = vld [vmem:[%s1 + $0x38] sm:$0xf]
  %v94 = vld [vmem:[%s1 + $0x3c] sm:$0xf]
  %v159 = vunpack.c.l.b16 %v15
  %v160 = vunpack.c.l.b16 %v16
  %v161 = vunpack.c.l.b16 %v17
  %v162 = vunpack.c.l.b16 %v18
  %v163 = vunpack.c.l.b16 %v19
  %v164 = vunpack.c.l.b16 %v20
  %v165 = vunpack.c.l.b16 %v21
  %v166 = vunpack.c.l.b16 %v22
  %v167 = vunpack.c.l.b16 %v23
  %v168 = vunpack.c.l.b16 %v24
  %v169 = vunpack.c.l.b16 %v25
  %v170 = vunpack.c.l.b16 %v26
  %v171 = vunpack.c.l.b16 %v27
  %v172 = vunpack.c.l.b16 %v28
  %v173 = vunpack.c.l.b16 %v29
  %v174 = vunpack.c.l.b16 %v30
  %v175 = vunpack.c.l.b16 %v31
  %v176 = vunpack.c.l.b16 %v32
  %v177 = vunpack.c.l.b16 %v33
  %v178 = vunpack.c.l.b16 %v34
  %v179 = vunpack.c.l.b16 %v35
  %v180 = vunpack.c.l.b16 %v36
  %v181 = vunpack.c.l.b16 %v37
  %v182 = vunpack.c.l.b16 %v38
  %v183 = vunpack.c.l.b16 %v39
  %v184 = vunpack.c.l.b16 %v40
  %v185 = vunpack.c.l.b16 %v41
  %v186 = vunpack.c.l.b16 %v42
  %v187 = vunpack.c.l.b16 %v43
  %v188 = vunpack.c.l.b16 %v44
  %v189 = vunpack.c.l.b16 %v45
  %v190 = vunpack.c.l.b16 %v46
  %v191 = vunpack.c.l.b16 %v47
  %v192 = vunpack.c.l.b16 %v48
  %v193 = vunpack.c.l.b16 %v49
  %v194 = vunpack.c.l.b16 %v50
  %v195 = vunpack.c.l.b16 %v51
  %v196 = vunpack.c.l.b16 %v52
  %v197 = vunpack.c.l.b16 %v53
  %v198 = vunpack.c.l.b16 %v54
  %v199 = vunpack.c.l.b16 %v55
  %v200 = vunpack.c.l.b16 %v56
  %v201 = vunpack.c.l.b16 %v57
  %v202 = vunpack.c.l.b16 %v58
  %v203 = vunpack.c.l.b16 %v59
  %v204 = vunpack.c.l.b16 %v60
  %v205 = vunpack.c.l.b16 %v61
  %v206 = vunpack.c.l.b16 %v62
  %v207 = vunpack.c.l.b16 %v63
  %v208 = vunpack.c.l.b16 %v64
  %v209 = vunpack.c.l.b16 %v65
  %v210 = vunpack.c.l.b16 %v66
  %v211 = vunpack.c.l.b16 %v67
  %v212 = vunpack.c.l.b16 %v68
  %v213 = vunpack.c.l.b16 %v69
  %v214 = vunpack.c.l.b16 %v70
  %v215 = vunpack.c.l.b16 %v71
  %v216 = vunpack.c.l.b16 %v72
  %v217 = vunpack.c.l.b16 %v73
  %v218 = vunpack.c.l.b16 %v74
  %v219 = vunpack.c.l.b16 %v75
  %v220 = vunpack.c.l.b16 %v76
  %v221 = vunpack.c.l.b16 %v77
  %v222 = vunpack.c.l.b16 %v78
  %v223 = vpack.c.b16 %v160, %v159
  %v224 = vpack.c.b16 %v162, %v161
  %v225 = vpack.c.b16 %v164, %v163
  %v226 = vpack.c.b16 %v166, %v165
  %v227 = vpack.c.b16 %v168, %v167
  %v228 = vpack.c.b16 %v170, %v169
  %v229 = vpack.c.b16 %v172, %v171
  %v230 = vpack.c.b16 %v174, %v173
  %v231 = vpack.c.b16 %v176, %v175
  %v232 = vpack.c.b16 %v178, %v177
  %v233 = vpack.c.b16 %v180, %v179
  %v234 = vpack.c.b16 %v182, %v181
  %v235 = vpack.c.b16 %v184, %v183
  %v236 = vpack.c.b16 %v186, %v185
  %v237 = vpack.c.b16 %v188, %v187
  %v238 = vpack.c.b16 %v190, %v189
  %v239 = vpack.c.b16 %v192, %v191
  %v240 = vpack.c.b16 %v194, %v193
  %v241 = vpack.c.b16 %v196, %v195
  %v242 = vpack.c.b16 %v198, %v197
  %v243 = vpack.c.b16 %v200, %v199
  %v244 = vpack.c.b16 %v202, %v201
  %v245 = vpack.c.b16 %v204, %v203
  %v246 = vpack.c.b16 %v206, %v205
  %v247 = vpack.c.b16 %v208, %v207
  %v248 = vpack.c.b16 %v210, %v209
  %v249 = vpack.c.b16 %v212, %v211
  %v250 = vpack.c.b16 %v214, %v213
  %v251 = vpack.c.b16 %v216, %v215
  %v252 = vpack.c.b16 %v218, %v217
  %v253 = vpack.c.b16 %v220, %v219
  %v254 = vpack.c.b16 %v222, %v221
  %v303 = vunpack.c.l.b16 %v79
  %v304 = vunpack.c.l.b16 %v80
  %v305 = vunpack.c.l.b16 %v81
  %v306 = vunpack.c.l.b16 %v82
  %v307 = vunpack.c.l.b16 %v83
  %v308 = vunpack.c.l.b16 %v84
  %v309 = vunpack.c.l.b16 %v85
  %v310 = vunpack.c.l.b16 %v86
  %v311 = vunpack.c.l.b16 %v87
  %v312 = vunpack.c.l.b16 %v88
  %v313 = vunpack.c.l.b16 %v89
  %v314 = vunpack.c.l.b16 %v90
  %v315 = vunpack.c.l.b16 %v91
  %v316 = vunpack.c.l.b16 %v92
  %v317 = vunpack.c.l.b16 %v93
  %v318 = vunpack.c.l.b16 %v94
  %v319 = vpack.c.b16 %v304, %v303
  %v320 = vpack.c.b16 %v306, %v305
  %v321 = vpack.c.b16 %v308, %v307
  %v322 = vpack.c.b16 %v310, %v309
  %v323 = vpack.c.b16 %v312, %v311
  %v324 = vpack.c.b16 %v314, %v313
  %v325 = vpack.c.b16 %v316, %v315
  %v326 = vpack.c.b16 %v318, %v317
  %335 = vmatprep.subr.bf16.mxu0 0
  %336 = vmatpush1.bf16.msra.mxu0 %v326
  %337 = vmatprep.subr.bf16.mxu0 0
  %338 = vmatpush1.bf16.msra.mxu0 %v325
  %339 = vmatprep.subr.bf16.mxu0 0
  %340 = vmatpush1.bf16.msra.mxu0 %v324
  %341 = vmatprep.subr.bf16.mxu0 0
  %342 = vmatpush1.bf16.msra.mxu0 %v323
  %343 = vmatprep.subr.bf16.mxu0 0
  %344 = vmatpush1.bf16.msra.mxu0 %v322
  %345 = vmatprep.subr.bf16.mxu0 0
  %346 = vmatpush1.bf16.msra.mxu0 %v321
  %347 = vmatprep.subr.bf16.mxu0 0
  %348 = vmatpush1.bf16.msra.mxu0 %v320
  %349 = vmatprep.subr.bf16.mxu0 0
  %350 = vmatpush1.bf16.msra.mxu0 %v319
  %351 = vmatprep.subr.bf16.mxu0 0
  %352 = vmatpush2.bf16.msra.mxu0 0
  %353 = vmatprep.subr.bf16.mxu0 0
  %354 = vmatpush2.bf16.msra.mxu0 0
  %355 = vmatprep.subr.bf16.mxu0 0
  %356 = vmatpush2.bf16.msra.mxu0 0
  %357 = vmatprep.subr.bf16.mxu0 0
  %358 = vmatpush2.bf16.msra.mxu0 0
  %359 = vmatprep.subr.bf16.mxu0 0
  %360 = vmatpush2.bf16.msra.mxu0 0
  %361 = vmatprep.subr.bf16.mxu0 0
  %362 = vmatpush2.bf16.msra.mxu0 0
  %363 = vmatprep.subr.bf16.mxu0 0
  %364 = vmatpush2.bf16.msra.mxu0 0
  %365 = vmatprep.subr.bf16.mxu0 0
  %366 = vmatpush2.bf16.msra.mxu0 0
  %367 = vmatprep.mubr.bf16.mxu0 0
  %368 = vmatmul.mubr.bf16.gmra.mxu0 %v223
  %v369 = vpop.f32.mrf.mxu0
  %v370 = vadd.f32 0.0, %v369
  %v371 = vpop.f32.mrf.mxu0
  %v372 = vpop.f32.mrf.mxu0
  %v373 = vadd.f32 0.0, %v372
  %v374 = vpop.f32.mrf.mxu0
  %375 = vmatprep.mubr.bf16.mxu0 0
  %376 = vmatmul.mubr.bf16.gmra.mxu0 %v224
  %v377 = vpop.f32.mrf.mxu0
  %v378 = vadd.f32 0.0, %v377
  %v379 = vpop.f32.mrf.mxu0
  %v380 = vpop.f32.mrf.mxu0
  %v381 = vadd.f32 0.0, %v380
  %v382 = vpop.f32.mrf.mxu0
  %383 = vmatprep.mubr.bf16.mxu0 0
  %384 = vmatmul.mubr.bf16.gmra.mxu0 %v225
  %v385 = vpop.f32.mrf.mxu0
  %v386 = vadd.f32 0.0, %v385
  %v387 = vpop.f32.mrf.mxu0
  %v388 = vpop.f32.mrf.mxu0
  %v389 = vadd.f32 0.0, %v388
  %v390 = vpop.f32.mrf.mxu0
  %391 = vmatprep.mubr.bf16.mxu0 0
  %392 = vmatmul.mubr.bf16.gmra.mxu0 %v226
  %v393 = vpop.f32.mrf.mxu0
  %v394 = vadd.f32 0.0, %v393
  %v395 = vpop.f32.mrf.mxu0
  %v396 = vpop.f32.mrf.mxu0
  %v397 = vadd.f32 0.0, %v396
  %v398 = vpop.f32.mrf.mxu0
  %399 = vmatprep.mubr.bf16.mxu0 0
  %400 = vmatmul.mubr.bf16.gmra.mxu0 %v227
  %v401 = vpop.f32.mrf.mxu0
  %v402 = vadd.f32 0.0, %v401
  %v403 = vpop.f32.mrf.mxu0
  %v404 = vpop.f32.mrf.mxu0
  %v405 = vadd.f32 0.0, %v404
  %v406 = vpop.f32.mrf.mxu0
  %407 = vmatprep.mubr.bf16.mxu0 0
  %408 = vmatmul.mubr.bf16.gmra.mxu0 %v228
  %v409 = vpop.f32.mrf.mxu0
  %v410 = vadd.f32 0.0, %v409
  %v411 = vpop.f32.mrf.mxu0
  %v412 = vpop.f32.mrf.mxu0
  %v413 = vadd.f32 0.0, %v412
  %v414 = vpop.f32.mrf.mxu0
  %415 = vmatprep.mubr.bf16.mxu0 0
  %416 = vmatmul.mubr.bf16.gmra.mxu0 %v229
  %v417 = vpop.f32.mrf.mxu0
  %v418 = vadd.f32 0.0, %v417
  %v419 = vpop.f32.mrf.mxu0
  %v420 = vpop.f32.mrf.mxu0
  %v421 = vadd.f32 0.0, %v420
  %v422 = vpop.f32.mrf.mxu0
  %423 = vmatprep.mubr.bf16.mxu0 0
  %424 = vmatmul.mubr.bf16.gmra.mxu0 %v230
  %v425 = vpop.f32.mrf.mxu0
  %v426 = vadd.f32 0.0, %v425
  %v427 = vpop.f32.mrf.mxu0
  %v428 = vpop.f32.mrf.mxu0
  %v429 = vadd.f32 0.0, %v428
  %v430 = vpop.f32.mrf.mxu0
  %431 = vmatprep.mubr.bf16.mxu0 0
  %432 = vmatmul.mubr.bf16.gmra.mxu0 %v231
  %v433 = vpop.f32.mrf.mxu0
  %v434 = vadd.f32 0.0, %v433
  %v435 = vpop.f32.mrf.mxu0
  %v436 = vpop.f32.mrf.mxu0
  %v437 = vadd.f32 0.0, %v436
  %v438 = vpop.f32.mrf.mxu0
  %439 = vmatprep.mubr.bf16.mxu0 0
  %440 = vmatmul.mubr.bf16.gmra.mxu0 %v232
  %v441 = vpop.f32.mrf.mxu0
  %v442 = vadd.f32 0.0, %v441
  %v443 = vpop.f32.mrf.mxu0
  %v444 = vpop.f32.mrf.mxu0
  %v445 = vadd.f32 0.0, %v444
  %v446 = vpop.f32.mrf.mxu0
  %447 = vmatprep.mubr.bf16.mxu0 0
  %448 = vmatmul.mubr.bf16.gmra.mxu0 %v233
  %v449 = vpop.f32.mrf.mxu0
  %v450 = vadd.f32 0.0, %v449
  %v451 = vpop.f32.mrf.mxu0
  %v452 = vpop.f32.mrf.mxu0
  %v453 = vadd.f32 0.0, %v452
  %v454 = vpop.f32.mrf.mxu0
  %455 = vmatprep.mubr.bf16.mxu0 0
  %456 = vmatmul.mubr.bf16.gmra.mxu0 %v234
  %v457 = vpop.f32.mrf.mxu0
  %v458 = vadd.f32 0.0, %v457
  %v459 = vpop.f32.mrf.mxu0
  %v460 = vpop.f32.mrf.mxu0
  %v461 = vadd.f32 0.0, %v460
  %v462 = vpop.f32.mrf.mxu0
  %463 = vmatprep.mubr.bf16.mxu0 0
  %464 = vmatmul.mubr.bf16.gmra.mxu0 %v235
  %v465 = vpop.f32.mrf.mxu0
  %v466 = vadd.f32 0.0, %v465
  %v467 = vpop.f32.mrf.mxu0
  %v468 = vpop.f32.mrf.mxu0
  %v469 = vadd.f32 0.0, %v468
  %v470 = vpop.f32.mrf.mxu0
  %471 = vmatprep.mubr.bf16.mxu0 0
  %472 = vmatmul.mubr.bf16.gmra.mxu0 %v236
  %v473 = vpop.f32.mrf.mxu0
  %v474 = vadd.f32 0.0, %v473
  %v475 = vpop.f32.mrf.mxu0
  %v476 = vpop.f32.mrf.mxu0
  %v477 = vadd.f32 0.0, %v476
  %v478 = vpop.f32.mrf.mxu0
  %479 = vmatprep.mubr.bf16.mxu0 0
  %480 = vmatmul.mubr.bf16.gmra.mxu0 %v237
  %v481 = vpop.f32.mrf.mxu0
  %v482 = vadd.f32 0.0, %v481
  %v483 = vpop.f32.mrf.mxu0
  %v484 = vpop.f32.mrf.mxu0
  %v485 = vadd.f32 0.0, %v484
  %v486 = vpop.f32.mrf.mxu0
  %487 = vmatprep.mubr.bf16.mxu0 0
  %488 = vmatmul.mubr.bf16.gmra.mxu0 %v238
  %v489 = vpop.f32.mrf.mxu0
  %v490 = vadd.f32 0.0, %v489
  %v491 = vpop.f32.mrf.mxu0
  %v492 = vpop.f32.mrf.mxu0
  %v493 = vadd.f32 0.0, %v492
  %v494 = vpop.f32.mrf.mxu0
  %495 = vmatprep.mubr.bf16.mxu0 0
  %496 = vmatmul.mubr.bf16.gmra.mxu0 %v239
  %v497 = vpop.f32.mrf.mxu0
  %v498 = vadd.f32 0.0, %v497
  %v499 = vpop.f32.mrf.mxu0
  %v500 = vpop.f32.mrf.mxu0
  %v501 = vadd.f32 0.0, %v500
  %v502 = vpop.f32.mrf.mxu0
  %503 = vmatprep.mubr.bf16.mxu0 0
  %504 = vmatmul.mubr.bf16.gmra.mxu0 %v240
  %v505 = vpop.f32.mrf.mxu0
  %v506 = vadd.f32 0.0, %v505
  %v507 = vpop.f32.mrf.mxu0
  %v508 = vpop.f32.mrf.mxu0
  %v509 = vadd.f32 0.0, %v508
  %v510 = vpop.f32.mrf.mxu0
  %511 = vmatprep.mubr.bf16.mxu0 0
  %512 = vmatmul.mubr.bf16.gmra.mxu0 %v241
  %v513 = vpop.f32.mrf.mxu0
  %v514 = vadd.f32 0.0, %v513
  %v515 = vpop.f32.mrf.mxu0
  %v516 = vpop.f32.mrf.mxu0
  %v517 = vadd.f32 0.0, %v516
  %v518 = vpop.f32.mrf.mxu0
  %519 = vmatprep.mubr.bf16.mxu0 0
  %520 = vmatmul.mubr.bf16.gmra.mxu0 %v242
  %v521 = vpop.f32.mrf.mxu0
  %v522 = vadd.f32 0.0, %v521
  %v523 = vpop.f32.mrf.mxu0
  %v524 = vpop.f32.mrf.mxu0
  %v525 = vadd.f32 0.0, %v524
  %v526 = vpop.f32.mrf.mxu0
  %527 = vmatprep.mubr.bf16.mxu0 0
  %528 = vmatmul.mubr.bf16.gmra.mxu0 %v243
  %v529 = vpop.f32.mrf.mxu0
  %v530 = vadd.f32 0.0, %v529
  %v531 = vpop.f32.mrf.mxu0
  %v532 = vpop.f32.mrf.mxu0
  %v533 = vadd.f32 0.0, %v532
  %v534 = vpop.f32.mrf.mxu0
  %535 = vmatprep.mubr.bf16.mxu0 0
  %536 = vmatmul.mubr.bf16.gmra.mxu0 %v244
  %v537 = vpop.f32.mrf.mxu0
  %v538 = vadd.f32 0.0, %v537
  %v539 = vpop.f32.mrf.mxu0
  %v540 = vpop.f32.mrf.mxu0
  %v541 = vadd.f32 0.0, %v540
  %v542 = vpop.f32.mrf.mxu0
  %543 = vmatprep.mubr.bf16.mxu0 0
  %544 = vmatmul.mubr.bf16.gmra.mxu0 %v245
  %v545 = vpop.f32.mrf.mxu0
  %v546 = vadd.f32 0.0, %v545
  %v547 = vpop.f32.mrf.mxu0
  %v548 = vpop.f32.mrf.mxu0
  %v549 = vadd.f32 0.0, %v548
  %v550 = vpop.f32.mrf.mxu0
  %551 = vmatprep.mubr.bf16.mxu0 0
  %552 = vmatmul.mubr.bf16.gmra.mxu0 %v246
  %v553 = vpop.f32.mrf.mxu0
  %v554 = vadd.f32 0.0, %v553
  %v555 = vpop.f32.mrf.mxu0
  %v556 = vpop.f32.mrf.mxu0
  %v557 = vadd.f32 0.0, %v556
  %v558 = vpop.f32.mrf.mxu0
  %559 = vmatprep.mubr.bf16.mxu0 0
  %560 = vmatmul.mubr.bf16.gmra.mxu0 %v247
  %v561 = vpop.f32.mrf.mxu0
  %v562 = vadd.f32 0.0, %v561
  %v563 = vpop.f32.mrf.mxu0
  %v564 = vpop.f32.mrf.mxu0
  %v565 = vadd.f32 0.0, %v564
  %v566 = vpop.f32.mrf.mxu0
  %567 = vmatprep.mubr.bf16.mxu0 0
  %568 = vmatmul.mubr.bf16.gmra.mxu0 %v248
  %v569 = vpop.f32.mrf.mxu0
  %v570 = vadd.f32 0.0, %v569
  %v571 = vpop.f32.mrf.mxu0
  %v572 = vpop.f32.mrf.mxu0
  %v573 = vadd.f32 0.0, %v572
  %v574 = vpop.f32.mrf.mxu0
  %575 = vmatprep.mubr.bf16.mxu0 0
  %576 = vmatmul.mubr.bf16.gmra.mxu0 %v249
  %v577 = vpop.f32.mrf.mxu0
  %v578 = vadd.f32 0.0, %v577
  %v579 = vpop.f32.mrf.mxu0
  %v580 = vpop.f32.mrf.mxu0
  %v581 = vadd.f32 0.0, %v580
  %v582 = vpop.f32.mrf.mxu0
  %583 = vmatprep.mubr.bf16.mxu0 0
  %584 = vmatmul.mubr.bf16.gmra.mxu0 %v250
  %v585 = vpop.f32.mrf.mxu0
  %v586 = vadd.f32 0.0, %v585
  %v587 = vpop.f32.mrf.mxu0
  %v588 = vpop.f32.mrf.mxu0
  %v589 = vadd.f32 0.0, %v588
  %v590 = vpop.f32.mrf.mxu0
  %591 = vmatprep.mubr.bf16.mxu0 0
  %592 = vmatmul.mubr.bf16.gmra.mxu0 %v251
  %v593 = vpop.f32.mrf.mxu0
  %v594 = vadd.f32 0.0, %v593
  %v595 = vpop.f32.mrf.mxu0
  %v596 = vpop.f32.mrf.mxu0
  %v597 = vadd.f32 0.0, %v596
  %v598 = vpop.f32.mrf.mxu0
  %599 = vmatprep.mubr.bf16.mxu0 0
  %600 = vmatmul.mubr.bf16.gmra.mxu0 %v252
  %v601 = vpop.f32.mrf.mxu0
  %v602 = vadd.f32 0.0, %v601
  %v603 = vpop.f32.mrf.mxu0
  %v604 = vpop.f32.mrf.mxu0
  %v605 = vadd.f32 0.0, %v604
  %v606 = vpop.f32.mrf.mxu0
  %607 = vmatprep.mubr.bf16.mxu0 0
  %608 = vmatmul.mubr.bf16.gmra.mxu0 %v253
  %v609 = vpop.f32.mrf.mxu0
  %v610 = vadd.f32 0.0, %v609
  %v611 = vpop.f32.mrf.mxu0
  %v612 = vpop.f32.mrf.mxu0
  %v613 = vadd.f32 0.0, %v612
  %v614 = vpop.f32.mrf.mxu0
  %615 = vmatprep.mubr.bf16.mxu0 0
  %616 = vmatmul.mubr.bf16.gmra.mxu0 %v254
  %v617 = vpop.f32.mrf.mxu0
  %v618 = vadd.f32 0.0, %v617
  %v619 = vpop.f32.mrf.mxu0
  %v620 = vpop.f32.mrf.mxu0
  %v621 = vadd.f32 0.0, %v620
  %v622 = vpop.f32.mrf.mxu0
  %623 = vdwg.mxu0
  %624 = vst [vmem:[%s2] sm:$0xff] %v370
  %625 = vst [vmem:[%s2 + $0x8] sm:$0xff] %v373
  %626 = vst [vmem:[%s2 + $0x10] sm:$0xff] %v378
  %627 = vst [vmem:[%s2 + $0x18] sm:$0xff] %v381
  %628 = vst [vmem:[%s2 + $0x20] sm:$0xff] %v386
  %629 = vst [vmem:[%s2 + $0x28] sm:$0xff] %v389
  %630 = vst [vmem:[%s2 + $0x30] sm:$0xff] %v394
  %631 = vst [vmem:[%s2 + $0x38] sm:$0xff] %v397
  %632 = vst [vmem:[%s2 + $0x40] sm:$0xff] %v402
  %633 = vst [vmem:[%s2 + $0x48] sm:$0xff] %v405
  %634 = vst [vmem:[%s2 + $0x50] sm:$0xff] %v410
  %635 = vst [vmem:[%s2 + $0x58] sm:$0xff] %v413
  %636 = vst [vmem:[%s2 + $0x60] sm:$0xff] %v418
  %637 = vst [vmem:[%s2 + $0x68] sm:$0xff] %v421
  %638 = vst [vmem:[%s2 + $0x70] sm:$0xff] %v426
  %639 = vst [vmem:[%s2 + $0x78] sm:$0xff] %v429
  %640 = vst [vmem:[%s2 + $0x80] sm:$0xff] %v434
  %641 = vst [vmem:[%s2 + $0x88] sm:$0xff] %v437
  %642 = vst [vmem:[%s2 + $0x90] sm:$0xff] %v442
  %643 = vst [vmem:[%s2 + $0x98] sm:$0xff] %v445
  %644 = vst [vmem:[%s2 + $0xa0] sm:$0xff] %v450
  %645 = vst [vmem:[%s2 + $0xa8] sm:$0xff] %v453
  %646 = vst [vmem:[%s2 + $0xb0] sm:$0xff] %v458
  %647 = vst [vmem:[%s2 + $0xb8] sm:$0xff] %v461
  %648 = vst [vmem:[%s2 + $0xc0] sm:$0xff] %v466
  %649 = vst [vmem:[%s2 + $0xc8] sm:$0xff] %v469
  %650 = vst [vmem:[%s2 + $0xd0] sm:$0xff] %v474
  %651 = vst [vmem:[%s2 + $0xd8] sm:$0xff] %v477
  %652 = vst [vmem:[%s2 + $0xe0] sm:$0xff] %v482
  %653 = vst [vmem:[%s2 + $0xe8] sm:$0xff] %v485
  %654 = vst [vmem:[%s2 + $0xf0] sm:$0xff] %v490
  %655 = vst [vmem:[%s2 + $0xf8] sm:$0xff] %v493
  %656 = vst [vmem:[%s2 + $0x100] sm:$0xff] %v498
  %657 = vst [vmem:[%s2 + $0x108] sm:$0xff] %v501
  %658 = vst [vmem:[%s2 + $0x110] sm:$0xff] %v506
  %659 = vst [vmem:[%s2 + $0x118] sm:$0xff] %v509
  %660 = vst [vmem:[%s2 + $0x120] sm:$0xff] %v514
  %661 = vst [vmem:[%s2 + $0x128] sm:$0xff] %v517
  %662 = vst [vmem:[%s2 + $0x130] sm:$0xff] %v522
  %663 = vst [vmem:[%s2 + $0x138] sm:$0xff] %v525
  %664 = vst [vmem:[%s2 + $0x140] sm:$0xff] %v530
  %665 = vst [vmem:[%s2 + $0x148] sm:$0xff] %v533
  %666 = vst [vmem:[%s2 + $0x150] sm:$0xff] %v538
  %667 = vst [vmem:[%s2 + $0x158] sm:$0xff] %v541
  %668 = vst [vmem:[%s2 + $0x160] sm:$0xff] %v546
  %669 = vst [vmem:[%s2 + $0x168] sm:$0xff] %v549
  %670 = vst [vmem:[%s2 + $0x170] sm:$0xff] %v554
  %671 = vst [vmem:[%s2 + $0x178] sm:$0xff] %v557
  %672 = vst [vmem:[%s2 + $0x180] sm:$0xff] %v562
  %673 = vst [vmem:[%s2 + $0x188] sm:$0xff] %v565
  %674 = vst [vmem:[%s2 + $0x190] sm:$0xff] %v570
  %675 = vst [vmem:[%s2 + $0x198] sm:$0xff] %v573
  %676 = vst [vmem:[%s2 + $0x1a0] sm:$0xff] %v578
  %677 = vst [vmem:[%s2 + $0x1a8] sm:$0xff] %v581
  %678 = vst [vmem:[%s2 + $0x1b0] sm:$0xff] %v586
  %679 = vst [vmem:[%s2 + $0x1b8] sm:$0xff] %v589
  %680 = vst [vmem:[%s2 + $0x1c0] sm:$0xff] %v594
  %681 = vst [vmem:[%s2 + $0x1c8] sm:$0xff] %v597
  %682 = vst [vmem:[%s2 + $0x1d0] sm:$0xff] %v602
  %683 = vst [vmem:[%s2 + $0x1d8] sm:$0xff] %v605
  %684 = vst [vmem:[%s2 + $0x1e0] sm:$0xff] %v610
  %685 = vst [vmem:[%s2 + $0x1e8] sm:$0xff] %v613
  %686 = vst [vmem:[%s2 + $0x1f0] sm:$0xff] %v618
  %687 = vst [vmem:[%s2 + $0x1f8] sm:$0xff] %v621
  %v688 = vadd.f32 %v370, %v373
  %v689 = vadd.f32 %v688, %v378
  %v690 = vadd.f32 %v689, %v381
  %v691 = vadd.f32 %v690, %v386
  %v692 = vadd.f32 %v691, %v389
  %v693 = vadd.f32 %v692, %v394
  %v694 = vadd.f32 %v693, %v397
  %v695 = vadd.f32 %v694, %v402
  %v696 = vadd.f32 %v695, %v405
  %v697 = vadd.f32 %v696, %v410
  %v698 = vadd.f32 %v697, %v413
  %v699 = vadd.f32 %v698, %v418
  %v700 = vadd.f32 %v699, %v421
  %v701 = vadd.f32 %v700, %v426
  %v702 = vadd.f32 %v701, %v429
  %v703 = vadd.f32 %v702, %v434
  %v704 = vadd.f32 %v703, %v437
  %v705 = vadd.f32 %v704, %v442
  %v706 = vadd.f32 %v705, %v445
  %v707 = vadd.f32 %v706, %v450
  %v708 = vadd.f32 %v707, %v453
  %v709 = vadd.f32 %v708, %v458
  %v710 = vadd.f32 %v709, %v461
  %v711 = vadd.f32 %v710, %v466
  %v712 = vadd.f32 %v711, %v469
  %v713 = vadd.f32 %v712, %v474
  %v714 = vadd.f32 %v713, %v477
  %v715 = vadd.f32 %v714, %v482
  %v716 = vadd.f32 %v715, %v485
  %v717 = vadd.f32 %v716, %v490
  %v718 = vadd.f32 %v717, %v493
  %v719 = vadd.f32 %v718, %v498
  %v720 = vadd.f32 %v719, %v501
  %v721 = vadd.f32 %v720, %v506
  %v722 = vadd.f32 %v721, %v509
  %v723 = vadd.f32 %v722, %v514
  %v724 = vadd.f32 %v723, %v517
  %v725 = vadd.f32 %v724, %v522
  %v726 = vadd.f32 %v725, %v525
  %v727 = vadd.f32 %v726, %v530
  %v728 = vadd.f32 %v727, %v533
  %v729 = vadd.f32 %v728, %v538
  %v730 = vadd.f32 %v729, %v541
  %v731 = vadd.f32 %v730, %v546
  %v732 = vadd.f32 %v731, %v549
  %v733 = vadd.f32 %v732, %v554
  %v734 = vadd.f32 %v733, %v557
  %v735 = vadd.f32 %v734, %v562
  %v736 = vadd.f32 %v735, %v565
  %v737 = vadd.f32 %v736, %v570
  %v738 = vadd.f32 %v737, %v573
  %v739 = vadd.f32 %v738, %v578
  %v740 = vadd.f32 %v739, %v581
  %v741 = vadd.f32 %v740, %v586
  %v742 = vadd.f32 %v741, %v589
  %v743 = vadd.f32 %v742, %v594
  %v744 = vadd.f32 %v743, %v597
  %v745 = vadd.f32 %v744, %v602
  %v746 = vadd.f32 %v745, %v605
  %v747 = vadd.f32 %v746, %v610
  %v748 = vadd.f32 %v747, %v613
  %v749 = vadd.f32 %v748, %v618
  %v750 = vadd.f32 %v749, %v621
  %v751 = vrot.slane %v750, 4
  %v752 = vadd.f32 %v750, %v751
  %v753 = vrot.slane %v752, 2
  %v754 = vadd.f32 %v752, %v753
  %v755 = vrot.slane %v754, 1
  %v756 = vadd.f32 %v754, %v755
  %757 = vst [vmem:[%s3] sm:$0x1] %v756
  %v758 = vmul.f32 %v370, %v370
  %v759 = vmul.f32 %v373, %v373
  %v760 = vmul.f32 %v378, %v378
  %v761 = vmul.f32 %v381, %v381
  %v762 = vmul.f32 %v386, %v386
  %v763 = vmul.f32 %v389, %v389
  %v764 = vmul.f32 %v394, %v394
  %v765 = vmul.f32 %v397, %v397
  %v766 = vmul.f32 %v402, %v402
  %v767 = vmul.f32 %v405, %v405
  %v768 = vmul.f32 %v410, %v410
  %v769 = vmul.f32 %v413, %v413
  %v770 = vmul.f32 %v418, %v418
  %v771 = vmul.f32 %v421, %v421
  %v772 = vmul.f32 %v426, %v426
  %v773 = vmul.f32 %v429, %v429
  %v774 = vmul.f32 %v434, %v434
  %v775 = vmul.f32 %v437, %v437
  %v776 = vmul.f32 %v442, %v442
  %v777 = vmul.f32 %v445, %v445
  %v778 = vmul.f32 %v450, %v450
  %v779 = vmul.f32 %v453, %v453
  %v780 = vmul.f32 %v458, %v458
  %v781 = vmul.f32 %v461, %v461
  %v782 = vmul.f32 %v466, %v466
  %v783 = vmul.f32 %v469, %v469
  %v784 = vmul.f32 %v474, %v474
  %v785 = vmul.f32 %v477, %v477
  %v786 = vmul.f32 %v482, %v482
  %v787 = vmul.f32 %v485, %v485
  %v788 = vmul.f32 %v490, %v490
  %v789 = vmul.f32 %v493, %v493
  %v790 = vmul.f32 %v498, %v498
  %v791 = vmul.f32 %v501, %v501
  %v792 = vmul.f32 %v506, %v506
  %v793 = vmul.f32 %v509, %v509
  %v794 = vmul.f32 %v514, %v514
  %v795 = vmul.f32 %v517, %v517
  %v796 = vmul.f32 %v522, %v522
  %v797 = vmul.f32 %v525, %v525
  %v798 = vmul.f32 %v530, %v530
  %v799 = vmul.f32 %v533, %v533
  %v800 = vmul.f32 %v538, %v538
  %v801 = vmul.f32 %v541, %v541
  %v802 = vmul.f32 %v546, %v546
  %v803 = vmul.f32 %v549, %v549
  %v804 = vmul.f32 %v554, %v554
  %v805 = vmul.f32 %v557, %v557
  %v806 = vmul.f32 %v562, %v562
  %v807 = vmul.f32 %v565, %v565
  %v808 = vmul.f32 %v570, %v570
  %v809 = vmul.f32 %v573, %v573
  %v810 = vmul.f32 %v578, %v578
  %v811 = vmul.f32 %v581, %v581
  %v812 = vmul.f32 %v586, %v586
  %v813 = vmul.f32 %v589, %v589
  %v814 = vmul.f32 %v594, %v594
  %v815 = vmul.f32 %v597, %v597
  %v816 = vmul.f32 %v602, %v602
  %v817 = vmul.f32 %v605, %v605
  %v818 = vmul.f32 %v610, %v610
  %v819 = vmul.f32 %v613, %v613
  %v820 = vmul.f32 %v618, %v618
  %v821 = vmul.f32 %v621, %v621
  %v822 = vadd.f32 %v758, %v759
  %v823 = vadd.f32 %v822, %v760
  %v824 = vadd.f32 %v823, %v761
  %v825 = vadd.f32 %v824, %v762
  %v826 = vadd.f32 %v825, %v763
  %v827 = vadd.f32 %v826, %v764
  %v828 = vadd.f32 %v827, %v765
  %v829 = vadd.f32 %v828, %v766
  %v830 = vadd.f32 %v829, %v767
  %v831 = vadd.f32 %v830, %v768
  %v832 = vadd.f32 %v831, %v769
  %v833 = vadd.f32 %v832, %v770
  %v834 = vadd.f32 %v833, %v771
  %v835 = vadd.f32 %v834, %v772
  %v836 = vadd.f32 %v835, %v773
  %v837 = vadd.f32 %v836, %v774
  %v838 = vadd.f32 %v837, %v775
  %v839 = vadd.f32 %v838, %v776
  %v840 = vadd.f32 %v839, %v777
  %v841 = vadd.f32 %v840, %v778
  %v842 = vadd.f32 %v841, %v779
  %v843 = vadd.f32 %v842, %v780
  %v844 = vadd.f32 %v843, %v781
  %v845 = vadd.f32 %v844, %v782
  %v846 = vadd.f32 %v845, %v783
  %v847 = vadd.f32 %v846, %v784
  %v848 = vadd.f32 %v847, %v785
  %v849 = vadd.f32 %v848, %v786
  %v850 = vadd.f32 %v849, %v787
  %v851 = vadd.f32 %v850, %v788
  %v852 = vadd.f32 %v851, %v789
  %v853 = vadd.f32 %v852, %v790
  %v854 = vadd.f32 %v853, %v791
  %v855 = vadd.f32 %v854, %v792
  %v856 = vadd.f32 %v855, %v793
  %v857 = vadd.f32 %v856, %v794
  %v858 = vadd.f32 %v857, %v795
  %v859 = vadd.f32 %v858, %v796
  %v860 = vadd.f32 %v859, %v797
  %v861 = vadd.f32 %v860, %v798
  %v862 = vadd.f32 %v861, %v799
  %v863 = vadd.f32 %v862, %v800
  %v864 = vadd.f32 %v863, %v801
  %v865 = vadd.f32 %v864, %v802
  %v866 = vadd.f32 %v865, %v803
  %v867 = vadd.f32 %v866, %v804
  %v868 = vadd.f32 %v867, %v805
  %v869 = vadd.f32 %v868, %v806
  %v870 = vadd.f32 %v869, %v807
  %v871 = vadd.f32 %v870, %v808
  %v872 = vadd.f32 %v871, %v809
  %v873 = vadd.f32 %v872, %v810
  %v874 = vadd.f32 %v873, %v811
  %v875 = vadd.f32 %v874, %v812
  %v876 = vadd.f32 %v875, %v813
  %v877 = vadd.f32 %v876, %v814
  %v878 = vadd.f32 %v877, %v815
  %v879 = vadd.f32 %v878, %v816
  %v880 = vadd.f32 %v879, %v817
  %v881 = vadd.f32 %v880, %v818
  %v882 = vadd.f32 %v881, %v819
  %v883 = vadd.f32 %v882, %v820
  %v884 = vadd.f32 %v883, %v821
  %v885 = vrot.slane %v884, 4
  %v886 = vadd.f32 %v884, %v885
  %v887 = vrot.slane %v886, 2
  %v888 = vadd.f32 %v886, %v887
  %v889 = vrot.slane %v888, 1
  %v890 = vadd.f32 %v888, %v889
  %891 = vst [vmem:[%s4] sm:$0x1] %v890
  // Predicated region
  $region10: #{bottleneck_forward.6} parent=0 // pred_check
    _
  $region11: #{bottleneck_forward.6} parent=0 // pred_check_branch
    %893 = sbr.rel (0) target = $region13
  $region12: #{bottleneck_forward.6} parent=0 // pred_region
    _
  $region13: #{bottleneck_forward.6} parent=0 // pred_fallthru
    _
  // Predicated region
  $region14: #{bottleneck_forward.6} parent=0 // pred_check
    _
  $region15: #{bottleneck_forward.6} parent=0 // pred_check_branch
    %895 = sbr.rel (0) target = $region17
  $region16: #{bottleneck_forward.6} parent=0 // pred_region
    _
  $region17: #{bottleneck_forward.6} parent=0 // pred_fallthru
    _
  // Predicated region
  $region18: #{bottleneck_forward.6} parent=0 // pred_check
    _
  $region19: #{bottleneck_forward.6} parent=0 // pred_check_branch
    %897 = sbr.rel (0) target = $region21
  $region20: #{bottleneck_forward.6} parent=0 // pred_region
    _
  $region21: #{bottleneck_forward.6} parent=0 // pred_fallthru
    _
  // Predicated region
  $region22: #{bottleneck_forward.6} parent=0 // pred_check
    _
  $region23: #{bottleneck_forward.6} parent=0 // pred_check_branch
    %899 = sbr.rel (0) target = $region25
  $region24: #{bottleneck_forward.6} parent=0 // pred_region
    _
  $region25: #{bottleneck_forward.6} parent=0 // pred_fallthru
    _
  // Predicated region
  $region26: #{bottleneck_forward.6} parent=0 // pred_check
    _
  $region27: #{bottleneck_forward.6} parent=0 // pred_check_branch
    %901 = sbr.rel (0) target = $region29
  $region28: #{bottleneck_forward.6} parent=0 // pred_region
    _
  $region29: #{bottleneck_forward.6} parent=0 // pred_fallthru
    _
  // Predicated region
  $region30: #{bottleneck_forward.6} parent=0 // pred_check
    _
  $region31: #{bottleneck_forward.6} parent=0 // pred_check_branch
    %903 = sbr.rel (0) target = $region33
  $region32: #{bottleneck_forward.6} parent=0 // pred_region
    _
  $region33: #{bottleneck_forward.6} parent=0 // pred_fallthru
    _

// kernel: bottleneck_forward.10
$region0: #{bottleneck_forward.10}
  #allocation0 [shape = 'u32[]', space=smem, size = 0x4, offset = 0x4, fixed_abs, tag = 'smem constant byte address 0x4 - core index']
  #allocation1 [shape = 'u32[144,128]{1,0:T(1,128)}', space=vmem, size = 0x12000, scoped, tag = 'internal scratch']
  %s0 = inlined_call_operand.vmem [shape: f32[128,128], index: 0, kind: input, shape index: {}]
  %s1 = inlined_call_operand.vmem [shape: f32[1,128], index: 1, kind: input, shape index: {}]
  %s2 = inlined_call_operand.vmem [shape: f32[1,128], index: 2, kind: input, shape index: {}]
  %s3 = inlined_call_operand.vmem [shape: bf16[128,128], index: 3, kind: input, shape index: {}]
  %s4 = inlined_call_operand.vmem [shape: f32[128,128], index: 4, kind: output, shape index: {0}]
  %s5 = inlined_call_operand.vmem [shape: f32[1,128], index: 5, kind: output, shape index: {1}]
  %s6 = inlined_call_operand.vmem [shape: f32[1,128], index: 6, kind: output, shape index: {2}]
  %7 = xla_tuple %s4, %s5, %s6
  %s8 = sld [smem:[#allocation0]]
  $region42: #{bottleneck_forward.10} parent=0
    _
  %s10 = ssub.s32 1, %s8
  %s11 = scalar_select 0, %s10, %s8
  // Predicated region
  $region2: #{bottleneck_forward.10} parent=0 // pred_check
    _
  $region3: #{bottleneck_forward.10} parent=0 // pred_check_branch
    %13 = sbr.rel (0) target = $region5
  $region4: #{bottleneck_forward.10} parent=0 // pred_region
    _
  $region5: #{bottleneck_forward.10} parent=0 // pred_fallthru
    _
  // Predicated region
  $region6: #{bottleneck_forward.10} parent=0 // pred_check
    _
  $region7: #{bottleneck_forward.10} parent=0 // pred_check_branch
    %15 = sbr.rel (0) target = $region9
  $region8: #{bottleneck_forward.10} parent=0 // pred_region
    _
  $region9: #{bottleneck_forward.10} parent=0 // pred_fallthru
    _
  // Predicated region
  $region10: #{bottleneck_forward.10} parent=0 // pred_check
    _
  $region11: #{bottleneck_forward.10} parent=0 // pred_check_branch
    %17 = sbr.rel (0) target = $region13
  $region12: #{bottleneck_forward.10} parent=0 // pred_region
    _
  $region13: #{bottleneck_forward.10} parent=0 // pred_fallthru
    _
  // Predicated region
  $region14: #{bottleneck_forward.10} parent=0 // pred_check
    _
  $region15: #{bottleneck_forward.10} parent=0 // pred_check_branch
    %19 = sbr.rel (0) target = $region17
  $region16: #{bottleneck_forward.10} parent=0 // pred_region
    _
  $region17: #{bottleneck_forward.10} parent=0 // pred_fallthru
    _
  %v21 = vld [vmem:[%s0] sm:$0xff]
  %v22 = vld [vmem:[%s0 + $0x8] sm:$0xff]
  %v23 = vld [vmem:[%s0 + $0x10] sm:$0xff]
  %v24 = vld [vmem:[%s0 + $0x18] sm:$0xff]
  %v25 = vld [vmem:[%s0 + $0x20] sm:$0xff]
  %v26 = vld [vmem:[%s0 + $0x28] sm:$0xff]
  %v27 = vld [vmem:[%s0 + $0x30] sm:$0xff]
  %v28 = vld [vmem:[%s0 + $0x38] sm:$0xff]
  %v29 = vld [vmem:[%s0 + $0x40] sm:$0xff]
  %v30 = vld [vmem:[%s0 + $0x48] sm:$0xff]
  %v31 = vld [vmem:[%s0 + $0x50] sm:$0xff]
  %v32 = vld [vmem:[%s0 + $0x58] sm:$0xff]
  %v33 = vld [vmem:[%s0 + $0x60] sm:$0xff]
  %v34 = vld [vmem:[%s0 + $0x68] sm:$0xff]
  %v35 = vld [vmem:[%s0 + $0x70] sm:$0xff]
  %v36 = vld [vmem:[%s0 + $0x78] sm:$0xff]
  %v37 = vld [vmem:[%s1] sm:$0x1]
  %v39 = vlaneseq
  %v40 = vshrl.u32 %v39, 7
  %v41 = vsub.s32 0, %v40
  %v42 = vrot.slane %v37, %v41
  %v44 = vmul.f32 %v21, %v42
  %v45 = vmul.f32 %v22, %v42
  %v46 = vmul.f32 %v23, %v42
  %v47 = vmul.f32 %v24, %v42
  %v48 = vmul.f32 %v25, %v42
  %v49 = vmul.f32 %v26, %v42
  %v50 = vmul.f32 %v27, %v42
  %v51 = vmul.f32 %v28, %v42
  %v52 = vmul.f32 %v29, %v42
  %v53 = vmul.f32 %v30, %v42
  %v54 = vmul.f32 %v31, %v42
  %v55 = vmul.f32 %v32, %v42
  %v56 = vmul.f32 %v33, %v42
  %v57 = vmul.f32 %v34, %v42
  %v58 = vmul.f32 %v35, %v42
  %v59 = vmul.f32 %v36, %v42
  %v60 = vld [vmem:[%s2] sm:$0x1]
  %v62 = vlaneseq
  %v63 = vshrl.u32 %v62, 7
  %v64 = vsub.s32 0, %v63
  %v65 = vrot.slane %v60, %v64
  %v67 = vadd.f32 %v44, %v65
  %v68 = vadd.f32 %v45, %v65
  %v69 = vadd.f32 %v46, %v65
  %v70 = vadd.f32 %v47, %v65
  %v71 = vadd.f32 %v48, %v65
  %v72 = vadd.f32 %v49, %v65
  %v73 = vadd.f32 %v50, %v65
  %v74 = vadd.f32 %v51, %v65
  %v75 = vadd.f32 %v52, %v65
  %v76 = vadd.f32 %v53, %v65
  %v77 = vadd.f32 %v54, %v65
  %v78 = vadd.f32 %v55, %v65
  %v79 = vadd.f32 %v56, %v65
  %v80 = vadd.f32 %v57, %v65
  %v81 = vadd.f32 %v58, %v65
  %v82 = vadd.f32 %v59, %v65
  %v83 = vmax.f32 %v67, 0.0
  %v84 = vmax.f32 %v68, 0.0
  %v85 = vmax.f32 %v69, 0.0
  %v86 = vmax.f32 %v70, 0.0
  %v87 = vmax.f32 %v71, 0.0
  %v88 = vmax.f32 %v72, 0.0
  %v89 = vmax.f32 %v73, 0.0
  %v90 = vmax.f32 %v74, 0.0
  %v91 = vmax.f32 %v75, 0.0
  %v92 = vmax.f32 %v76, 0.0
  %v93 = vmax.f32 %v77, 0.0
  %v94 = vmax.f32 %v78, 0.0
  %v95 = vmax.f32 %v79, 0.0
  %v96 = vmax.f32 %v80, 0.0
  %v97 = vmax.f32 %v81, 0.0
  %v98 = vmax.f32 %v82, 0.0
  %v99 = vpack.c.bf16 %v84, %v83
  %v100 = vpack.c.bf16 %v86, %v85
  %v101 = vpack.c.bf16 %v88, %v87
  %v102 = vpack.c.bf16 %v90, %v89
  %v103 = vpack.c.bf16 %v92, %v91
  %v104 = vpack.c.bf16 %v94, %v93
  %v105 = vpack.c.bf16 %v96, %v95
  %v106 = vpack.c.bf16 %v98, %v97
  %v107 = vld [vmem:[%s3] sm:$0xf]
  %v108 = vld [vmem:[%s3 + $0x4] sm:$0xf]
  %v109 = vld [vmem:[%s3 + $0x8] sm:$0xf]
  %v110 = vld [vmem:[%s3 + $0xc] sm:$0xf]
  %v111 = vld [vmem:[%s3 + $0x10] sm:$0xf]
  %v112 = vld [vmem:[%s3 + $0x14] sm:$0xf]
  %v113 = vld [vmem:[%s3 + $0x18] sm:$0xf]
  %v114 = vld [vmem:[%s3 + $0x1c] sm:$0xf]
  %v115 = vld [vmem:[%s3 + $0x20] sm:$0xf]
  %v116 = vld [vmem:[%s3 + $0x24] sm:$0xf]
  %v117 = vld [vmem:[%s3 + $0x28] sm:$0xf]
  %v118 = vld [vmem:[%s3 + $0x2c] sm:$0xf]
  %v119 = vld [vmem:[%s3 + $0x30] sm:$0xf]
  %v120 = vld [vmem:[%s3 + $0x34] sm:$0xf]
  %v121 = vld [vmem:[%s3 + $0x38] sm:$0xf]
  %v122 = vld [vmem:[%s3 + $0x3c] sm:$0xf]
  %v139 = vunpack.c.l.b16 %v107
  %v140 = vunpack.c.l.b16 %v108
  %v141 = vunpack.c.l.b16 %v109
  %v142 = vunpack.c.l.b16 %v110
  %v143 = vunpack.c.l.b16 %v111
  %v144 = vunpack.c.l.b16 %v112
  %v145 = vunpack.c.l.b16 %v113
  %v146 = vunpack.c.l.b16 %v114
  %v147 = vunpack.c.l.b16 %v115
  %v148 = vunpack.c.l.b16 %v116
  %v149 = vunpack.c.l.b16 %v117
  %v150 = vunpack.c.l.b16 %v118
  %v151 = vunpack.c.l.b16 %v119
  %v152 = vunpack.c.l.b16 %v120
  %v153 = vunpack.c.l.b16 %v121
  %v154 = vunpack.c.l.b16 %v122
  %v155 = vpack.c.b16 %v140, %v139
  %v156 = vpack.c.b16 %v142, %v141
  %v157 = vpack.c.b16 %v144, %v143
  %v158 = vpack.c.b16 %v146, %v145
  %v159 = vpack.c.b16 %v148, %v147
  %v160 = vpack.c.b16 %v150, %v149
  %v161 = vpack.c.b16 %v152, %v151
  %v162 = vpack.c.b16 %v154, %v153
  %171 = vmatprep.subr.bf16.mxu0 0
  %172 = vmatpush1.bf16.msra.mxu0 %v162
  %173 = vmatprep.subr.bf16.mxu0 0
  %174 = vmatpush1.bf16.msra.mxu0 %v161
  %175 = vmatprep.subr.bf16.mxu0 0
  %176 = vmatpush1.bf16.msra.mxu0 %v160
  %177 = vmatprep.subr.bf16.mxu0 0
  %178 = vmatpush1.bf16.msra.mxu0 %v159
  %179 = vmatprep.subr.bf16.mxu0 0
  %180 = vmatpush1.bf16.msra.mxu0 %v158
  %181 = vmatprep.subr.bf16.mxu0 0
  %182 = vmatpush1.bf16.msra.mxu0 %v157
  %183 = vmatprep.subr.bf16.mxu0 0
  %184 = vmatpush1.bf16.msra.mxu0 %v156
  %185 = vmatprep.subr.bf16.mxu0 0
  %186 = vmatpush1.bf16.msra.mxu0 %v155
  %187 = vmatprep.subr.bf16.mxu0 0
  %188 = vmatpush2.bf16.msra.mxu0 0
  %189 = vmatprep.subr.bf16.mxu0 0
  %190 = vmatpush2.bf16.msra.mxu0 0
  %191 = vmatprep.subr.bf16.mxu0 0
  %192 = vmatpush2.bf16.msra.mxu0 0
  %193 = vmatprep.subr.bf16.mxu0 0
  %194 = vmatpush2.bf16.msra.mxu0 0
  %195 = vmatprep.subr.bf16.mxu0 0
  %196 = vmatpush2.bf16.msra.mxu0 0
  %197 = vmatprep.subr.bf16.mxu0 0
  %198 = vmatpush2.bf16.msra.mxu0 0
  %199 = vmatprep.subr.bf16.mxu0 0
  %200 = vmatpush2.bf16.msra.mxu0 0
  %201 = vmatprep.subr.bf16.mxu0 0
  %202 = vmatpush2.bf16.msra.mxu0 0
  %203 = vmatprep.mubr.bf16.mxu0 0
  %204 = vmatmul.mubr.bf16.gmra.mxu0 %v99
  %v205 = vpop.f32.mrf.mxu0
  %v206 = vadd.f32 0.0, %v205
  %v207 = vpop.f32.mrf.mxu0
  %v208 = vpop.f32.mrf.mxu0
  %v209 = vadd.f32 0.0, %v208
  %v210 = vpop.f32.mrf.mxu0
  %211 = vmatprep.mubr.bf16.mxu0 0
  %212 = vmatmul.mubr.bf16.gmra.mxu0 %v100
  %v213 = vpop.f32.mrf.mxu0
  %v214 = vadd.f32 0.0, %v213
  %v215 = vpop.f32.mrf.mxu0
  %v216 = vpop.f32.mrf.mxu0
  %v217 = vadd.f32 0.0, %v216
  %v218 = vpop.f32.mrf.mxu0
  %219 = vmatprep.mubr.bf16.mxu0 0
  %220 = vmatmul.mubr.bf16.gmra.mxu0 %v101
  %v221 = vpop.f32.mrf.mxu0
  %v222 = vadd.f32 0.0, %v221
  %v223 = vpop.f32.mrf.mxu0
  %v224 = vpop.f32.mrf.mxu0
  %v225 = vadd.f32 0.0, %v224
  %v226 = vpop.f32.mrf.mxu0
  %227 = vmatprep.mubr.bf16.mxu0 0
  %228 = vmatmul.mubr.bf16.gmra.mxu0 %v102
  %v229 = vpop.f32.mrf.mxu0
  %v230 = vadd.f32 0.0, %v229
  %v231 = vpop.f32.mrf.mxu0
  %v232 = vpop.f32.mrf.mxu0
  %v233 = vadd.f32 0.0, %v232
  %v234 = vpop.f32.mrf.mxu0
  %235 = vmatprep.mubr.bf16.mxu0 0
  %236 = vmatmul.mubr.bf16.gmra.mxu0 %v103
  %v237 = vpop.f32.mrf.mxu0
  %v238 = vadd.f32 0.0, %v237
  %v239 = vpop.f32.mrf.mxu0
  %v240 = vpop.f32.mrf.mxu0
  %v241 = vadd.f32 0.0, %v240
  %v242 = vpop.f32.mrf.mxu0
  %243 = vmatprep.mubr.bf16.mxu0 0
  %244 = vmatmul.mubr.bf16.gmra.mxu0 %v104
  %v245 = vpop.f32.mrf.mxu0
  %v246 = vadd.f32 0.0, %v245
  %v247 = vpop.f32.mrf.mxu0
  %v248 = vpop.f32.mrf.mxu0
  %v249 = vadd.f32 0.0, %v248
  %v250 = vpop.f32.mrf.mxu0
  %251 = vmatprep.mubr.bf16.mxu0 0
  %252 = vmatmul.mubr.bf16.gmra.mxu0 %v105
  %v253 = vpop.f32.mrf.mxu0
  %v254 = vadd.f32 0.0, %v253
  %v255 = vpop.f32.mrf.mxu0
  %v256 = vpop.f32.mrf.mxu0
  %v257 = vadd.f32 0.0, %v256
  %v258 = vpop.f32.mrf.mxu0
  %259 = vmatprep.mubr.bf16.mxu0 0
  %260 = vmatmul.mubr.bf16.gmra.mxu0 %v106
  %v261 = vpop.f32.mrf.mxu0
  %v262 = vadd.f32 0.0, %v261
  %v263 = vpop.f32.mrf.mxu0
  %v264 = vpop.f32.mrf.mxu0
  %v265 = vadd.f32 0.0, %v264
  %v266 = vpop.f32.mrf.mxu0
  %267 = vdwg.mxu0
  %268 = vst [vmem:[%s4] sm:$0xff] %v206
  %269 = vst [vmem:[%s4 + $0x8] sm:$0xff] %v209
  %270 = vst [vmem:[%s4 + $0x10] sm:$0xff] %v214
  %271 = vst [vmem:[%s4 + $0x18] sm:$0xff] %v217
  %272 = vst [vmem:[%s4 + $0x20] sm:$0xff] %v222
  %273 = vst [vmem:[%s4 + $0x28] sm:$0xff] %v225
  %274 = vst [vmem:[%s4 + $0x30] sm:$0xff] %v230
  %275 = vst [vmem:[%s4 + $0x38] sm:$0xff] %v233
  %276 = vst [vmem:[%s4 + $0x40] sm:$0xff] %v238
  %277 = vst [vmem:[%s4 + $0x48] sm:$0xff] %v241
  %278 = vst [vmem:[%s4 + $0x50] sm:$0xff] %v246
  %279 = vst [vmem:[%s4 + $0x58] sm:$0xff] %v249
  %280 = vst [vmem:[%s4 + $0x60] sm:$0xff] %v254
  %281 = vst [vmem:[%s4 + $0x68] sm:$0xff] %v257
  %282 = vst [vmem:[%s4 + $0x70] sm:$0xff] %v262
  %283 = vst [vmem:[%s4 + $0x78] sm:$0xff] %v265
  %v284 = vadd.f32 %v206, %v209
  %v285 = vadd.f32 %v284, %v214
  %v286 = vadd.f32 %v285, %v217
  %v287 = vadd.f32 %v286, %v222
  %v288 = vadd.f32 %v287, %v225
  %v289 = vadd.f32 %v288, %v230
  %v290 = vadd.f32 %v289, %v233
  %v291 = vadd.f32 %v290, %v238
  %v292 = vadd.f32 %v291, %v241
  %v293 = vadd.f32 %v292, %v246
  %v294 = vadd.f32 %v293, %v249
  %v295 = vadd.f32 %v294, %v254
  %v296 = vadd.f32 %v295, %v257
  %v297 = vadd.f32 %v296, %v262
  %v298 = vadd.f32 %v297, %v265
  %v299 = vrot.slane %v298, 4
  %v300 = vadd.f32 %v298, %v299
  %v301 = vrot.slane %v300, 2
  %v302 = vadd.f32 %v300, %v301
  %v303 = vrot.slane %v302, 1
  %v304 = vadd.f32 %v302, %v303
  %305 = vst [vmem:[%s5] sm:$0x1] %v304
  %v306 = vmul.f32 %v206, %v206
  %v307 = vmul.f32 %v209, %v209
  %v308 = vmul.f32 %v214, %v214
  %v309 = vmul.f32 %v217, %v217
  %v310 = vmul.f32 %v222, %v222
  %v311 = vmul.f32 %v225, %v225
  %v312 = vmul.f32 %v230, %v230
  %v313 = vmul.f32 %v233, %v233
  %v314 = vmul.f32 %v238, %v238
  %v315 = vmul.f32 %v241, %v241
  %v316 = vmul.f32 %v246, %v246
  %v317 = vmul.f32 %v249, %v249
  %v318 = vmul.f32 %v254, %v254
  %v319 = vmul.f32 %v257, %v257
  %v320 = vmul.f32 %v262, %v262
  %v321 = vmul.f32 %v265, %v265
  %v322 = vadd.f32 %v306, %v307
  %v323 = vadd.f32 %v322, %v308
  %v324 = vadd.f32 %v323, %v309
  %v325 = vadd.f32 %v324, %v310
  %v326 = vadd.f32 %v325, %v311
  %v327 = vadd.f32 %v326, %v312
  %v328 = vadd.f32 %v327, %v313
  %v329 = vadd.f32 %v328, %v314
  %v330 = vadd.f32 %v329, %v315
  %v331 = vadd.f32 %v330, %v316
  %v332 = vadd.f32 %v331, %v317
  %v333 = vadd.f32 %v332, %v318
  %v334 = vadd.f32 %v333, %v319
  %v335 = vadd.f32 %v334, %v320
  %v336 = vadd.f32 %v335, %v321
  %v337 = vrot.slane %v336, 4
  %v338 = vadd.f32 %v336, %v337
  %v339 = vrot.slane %v338, 2
  %v340 = vadd.f32 %v338, %v339
  %v341 = vrot.slane %v340, 1
  %v342 = vadd.f32 %v340, %v341
  %343 = vst [vmem:[%s6] sm:$0x1] %v342
  // Predicated region
  $region18: #{bottleneck_forward.10} parent=0 // pred_check
    _
  $region19: #{bottleneck_forward.10} parent=0 // pred_check_branch
    %345 = sbr.rel (0) target = $region21
  $region20: #{bottleneck_forward.10} parent=0 // pred_region
    _
  $region21: #{bottleneck_forward.10} parent=0 // pred_fallthru
    _
  // Predicated region
  $region22: #{bottleneck_forward.10} parent=0 // pred_check
    _
  $region23: #{bottleneck_forward.10} parent=0 // pred_check_branch
    %347 = sbr.rel (0) target = $region25
  $region24: #{bottleneck_forward.10} parent=0 // pred_region
    _
  $region25: #{bottleneck_forward.10} parent=0 // pred_fallthru
    _
  // Predicated region
  $region26: #{bottleneck_forward.10} parent=0 // pred_check
    _
  $region27: #{bottleneck_forward.10} parent=0 // pred_check_branch
    %349 = sbr.rel (0) target = $region29
  $region28: #{bottleneck_forward.10} parent=0 // pred_region
    _
  $region29: #{bottleneck_forward.10} parent=0 // pred_fallthru
    _
  // Predicated region
  $region30: #{bottleneck_forward.10} parent=0 // pred_check
    _
  $region31: #{bottleneck_forward.10} parent=0 // pred_check_branch
    %351 = sbr.rel (0) target = $region33
  $region32: #{bottleneck_forward.10} parent=0 // pred_region
    _
  $region33: #{bottleneck_forward.10} parent=0 // pred_fallthru
    _
  // Predicated region
  $region34: #{bottleneck_forward.10} parent=0 // pred_check
    _
  $region35: #{bottleneck_forward.10} parent=0 // pred_check_branch
    %353 = sbr.rel (0) target = $region37
  $region36: #{bottleneck_forward.10} parent=0 // pred_region
    _
  $region37: #{bottleneck_forward.10} parent=0 // pred_fallthru
    _
  // Predicated region
  $region38: #{bottleneck_forward.10} parent=0 // pred_check
    _
  $region39: #{bottleneck_forward.10} parent=0 // pred_check_branch
    %355 = sbr.rel (0) target = $region41
  $region40: #{bottleneck_forward.10} parent=0 // pred_region
    _
  $region41: #{bottleneck_forward.10} parent=0 // pred_fallthru
    _

// kernel: bottleneck_forward.11
$region0: #{bottleneck_forward.11}
  #allocation0 [shape = 'u32[]', space=smem, size = 0x4, offset = 0x4, fixed_abs, tag = 'smem constant byte address 0x4 - core index']
  #allocation1 [shape = 'u32[144,128]{1,0:T(1,128)}', space=vmem, size = 0x12000, scoped, tag = 'internal scratch']
  %s0 = inlined_call_operand.vmem [shape: f32[128,128], index: 0, kind: input, shape index: {}]
  %s1 = inlined_call_operand.vmem [shape: f32[1,128], index: 1, kind: input, shape index: {}]
  %s2 = inlined_call_operand.vmem [shape: f32[1,128], index: 2, kind: input, shape index: {}]
  %s3 = inlined_call_operand.vmem [shape: f32[128,128], index: 3, kind: input, shape index: {}]
  %s4 = inlined_call_operand.vmem [shape: f32[1,128], index: 4, kind: input, shape index: {}]
  %s5 = inlined_call_operand.vmem [shape: f32[1,128], index: 5, kind: input, shape index: {}]
  %s6 = inlined_call_operand.hbm [shape: f32[128,128], index: 6, kind: output, shape index: {}]
  %s7 = sld [smem:[#allocation0]]
  $region34: #{bottleneck_forward.11} parent=0
    _
  %s9 = ssub.s32 1, %s7
  %s10 = scalar_select 0, %s9, %s7
  $region1: #{bottleneck_forward.11} parent=0
    #allocation2 [shape = 'u8[65536]{0}', space=vmem, size = 0x10000, scoped, tag = 'output window, operand 0, single buffered']
    #allocation3 [shape = 's32[1]{0}', space=sflag, size = 0x4, scoped, tag = 'scoped memory for bottleneck_forward.11']
    %11 = vsyncpa [#allocation3], 0
    // Predicated region
    $region2: #{bottleneck_forward.11} parent=1 // pred_check
      _
    $region3: #{bottleneck_forward.11} parent=1 // pred_check_branch
      %13 = sbr.rel (0) target = $region5
    $region4: #{bottleneck_forward.11} parent=1 // pred_region
      _
    $region5: #{bottleneck_forward.11} parent=1 // pred_fallthru
      _
    // Predicated region
    $region6: #{bottleneck_forward.11} parent=1 // pred_check
      _
    $region7: #{bottleneck_forward.11} parent=1 // pred_check_branch
      %15 = sbr.rel (0) target = $region9
    $region8: #{bottleneck_forward.11} parent=1 // pred_region
      _
    $region9: #{bottleneck_forward.11} parent=1 // pred_fallthru
      _
    // Predicated region
    $region10: #{bottleneck_forward.11} parent=1 // pred_check
      _
    $region11: #{bottleneck_forward.11} parent=1 // pred_check_branch
      %17 = sbr.rel (0) target = $region13
    $region12: #{bottleneck_forward.11} parent=1 // pred_region
      _
    $region13: #{bottleneck_forward.11} parent=1 // pred_fallthru
      _
    // Predicated region
    $region14: #{bottleneck_forward.11} parent=1 // pred_check
      _
    $region15: #{bottleneck_forward.11} parent=1 // pred_check_branch
      %19 = sbr.rel (0) target = $region17
    $region16: #{bottleneck_forward.11} parent=1 // pred_region
      _
    $region17: #{bottleneck_forward.11} parent=1 // pred_fallthru
      _
    // Predicated region
    $region18: #{bottleneck_forward.11} parent=1 // pred_check
      _
    $region19: #{bottleneck_forward.11} parent=1 // pred_check_branch
      %21 = sbr.rel (0) target = $region21
    $region20: #{bottleneck_forward.11} parent=1 // pred_region
      _
    $region21: #{bottleneck_forward.11} parent=1 // pred_fallthru
      _
    // Predicated region
    $region22: #{bottleneck_forward.11} parent=1 // pred_check
      _
    $region23: #{bottleneck_forward.11} parent=1 // pred_check_branch
      %23 = sbr.rel (0) target = $region25
    $region24: #{bottleneck_forward.11} parent=1 // pred_region
      _
    $region25: #{bottleneck_forward.11} parent=1 // pred_fallthru
      _
    %v24 = vld [vmem:[%s3] sm:$0xff]
    %v25 = vld [vmem:[%s3 + $0x8] sm:$0xff]
    %v26 = vld [vmem:[%s3 + $0x10] sm:$0xff]
    %v27 = vld [vmem:[%s3 + $0x18] sm:$0xff]
    %v28 = vld [vmem:[%s3 + $0x20] sm:$0xff]
    %v29 = vld [vmem:[%s3 + $0x28] sm:$0xff]
    %v30 = vld [vmem:[%s3 + $0x30] sm:$0xff]
    %v31 = vld [vmem:[%s3 + $0x38] sm:$0xff]
    %v32 = vld [vmem:[%s3 + $0x40] sm:$0xff]
    %v33 = vld [vmem:[%s3 + $0x48] sm:$0xff]
    %v34 = vld [vmem:[%s3 + $0x50] sm:$0xff]
    %v35 = vld [vmem:[%s3 + $0x58] sm:$0xff]
    %v36 = vld [vmem:[%s3 + $0x60] sm:$0xff]
    %v37 = vld [vmem:[%s3 + $0x68] sm:$0xff]
    %v38 = vld [vmem:[%s3 + $0x70] sm:$0xff]
    %v39 = vld [vmem:[%s3 + $0x78] sm:$0xff]
    %v40 = vld [vmem:[%s4] sm:$0x1]
    %v42 = vlaneseq
    %v43 = vshrl.u32 %v42, 7
    %v44 = vsub.s32 0, %v43
    %v45 = vrot.slane %v40, %v44
    %v47 = vmul.f32 %v24, %v45
    %v48 = vmul.f32 %v25, %v45
    %v49 = vmul.f32 %v26, %v45
    %v50 = vmul.f32 %v27, %v45
    %v51 = vmul.f32 %v28, %v45
    %v52 = vmul.f32 %v29, %v45
    %v53 = vmul.f32 %v30, %v45
    %v54 = vmul.f32 %v31, %v45
    %v55 = vmul.f32 %v32, %v45
    %v56 = vmul.f32 %v33, %v45
    %v57 = vmul.f32 %v34, %v45
    %v58 = vmul.f32 %v35, %v45
    %v59 = vmul.f32 %v36, %v45
    %v60 = vmul.f32 %v37, %v45
    %v61 = vmul.f32 %v38, %v45
    %v62 = vmul.f32 %v39, %v45
    %v63 = vld [vmem:[%s5] sm:$0x1]
    %v65 = vlaneseq
    %v66 = vshrl.u32 %v65, 7
    %v67 = vsub.s32 0, %v66
    %v68 = vrot.slane %v63, %v67
    %v70 = vadd.f32 %v47, %v68
    %v71 = vadd.f32 %v48, %v68
    %v72 = vadd.f32 %v49, %v68
    %v73 = vadd.f32 %v50, %v68
    %v74 = vadd.f32 %v51, %v68
    %v75 = vadd.f32 %v52, %v68
    %v76 = vadd.f32 %v53, %v68
    %v77 = vadd.f32 %v54, %v68
    %v78 = vadd.f32 %v55, %v68
    %v79 = vadd.f32 %v56, %v68
    %v80 = vadd.f32 %v57, %v68
    %v81 = vadd.f32 %v58, %v68
    %v82 = vadd.f32 %v59, %v68
    %v83 = vadd.f32 %v60, %v68
    %v84 = vadd.f32 %v61, %v68
    %v85 = vadd.f32 %v62, %v68
    %v86 = vld [vmem:[%s0] sm:$0xff]
    %v87 = vld [vmem:[%s0 + $0x8] sm:$0xff]
    %v88 = vld [vmem:[%s0 + $0x10] sm:$0xff]
    %v89 = vld [vmem:[%s0 + $0x18] sm:$0xff]
    %v90 = vld [vmem:[%s0 + $0x20] sm:$0xff]
    %v91 = vld [vmem:[%s0 + $0x28] sm:$0xff]
    %v92 = vld [vmem:[%s0 + $0x30] sm:$0xff]
    %v93 = vld [vmem:[%s0 + $0x38] sm:$0xff]
    %v94 = vld [vmem:[%s0 + $0x40] sm:$0xff]
    %v95 = vld [vmem:[%s0 + $0x48] sm:$0xff]
    %v96 = vld [vmem:[%s0 + $0x50] sm:$0xff]
    %v97 = vld [vmem:[%s0 + $0x58] sm:$0xff]
    %v98 = vld [vmem:[%s0 + $0x60] sm:$0xff]
    %v99 = vld [vmem:[%s0 + $0x68] sm:$0xff]
    %v100 = vld [vmem:[%s0 + $0x70] sm:$0xff]
    %v101 = vld [vmem:[%s0 + $0x78] sm:$0xff]
    %v102 = vld [vmem:[%s1] sm:$0x1]
    %v104 = vlaneseq
    %v105 = vshrl.u32 %v104, 7
    %v106 = vsub.s32 0, %v105
    %v107 = vrot.slane %v102, %v106
    %v109 = vmul.f32 %v86, %v107
    %v110 = vmul.f32 %v87, %v107
    %v111 = vmul.f32 %v88, %v107
    %v112 = vmul.f32 %v89, %v107
    %v113 = vmul.f32 %v90, %v107
    %v114 = vmul.f32 %v91, %v107
    %v115 = vmul.f32 %v92, %v107
    %v116 = vmul.f32 %v93, %v107
    %v117 = vmul.f32 %v94, %v107
    %v118 = vmul.f32 %v95, %v107
    %v119 = vmul.f32 %v96, %v107
    %v120 = vmul.f32 %v97, %v107
    %v121 = vmul.f32 %v98, %v107
    %v122 = vmul.f32 %v99, %v107
    %v123 = vmul.f32 %v100, %v107
    %v124 = vmul.f32 %v101, %v107
    %v125 = vld [vmem:[%s2] sm:$0x1]
    %v127 = vlaneseq
    %v128 = vshrl.u32 %v127, 7
    %v129 = vsub.s32 0, %v128
    %v130 = vrot.slane %v125, %v129
    %v132 = vadd.f32 %v109, %v130
    %v133 = vadd.f32 %v110, %v130
    %v134 = vadd.f32 %v111, %v130
    %v135 = vadd.f32 %v112, %v130
    %v136 = vadd.f32 %v113, %v130
    %v137 = vadd.f32 %v114, %v130
    %v138 = vadd.f32 %v115, %v130
    %v139 = vadd.f32 %v116, %v130
    %v140 = vadd.f32 %v117, %v130
    %v141 = vadd.f32 %v118, %v130
    %v142 = vadd.f32 %v119, %v130
    %v143 = vadd.f32 %v120, %v130
    %v144 = vadd.f32 %v121, %v130
    %v145 = vadd.f32 %v122, %v130
    %v146 = vadd.f32 %v123, %v130
    %v147 = vadd.f32 %v124, %v130
    %v148 = vadd.f32 %v132, %v70
    %v149 = vadd.f32 %v133, %v71
    %v150 = vadd.f32 %v134, %v72
    %v151 = vadd.f32 %v135, %v73
    %v152 = vadd.f32 %v136, %v74
    %v153 = vadd.f32 %v137, %v75
    %v154 = vadd.f32 %v138, %v76
    %v155 = vadd.f32 %v139, %v77
    %v156 = vadd.f32 %v140, %v78
    %v157 = vadd.f32 %v141, %v79
    %v158 = vadd.f32 %v142, %v80
    %v159 = vadd.f32 %v143, %v81
    %v160 = vadd.f32 %v144, %v82
    %v161 = vadd.f32 %v145, %v83
    %v162 = vadd.f32 %v146, %v84
    %v163 = vadd.f32 %v147, %v85
    %v164 = vmax.f32 %v148, 0.0
    %v165 = vmax.f32 %v149, 0.0
    %v166 = vmax.f32 %v150, 0.0
    %v167 = vmax.f32 %v151, 0.0
    %v168 = vmax.f32 %v152, 0.0
    %v169 = vmax.f32 %v153, 0.0
    %v170 = vmax.f32 %v154, 0.0
    %v171 = vmax.f32 %v155, 0.0
    %v172 = vmax.f32 %v156, 0.0
    %v173 = vmax.f32 %v157, 0.0
    %v174 = vmax.f32 %v158, 0.0
    %v175 = vmax.f32 %v159, 0.0
    %v176 = vmax.f32 %v160, 0.0
    %v177 = vmax.f32 %v161, 0.0
    %v178 = vmax.f32 %v162, 0.0
    %v179 = vmax.f32 %v163, 0.0
    %180 = vst [vmem:[#allocation2] sm:$0xff] %v164
    %181 = vst [vmem:[#allocation2 + $0x8] sm:$0xff] %v165
    %182 = vst [vmem:[#allocation2 + $0x10] sm:$0xff] %v166
    %183 = vst [vmem:[#allocation2 + $0x18] sm:$0xff] %v167
    %184 = vst [vmem:[#allocation2 + $0x20] sm:$0xff] %v168
    %185 = vst [vmem:[#allocation2 + $0x28] sm:$0xff] %v169
    %186 = vst [vmem:[#allocation2 + $0x30] sm:$0xff] %v170
    %187 = vst [vmem:[#allocation2 + $0x38] sm:$0xff] %v171
    %188 = vst [vmem:[#allocation2 + $0x40] sm:$0xff] %v172
    %189 = vst [vmem:[#allocation2 + $0x48] sm:$0xff] %v173
    %190 = vst [vmem:[#allocation2 + $0x50] sm:$0xff] %v174
    %191 = vst [vmem:[#allocation2 + $0x58] sm:$0xff] %v175
    %192 = vst [vmem:[#allocation2 + $0x60] sm:$0xff] %v176
    %193 = vst [vmem:[#allocation2 + $0x68] sm:$0xff] %v177
    %194 = vst [vmem:[#allocation2 + $0x70] sm:$0xff] %v178
    %195 = vst [vmem:[#allocation2 + $0x78] sm:$0xff] %v179
    // Predicated region
    $region26: #{bottleneck_forward.11} parent=1 // pred_check
      _
    $region27: #{bottleneck_forward.11} parent=1 // pred_check_branch
      %197 = sbr.rel (0) target = $region29
    $region28: #{bottleneck_forward.11} parent=1 // pred_region
      %s199 = ssub.s32 2048, 2048
      %200 = vsyncadd [#allocation3], %s199
      %s201 = sshll.u32 [#allocation2], 4
      %s202 = int_to_ptr.vmem [resolvable:$true] %s201
      %207 = dma.vmem_to_hbm [thread:$0]  %s202, 2048, %s6, [#allocation3], 128, 128, 8
    $region29: #{bottleneck_forward.11} parent=1 // pred_fallthru
      _
    // Predicated region
    $region30: #{bottleneck_forward.11} parent=1 // pred_check
      _
    $region31: #{bottleneck_forward.11} parent=1 // pred_check_branch
      %209 = sbr.rel (0) target = $region33
    $region32: #{bottleneck_forward.11} parent=1 // pred_region
      %210 = dma.done [#allocation3], 2048
    $region33: #{bottleneck_forward.11} parent=1 // pred_fallthru
      _
    %211 = vsyncpa [#allocation3], 1

// kernel: bottleneck_forward.9
$region0: #{bottleneck_forward.9}
  #allocation0 [shape = 'u32[]', space=smem, size = 0x4, offset = 0x4, fixed_abs, tag = 'smem constant byte address 0x4 - core index']
  #allocation1 [shape = 'u32[144,128]{1,0:T(1,128)}', space=vmem, size = 0x12000, scoped, tag = 'internal scratch']
  %s0 = inlined_call_operand.vmem [shape: bf16[128,128], index: 0, kind: input, shape index: {}]
  %s1 = inlined_call_operand.vmem [shape: bf16[128,128], index: 1, kind: input, shape index: {}]
  %s2 = inlined_call_operand.vmem [shape: f32[128,128], index: 2, kind: output, shape index: {0}]
  %s3 = inlined_call_operand.vmem [shape: f32[1,128], index: 3, kind: output, shape index: {1}]
  %s4 = inlined_call_operand.vmem [shape: f32[1,128], index: 4, kind: output, shape index: {2}]
  %5 = xla_tuple %s2, %s3, %s4
  %s6 = sld [smem:[#allocation0]]
  $region34: #{bottleneck_forward.9} parent=0
    _
  %s8 = ssub.s32 1, %s6
  %s9 = scalar_select 0, %s8, %s6
  // Predicated region
  $region2: #{bottleneck_forward.9} parent=0 // pred_check
    _
  $region3: #{bottleneck_forward.9} parent=0 // pred_check_branch
    %11 = sbr.rel (0) target = $region5
  $region4: #{bottleneck_forward.9} parent=0 // pred_region
    _
  $region5: #{bottleneck_forward.9} parent=0 // pred_fallthru
    _
  // Predicated region
  $region6: #{bottleneck_forward.9} parent=0 // pred_check
    _
  $region7: #{bottleneck_forward.9} parent=0 // pred_check_branch
    %13 = sbr.rel (0) target = $region9
  $region8: #{bottleneck_forward.9} parent=0 // pred_region
    _
  $region9: #{bottleneck_forward.9} parent=0 // pred_fallthru
    _
  %v15 = vld [vmem:[%s0] sm:$0xf]
  %v16 = vld [vmem:[%s0 + $0x4] sm:$0xf]
  %v17 = vld [vmem:[%s0 + $0x8] sm:$0xf]
  %v18 = vld [vmem:[%s0 + $0xc] sm:$0xf]
  %v19 = vld [vmem:[%s0 + $0x10] sm:$0xf]
  %v20 = vld [vmem:[%s0 + $0x14] sm:$0xf]
  %v21 = vld [vmem:[%s0 + $0x18] sm:$0xf]
  %v22 = vld [vmem:[%s0 + $0x1c] sm:$0xf]
  %v23 = vld [vmem:[%s0 + $0x20] sm:$0xf]
  %v24 = vld [vmem:[%s0 + $0x24] sm:$0xf]
  %v25 = vld [vmem:[%s0 + $0x28] sm:$0xf]
  %v26 = vld [vmem:[%s0 + $0x2c] sm:$0xf]
  %v27 = vld [vmem:[%s0 + $0x30] sm:$0xf]
  %v28 = vld [vmem:[%s0 + $0x34] sm:$0xf]
  %v29 = vld [vmem:[%s0 + $0x38] sm:$0xf]
  %v30 = vld [vmem:[%s0 + $0x3c] sm:$0xf]
  %v31 = vld [vmem:[%s1] sm:$0xf]
  %v32 = vld [vmem:[%s1 + $0x4] sm:$0xf]
  %v33 = vld [vmem:[%s1 + $0x8] sm:$0xf]
  %v34 = vld [vmem:[%s1 + $0xc] sm:$0xf]
  %v35 = vld [vmem:[%s1 + $0x10] sm:$0xf]
  %v36 = vld [vmem:[%s1 + $0x14] sm:$0xf]
  %v37 = vld [vmem:[%s1 + $0x18] sm:$0xf]
  %v38 = vld [vmem:[%s1 + $0x1c] sm:$0xf]
  %v39 = vld [vmem:[%s1 + $0x20] sm:$0xf]
  %v40 = vld [vmem:[%s1 + $0x24] sm:$0xf]
  %v41 = vld [vmem:[%s1 + $0x28] sm:$0xf]
  %v42 = vld [vmem:[%s1 + $0x2c] sm:$0xf]
  %v43 = vld [vmem:[%s1 + $0x30] sm:$0xf]
  %v44 = vld [vmem:[%s1 + $0x34] sm:$0xf]
  %v45 = vld [vmem:[%s1 + $0x38] sm:$0xf]
  %v46 = vld [vmem:[%s1 + $0x3c] sm:$0xf]
  %v63 = vunpack.c.l.b16 %v15
  %v64 = vunpack.c.l.b16 %v16
  %v65 = vunpack.c.l.b16 %v17
  %v66 = vunpack.c.l.b16 %v18
  %v67 = vunpack.c.l.b16 %v19
  %v68 = vunpack.c.l.b16 %v20
  %v69 = vunpack.c.l.b16 %v21
  %v70 = vunpack.c.l.b16 %v22
  %v71 = vunpack.c.l.b16 %v23
  %v72 = vunpack.c.l.b16 %v24
  %v73 = vunpack.c.l.b16 %v25
  %v74 = vunpack.c.l.b16 %v26
  %v75 = vunpack.c.l.b16 %v27
  %v76 = vunpack.c.l.b16 %v28
  %v77 = vunpack.c.l.b16 %v29
  %v78 = vunpack.c.l.b16 %v30
  %v79 = vpack.c.b16 %v64, %v63
  %v80 = vpack.c.b16 %v66, %v65
  %v81 = vpack.c.b16 %v68, %v67
  %v82 = vpack.c.b16 %v70, %v69
  %v83 = vpack.c.b16 %v72, %v71
  %v84 = vpack.c.b16 %v74, %v73
  %v85 = vpack.c.b16 %v76, %v75
  %v86 = vpack.c.b16 %v78, %v77
  %v111 = vunpack.c.l.b16 %v31
  %v112 = vunpack.c.l.b16 %v32
  %v113 = vunpack.c.l.b16 %v33
  %v114 = vunpack.c.l.b16 %v34
  %v115 = vunpack.c.l.b16 %v35
  %v116 = vunpack.c.l.b16 %v36
  %v117 = vunpack.c.l.b16 %v37
  %v118 = vunpack.c.l.b16 %v38
  %v119 = vunpack.c.l.b16 %v39
  %v120 = vunpack.c.l.b16 %v40
  %v121 = vunpack.c.l.b16 %v41
  %v122 = vunpack.c.l.b16 %v42
  %v123 = vunpack.c.l.b16 %v43
  %v124 = vunpack.c.l.b16 %v44
  %v125 = vunpack.c.l.b16 %v45
  %v126 = vunpack.c.l.b16 %v46
  %v127 = vpack.c.b16 %v112, %v111
  %v128 = vpack.c.b16 %v114, %v113
  %v129 = vpack.c.b16 %v116, %v115
  %v130 = vpack.c.b16 %v118, %v117
  %v131 = vpack.c.b16 %v120, %v119
  %v132 = vpack.c.b16 %v122, %v121
  %v133 = vpack.c.b16 %v124, %v123
  %v134 = vpack.c.b16 %v126, %v125
  %143 = vmatprep.subr.bf16.mxu0 0
  %144 = vmatpush1.bf16.msra.mxu0 %v134
  %145 = vmatprep.subr.bf16.mxu0 0
  %146 = vmatpush1.bf16.msra.mxu0 %v133
  %147 = vmatprep.subr.bf16.mxu0 0
  %148 = vmatpush1.bf16.msra.mxu0 %v132
  %149 = vmatprep.subr.bf16.mxu0 0
  %150 = vmatpush1.bf16.msra.mxu0 %v131
  %151 = vmatprep.subr.bf16.mxu0 0
  %152 = vmatpush1.bf16.msra.mxu0 %v130
  %153 = vmatprep.subr.bf16.mxu0 0
  %154 = vmatpush1.bf16.msra.mxu0 %v129
  %155 = vmatprep.subr.bf16.mxu0 0
  %156 = vmatpush1.bf16.msra.mxu0 %v128
  %157 = vmatprep.subr.bf16.mxu0 0
  %158 = vmatpush1.bf16.msra.mxu0 %v127
  %159 = vmatprep.subr.bf16.mxu0 0
  %160 = vmatpush2.bf16.msra.mxu0 0
  %161 = vmatprep.subr.bf16.mxu0 0
  %162 = vmatpush2.bf16.msra.mxu0 0
  %163 = vmatprep.subr.bf16.mxu0 0
  %164 = vmatpush2.bf16.msra.mxu0 0
  %165 = vmatprep.subr.bf16.mxu0 0
  %166 = vmatpush2.bf16.msra.mxu0 0
  %167 = vmatprep.subr.bf16.mxu0 0
  %168 = vmatpush2.bf16.msra.mxu0 0
  %169 = vmatprep.subr.bf16.mxu0 0
  %170 = vmatpush2.bf16.msra.mxu0 0
  %171 = vmatprep.subr.bf16.mxu0 0
  %172 = vmatpush2.bf16.msra.mxu0 0
  %173 = vmatprep.subr.bf16.mxu0 0
  %174 = vmatpush2.bf16.msra.mxu0 0
  %175 = vmatprep.mubr.bf16.mxu0 0
  %176 = vmatmul.mubr.bf16.gmra.mxu0 %v79
  %v177 = vpop.f32.mrf.mxu0
  %v178 = vadd.f32 0.0, %v177
  %v179 = vpop.f32.mrf.mxu0
  %v180 = vpop.f32.mrf.mxu0
  %v181 = vadd.f32 0.0, %v180
  %v182 = vpop.f32.mrf.mxu0
  %183 = vmatprep.mubr.bf16.mxu0 0
  %184 = vmatmul.mubr.bf16.gmra.mxu0 %v80
  %v185 = vpop.f32.mrf.mxu0
  %v186 = vadd.f32 0.0, %v185
  %v187 = vpop.f32.mrf.mxu0
  %v188 = vpop.f32.mrf.mxu0
  %v189 = vadd.f32 0.0, %v188
  %v190 = vpop.f32.mrf.mxu0
  %191 = vmatprep.mubr.bf16.mxu0 0
  %192 = vmatmul.mubr.bf16.gmra.mxu0 %v81
  %v193 = vpop.f32.mrf.mxu0
  %v194 = vadd.f32 0.0, %v193
  %v195 = vpop.f32.mrf.mxu0
  %v196 = vpop.f32.mrf.mxu0
  %v197 = vadd.f32 0.0, %v196
  %v198 = vpop.f32.mrf.mxu0
  %199 = vmatprep.mubr.bf16.mxu0 0
  %200 = vmatmul.mubr.bf16.gmra.mxu0 %v82
  %v201 = vpop.f32.mrf.mxu0
  %v202 = vadd.f32 0.0, %v201
  %v203 = vpop.f32.mrf.mxu0
  %v204 = vpop.f32.mrf.mxu0
  %v205 = vadd.f32 0.0, %v204
  %v206 = vpop.f32.mrf.mxu0
  %207 = vmatprep.mubr.bf16.mxu0 0
  %208 = vmatmul.mubr.bf16.gmra.mxu0 %v83
  %v209 = vpop.f32.mrf.mxu0
  %v210 = vadd.f32 0.0, %v209
  %v211 = vpop.f32.mrf.mxu0
  %v212 = vpop.f32.mrf.mxu0
  %v213 = vadd.f32 0.0, %v212
  %v214 = vpop.f32.mrf.mxu0
  %215 = vmatprep.mubr.bf16.mxu0 0
  %216 = vmatmul.mubr.bf16.gmra.mxu0 %v84
  %v217 = vpop.f32.mrf.mxu0
  %v218 = vadd.f32 0.0, %v217
  %v219 = vpop.f32.mrf.mxu0
  %v220 = vpop.f32.mrf.mxu0
  %v221 = vadd.f32 0.0, %v220
  %v222 = vpop.f32.mrf.mxu0
  %223 = vmatprep.mubr.bf16.mxu0 0
  %224 = vmatmul.mubr.bf16.gmra.mxu0 %v85
  %v225 = vpop.f32.mrf.mxu0
  %v226 = vadd.f32 0.0, %v225
  %v227 = vpop.f32.mrf.mxu0
  %v228 = vpop.f32.mrf.mxu0
  %v229 = vadd.f32 0.0, %v228
  %v230 = vpop.f32.mrf.mxu0
  %231 = vmatprep.mubr.bf16.mxu0 0
  %232 = vmatmul.mubr.bf16.gmra.mxu0 %v86
  %v233 = vpop.f32.mrf.mxu0
  %v234 = vadd.f32 0.0, %v233
  %v235 = vpop.f32.mrf.mxu0
  %v236 = vpop.f32.mrf.mxu0
  %v237 = vadd.f32 0.0, %v236
  %v238 = vpop.f32.mrf.mxu0
  %239 = vdwg.mxu0
  %240 = vst [vmem:[%s2] sm:$0xff] %v178
  %241 = vst [vmem:[%s2 + $0x8] sm:$0xff] %v181
  %242 = vst [vmem:[%s2 + $0x10] sm:$0xff] %v186
  %243 = vst [vmem:[%s2 + $0x18] sm:$0xff] %v189
  %244 = vst [vmem:[%s2 + $0x20] sm:$0xff] %v194
  %245 = vst [vmem:[%s2 + $0x28] sm:$0xff] %v197
  %246 = vst [vmem:[%s2 + $0x30] sm:$0xff] %v202
  %247 = vst [vmem:[%s2 + $0x38] sm:$0xff] %v205
  %248 = vst [vmem:[%s2 + $0x40] sm:$0xff] %v210
  %249 = vst [vmem:[%s2 + $0x48] sm:$0xff] %v213
  %250 = vst [vmem:[%s2 + $0x50] sm:$0xff] %v218
  %251 = vst [vmem:[%s2 + $0x58] sm:$0xff] %v221
  %252 = vst [vmem:[%s2 + $0x60] sm:$0xff] %v226
  %253 = vst [vmem:[%s2 + $0x68] sm:$0xff] %v229
  %254 = vst [vmem:[%s2 + $0x70] sm:$0xff] %v234
  %255 = vst [vmem:[%s2 + $0x78] sm:$0xff] %v237
  %v256 = vadd.f32 %v178, %v181
  %v257 = vadd.f32 %v256, %v186
  %v258 = vadd.f32 %v257, %v189
  %v259 = vadd.f32 %v258, %v194
  %v260 = vadd.f32 %v259, %v197
  %v261 = vadd.f32 %v260, %v202
  %v262 = vadd.f32 %v261, %v205
  %v263 = vadd.f32 %v262, %v210
  %v264 = vadd.f32 %v263, %v213
  %v265 = vadd.f32 %v264, %v218
  %v266 = vadd.f32 %v265, %v221
  %v267 = vadd.f32 %v266, %v226
  %v268 = vadd.f32 %v267, %v229
  %v269 = vadd.f32 %v268, %v234
  %v270 = vadd.f32 %v269, %v237
  %v271 = vrot.slane %v270, 4
  %v272 = vadd.f32 %v270, %v271
  %v273 = vrot.slane %v272, 2
  %v274 = vadd.f32 %v272, %v273
  %v275 = vrot.slane %v274, 1
  %v276 = vadd.f32 %v274, %v275
  %277 = vst [vmem:[%s3] sm:$0x1] %v276
  %v278 = vmul.f32 %v178, %v178
  %v279 = vmul.f32 %v181, %v181
  %v280 = vmul.f32 %v186, %v186
  %v281 = vmul.f32 %v189, %v189
  %v282 = vmul.f32 %v194, %v194
  %v283 = vmul.f32 %v197, %v197
  %v284 = vmul.f32 %v202, %v202
  %v285 = vmul.f32 %v205, %v205
  %v286 = vmul.f32 %v210, %v210
  %v287 = vmul.f32 %v213, %v213
  %v288 = vmul.f32 %v218, %v218
  %v289 = vmul.f32 %v221, %v221
  %v290 = vmul.f32 %v226, %v226
  %v291 = vmul.f32 %v229, %v229
  %v292 = vmul.f32 %v234, %v234
  %v293 = vmul.f32 %v237, %v237
  %v294 = vadd.f32 %v278, %v279
  %v295 = vadd.f32 %v294, %v280
  %v296 = vadd.f32 %v295, %v281
  %v297 = vadd.f32 %v296, %v282
  %v298 = vadd.f32 %v297, %v283
  %v299 = vadd.f32 %v298, %v284
  %v300 = vadd.f32 %v299, %v285
  %v301 = vadd.f32 %v300, %v286
  %v302 = vadd.f32 %v301, %v287
  %v303 = vadd.f32 %v302, %v288
  %v304 = vadd.f32 %v303, %v289
  %v305 = vadd.f32 %v304, %v290
  %v306 = vadd.f32 %v305, %v291
  %v307 = vadd.f32 %v306, %v292
  %v308 = vadd.f32 %v307, %v293
  %v309 = vrot.slane %v308, 4
  %v310 = vadd.f32 %v308, %v309
  %v311 = vrot.slane %v310, 2
  %v312 = vadd.f32 %v310, %v311
  %v313 = vrot.slane %v312, 1
  %v314 = vadd.f32 %v312, %v313
  %315 = vst [vmem:[%s4] sm:$0x1] %v314
  // Predicated region
  $region10: #{bottleneck_forward.9} parent=0 // pred_check
    _
  $region11: #{bottleneck_forward.9} parent=0 // pred_check_branch
    %317 = sbr.rel (0) target = $region13
  $region12: #{bottleneck_forward.9} parent=0 // pred_region
    _
  $region13: #{bottleneck_forward.9} parent=0 // pred_fallthru
    _
  // Predicated region
  $region14: #{bottleneck_forward.9} parent=0 // pred_check
    _
  $region15: #{bottleneck_forward.9} parent=0 // pred_check_branch
    %319 = sbr.rel (0) target = $region17
  $region16: #{bottleneck_forward.9} parent=0 // pred_region
    _
  $region17: #{bottleneck_forward.9} parent=0 // pred_fallthru
    _
  // Predicated region
  $region18: #{bottleneck_forward.9} parent=0 // pred_check
    _
  $region19: #{bottleneck_forward.9} parent=0 // pred_check_branch
    %321 = sbr.rel (0) target = $region21
  $region20: #{bottleneck_forward.9} parent=0 // pred_region
    _
  $region21: #{bottleneck_forward.9} parent=0 // pred_fallthru
    _
  // Predicated region
  $region22: #{bottleneck_forward.9} parent=0 // pred_check
    _
  $region23: #{bottleneck_forward.9} parent=0 // pred_check_branch
    %323 = sbr.rel (0) target = $region25
  $region24: #{bottleneck_forward.9} parent=0 // pred_region
    _
  $region25: #{bottleneck_forward.9} parent=0 // pred_fallthru
    _
  // Predicated region
  $region26: #{bottleneck_forward.9} parent=0 // pred_check
    _
  $region27: #{bottleneck_forward.9} parent=0 // pred_check_branch
    %325 = sbr.rel (0) target = $region29
  $region28: #{bottleneck_forward.9} parent=0 // pred_region
    _
  $region29: #{bottleneck_forward.9} parent=0 // pred_fallthru
    _
  // Predicated region
  $region30: #{bottleneck_forward.9} parent=0 // pred_check
    _
  $region31: #{bottleneck_forward.9} parent=0 // pred_check_branch
    %327 = sbr.rel (0) target = $region33
  $region32: #{bottleneck_forward.9} parent=0 // pred_region
    _
  $region33: #{bottleneck_forward.9} parent=0 // pred_fallthru
    _

// kernel: bottleneck_forward.8
$region0: #{bottleneck_forward.8}
  #allocation0 [shape = 'u32[]', space=smem, size = 0x4, offset = 0x4, fixed_abs, tag = 'smem constant byte address 0x4 - core index']
  #allocation1 [shape = 'u32[144,128]{1,0:T(1,128)}', space=vmem, size = 0x12000, scoped, tag = 'internal scratch']
  %s0 = inlined_call_operand.vmem [shape: bf16[128,1152], index: 0, kind: input, shape index: {}]
  %s1 = inlined_call_operand.vmem [shape: bf16[1152,128], index: 1, kind: input, shape index: {}]
  %s2 = inlined_call_operand.vmem [shape: f32[128,128], index: 2, kind: output, shape index: {0}]
  %s3 = inlined_call_operand.vmem [shape: f32[1,128], index: 3, kind: output, shape index: {1}]
  %s4 = inlined_call_operand.vmem [shape: f32[1,128], index: 4, kind: output, shape index: {2}]
  %5 = xla_tuple %s2, %s3, %s4
  %s6 = sld [smem:[#allocation0]]
  $region34: #{bottleneck_forward.8} parent=0
    _
  %s8 = ssub.s32 1, %s6
  %s9 = scalar_select 0, %s8, %s6
  // Predicated region
  $region2: #{bottleneck_forward.8} parent=0 // pred_check
    _
  $region3: #{bottleneck_forward.8} parent=0 // pred_check_branch
    %11 = sbr.rel (0) target = $region5
  $region4: #{bottleneck_forward.8} parent=0 // pred_region
    _
  $region5: #{bottleneck_forward.8} parent=0 // pred_fallthru
    _
  // Predicated region
  $region6: #{bottleneck_forward.8} parent=0 // pred_check
    _
  $region7: #{bottleneck_forward.8} parent=0 // pred_check_branch
    %13 = sbr.rel (0) target = $region9
  $region8: #{bottleneck_forward.8} parent=0 // pred_region
    _
  $region9: #{bottleneck_forward.8} parent=0 // pred_fallthru
    _
  %v15 = vld [vmem:[%s0] sm:$0xff]
  %v16 = vld [vmem:[%s0 + $0x8] sm:$0xff]
  %v17 = vld [vmem:[%s0 + $0x10] sm:$0xff]
  %v18 = vld [vmem:[%s0 + $0x18] sm:$0xff]
  %v19 = vld [vmem:[%s0 + $0x20] sm:$0xf]
  %v20 = vld [vmem:[%s0 + $0x24] sm:$0xff]
  %v21 = vld [vmem:[%s0 + $0x2c] sm:$0xff]
  %v22 = vld [vmem:[%s0 + $0x34] sm:$0xff]
  %v23 = vld [vmem:[%s0 + $0x3c] sm:$0xff]
  %v24 = vld [vmem:[%s0 + $0x44] sm:$0xf]
  %v25 = vld [vmem:[%s0 + $0x48] sm:$0xff]
  %v26 = vld [vmem:[%s0 + $0x50] sm:$0xff]
  %v27 = vld [vmem:[%s0 + $0x58] sm:$0xff]
  %v28 = vld [vmem:[%s0 + $0x60] sm:$0xff]
  %v29 = vld [vmem:[%s0 + $0x68] sm:$0xf]
  %v30 = vld [vmem:[%s0 + $0x6c] sm:$0xff]
  %v31 = vld [vmem:[%s0 + $0x74] sm:$0xff]
  %v32 = vld [vmem:[%s0 + $0x7c] sm:$0xff]
  %v33 = vld [vmem:[%s0 + $0x84] sm:$0xff]
  %v34 = vld [vmem:[%s0 + $0x8c] sm:$0xf]
  %v35 = vld [vmem:[%s0 + $0x90] sm:$0xff]
  %v36 = vld [vmem:[%s0 + $0x98] sm:$0xff]
  %v37 = vld [vmem:[%s0 + $0xa0] sm:$0xff]
  %v38 = vld [vmem:[%s0 + $0xa8] sm:$0xff]
  %v39 = vld [vmem:[%s0 + $0xb0] sm:$0xf]
  %v40 = vld [vmem:[%s0 + $0xb4] sm:$0xff]
  %v41 = vld [vmem:[%s0 + $0xbc] sm:$0xff]
  %v42 = vld [vmem:[%s0 + $0xc4] sm:$0xff]
  %v43 = vld [vmem:[%s0 + $0xcc] sm:$0xff]
  %v44 = vld [vmem:[%s0 + $0xd4] sm:$0xf]
  %v45 = vld [vmem:[%s0 + $0xd8] sm:$0xff]
  %v46 = vld [vmem:[%s0 + $0xe0] sm:$0xff]
  %v47 = vld [vmem:[%s0 + $0xe8] sm:$0xff]
  %v48 = vld [vmem:[%s0 + $0xf0] sm:$0xff]
  %v49 = vld [vmem:[%s0 + $0xf8] sm:$0xf]
  %v50 = vld [vmem:[%s0 + $0xfc] sm:$0xff]
  %v51 = vld [vmem:[%s0 + $0x104] sm:$0xff]
  %v52 = vld [vmem:[%s0 + $0x10c] sm:$0xff]
  %v53 = vld [vmem:[%s0 + $0x114] sm:$0xff]
  %v54 = vld [vmem:[%s0 + $0x11c] sm:$0xf]
  %v55 = vld [vmem:[%s0 + $0x120] sm:$0xff]
  %v56 = vld [vmem:[%s0 + $0x128] sm:$0xff]
  %v57 = vld [vmem:[%s0 + $0x130] sm:$0xff]
  %v58 = vld [vmem:[%s0 + $0x138] sm:$0xff]
  %v59 = vld [vmem:[%s0 + $0x140] sm:$0xf]
  %v60 = vld [vmem:[%s0 + $0x144] sm:$0xff]
  %v61 = vld [vmem:[%s0 + $0x14c] sm:$0xff]
  %v62 = vld [vmem:[%s0 + $0x154] sm:$0xff]
  %v63 = vld [vmem:[%s0 + $0x15c] sm:$0xff]
  %v64 = vld [vmem:[%s0 + $0x164] sm:$0xf]
  %v65 = vld [vmem:[%s0 + $0x168] sm:$0xff]
  %v66 = vld [vmem:[%s0 + $0x170] sm:$0xff]
  %v67 = vld [vmem:[%s0 + $0x178] sm:$0xff]
  %v68 = vld [vmem:[%s0 + $0x180] sm:$0xff]
  %v69 = vld [vmem:[%s0 + $0x188] sm:$0xf]
  %v70 = vld [vmem:[%s0 + $0x18c] sm:$0xff]
  %v71 = vld [vmem:[%s0 + $0x194] sm:$0xff]
  %v72 = vld [vmem:[%s0 + $0x19c] sm:$0xff]
  %v73 = vld [vmem:[%s0 + $0x1a4] sm:$0xff]
  %v74 = vld [vmem:[%s0 + $0x1ac] sm:$0xf]
  %v75 = vld [vmem:[%s0 + $0x1b0] sm:$0xff]
  %v76 = vld [vmem:[%s0 + $0x1b8] sm:$0xff]
  %v77 = vld [vmem:[%s0 + $0x1c0] sm:$0xff]
  %v78 = vld [vmem:[%s0 + $0x1c8] sm:$0xff]
  %v79 = vld [vmem:[%s0 + $0x1d0] sm:$0xf]
  %v80 = vld [vmem:[%s0 + $0x1d4] sm:$0xff]
  %v81 = vld [vmem:[%s0 + $0x1dc] sm:$0xff]
  %v82 = vld [vmem:[%s0 + $0x1e4] sm:$0xff]
  %v83 = vld [vmem:[%s0 + $0x1ec] sm:$0xff]
  %v84 = vld [vmem:[%s0 + $0x1f4] sm:$0xf]
  %v85 = vld [vmem:[%s0 + $0x1f8] sm:$0xff]
  %v86 = vld [vmem:[%s0 + $0x200] sm:$0xff]
  %v87 = vld [vmem:[%s0 + $0x208] sm:$0xff]
  %v88 = vld [vmem:[%s0 + $0x210] sm:$0xff]
  %v89 = vld [vmem:[%s0 + $0x218] sm:$0xf]
  %v90 = vld [vmem:[%s0 + $0x21c] sm:$0xff]
  %v91 = vld [vmem:[%s0 + $0x224] sm:$0xff]
  %v92 = vld [vmem:[%s0 + $0x22c] sm:$0xff]
  %v93 = vld [vmem:[%s0 + $0x234] sm:$0xff]
  %v94 = vld [vmem:[%s0 + $0x23c] sm:$0xf]
  %v95 = vld [vmem:[%s1] sm:$0xf]
  %v96 = vld [vmem:[%s1 + $0x4] sm:$0xf]
  %v97 = vld [vmem:[%s1 + $0x8] sm:$0xf]
  %v98 = vld [vmem:[%s1 + $0xc] sm:$0xf]
  %v99 = vld [vmem:[%s1 + $0x10] sm:$0xf]
  %v100 = vld [vmem:[%s1 + $0x14] sm:$0xf]
  %v101 = vld [vmem:[%s1 + $0x18] sm:$0xf]
  %v102 = vld [vmem:[%s1 + $0x1c] sm:$0xf]
  %v103 = vld [vmem:[%s1 + $0x20] sm:$0xf]
  %v104 = vld [vmem:[%s1 + $0x24] sm:$0xf]
  %v105 = vld [vmem:[%s1 + $0x28] sm:$0xf]
  %v106 = vld [vmem:[%s1 + $0x2c] sm:$0xf]
  %v107 = vld [vmem:[%s1 + $0x30] sm:$0xf]
  %v108 = vld [vmem:[%s1 + $0x34] sm:$0xf]
  %v109 = vld [vmem:[%s1 + $0x38] sm:$0xf]
  %v110 = vld [vmem:[%s1 + $0x3c] sm:$0xf]
  %v111 = vld [vmem:[%s1 + $0x40] sm:$0xf]
  %v112 = vld [vmem:[%s1 + $0x44] sm:$0xf]
  %v113 = vld [vmem:[%s1 + $0x48] sm:$0xf]
  %v114 = vld [vmem:[%s1 + $0x4c] sm:$0xf]
  %v115 = vld [vmem:[%s1 + $0x50] sm:$0xf]
  %v116 = vld [vmem:[%s1 + $0x54] sm:$0xf]
  %v117 = vld [vmem:[%s1 + $0x58] sm:$0xf]
  %v118 = vld [vmem:[%s1 + $0x5c] sm:$0xf]
  %v119 = vld [vmem:[%s1 + $0x60] sm:$0xf]
  %v120 = vld [vmem:[%s1 + $0x64] sm:$0xf]
  %v121 = vld [vmem:[%s1 + $0x68] sm:$0xf]
  %v122 = vld [vmem:[%s1 + $0x6c] sm:$0xf]
  %v123 = vld [vmem:[%s1 + $0x70] sm:$0xf]
  %v124 = vld [vmem:[%s1 + $0x74] sm:$0xf]
  %v125 = vld [vmem:[%s1 + $0x78] sm:$0xf]
  %v126 = vld [vmem:[%s1 + $0x7c] sm:$0xf]
  %v127 = vld [vmem:[%s1 + $0x80] sm:$0xf]
  %v128 = vld [vmem:[%s1 + $0x84] sm:$0xf]
  %v129 = vld [vmem:[%s1 + $0x88] sm:$0xf]
  %v130 = vld [vmem:[%s1 + $0x8c] sm:$0xf]
  %v131 = vld [vmem:[%s1 + $0x90] sm:$0xf]
  %v132 = vld [vmem:[%s1 + $0x94] sm:$0xf]
  %v133 = vld [vmem:[%s1 + $0x98] sm:$0xf]
  %v134 = vld [vmem:[%s1 + $0x9c] sm:$0xf]
  %v135 = vld [vmem:[%s1 + $0xa0] sm:$0xf]
  %v136 = vld [vmem:[%s1 + $0xa4] sm:$0xf]
  %v137 = vld [vmem:[%s1 + $0xa8] sm:$0xf]
  %v138 = vld [vmem:[%s1 + $0xac] sm:$0xf]
  %v139 = vld [vmem:[%s1 + $0xb0] sm:$0xf]
  %v140 = vld [vmem:[%s1 + $0xb4] sm:$0xf]
  %v141 = vld [vmem:[%s1 + $0xb8] sm:$0xf]
  %v142 = vld [vmem:[%s1 + $0xbc] sm:$0xf]
  %v143 = vld [vmem:[%s1 + $0xc0] sm:$0xf]
  %v144 = vld [vmem:[%s1 + $0xc4] sm:$0xf]
  %v145 = vld [vmem:[%s1 + $0xc8] sm:$0xf]
  %v146 = vld [vmem:[%s1 + $0xcc] sm:$0xf]
  %v147 = vld [vmem:[%s1 + $0xd0] sm:$0xf]
  %v148 = vld [vmem:[%s1 + $0xd4] sm:$0xf]
  %v149 = vld [vmem:[%s1 + $0xd8] sm:$0xf]
  %v150 = vld [vmem:[%s1 + $0xdc] sm:$0xf]
  %v151 = vld [vmem:[%s1 + $0xe0] sm:$0xf]
  %v152 = vld [vmem:[%s1 + $0xe4] sm:$0xf]
  %v153 = vld [vmem:[%s1 + $0xe8] sm:$0xf]
  %v154 = vld [vmem:[%s1 + $0xec] sm:$0xf]
  %v155 = vld [vmem:[%s1 + $0xf0] sm:$0xf]
  %v156 = vld [vmem:[%s1 + $0xf4] sm:$0xf]
  %v157 = vld [vmem:[%s1 + $0xf8] sm:$0xf]
  %v158 = vld [vmem:[%s1 + $0xfc] sm:$0xf]
  %v159 = vld [vmem:[%s1 + $0x100] sm:$0xf]
  %v160 = vld [vmem:[%s1 + $0x104] sm:$0xf]
  %v161 = vld [vmem:[%s1 + $0x108] sm:$0xf]
  %v162 = vld [vmem:[%s1 + $0x10c] sm:$0xf]
  %v163 = vld [vmem:[%s1 + $0x110] sm:$0xf]
  %v164 = vld [vmem:[%s1 + $0x114] sm:$0xf]
  %v165 = vld [vmem:[%s1 + $0x118] sm:$0xf]
  %v166 = vld [vmem:[%s1 + $0x11c] sm:$0xf]
  %v167 = vld [vmem:[%s1 + $0x120] sm:$0xf]
  %v168 = vld [vmem:[%s1 + $0x124] sm:$0xf]
  %v169 = vld [vmem:[%s1 + $0x128] sm:$0xf]
  %v170 = vld [vmem:[%s1 + $0x12c] sm:$0xf]
  %v171 = vld [vmem:[%s1 + $0x130] sm:$0xf]
  %v172 = vld [vmem:[%s1 + $0x134] sm:$0xf]
  %v173 = vld [vmem:[%s1 + $0x138] sm:$0xf]
  %v174 = vld [vmem:[%s1 + $0x13c] sm:$0xf]
  %v175 = vld [vmem:[%s1 + $0x140] sm:$0xf]
  %v176 = vld [vmem:[%s1 + $0x144] sm:$0xf]
  %v177 = vld [vmem:[%s1 + $0x148] sm:$0xf]
  %v178 = vld [vmem:[%s1 + $0x14c] sm:$0xf]
  %v179 = vld [vmem:[%s1 + $0x150] sm:$0xf]
  %v180 = vld [vmem:[%s1 + $0x154] sm:$0xf]
  %v181 = vld [vmem:[%s1 + $0x158] sm:$0xf]
  %v182 = vld [vmem:[%s1 + $0x15c] sm:$0xf]
  %v183 = vld [vmem:[%s1 + $0x160] sm:$0xf]
  %v184 = vld [vmem:[%s1 + $0x164] sm:$0xf]
  %v185 = vld [vmem:[%s1 + $0x168] sm:$0xf]
  %v186 = vld [vmem:[%s1 + $0x16c] sm:$0xf]
  %v187 = vld [vmem:[%s1 + $0x170] sm:$0xf]
  %v188 = vld [vmem:[%s1 + $0x174] sm:$0xf]
  %v189 = vld [vmem:[%s1 + $0x178] sm:$0xf]
  %v190 = vld [vmem:[%s1 + $0x17c] sm:$0xf]
  %v191 = vld [vmem:[%s1 + $0x180] sm:$0xf]
  %v192 = vld [vmem:[%s1 + $0x184] sm:$0xf]
  %v193 = vld [vmem:[%s1 + $0x188] sm:$0xf]
  %v194 = vld [vmem:[%s1 + $0x18c] sm:$0xf]
  %v195 = vld [vmem:[%s1 + $0x190] sm:$0xf]
  %v196 = vld [vmem:[%s1 + $0x194] sm:$0xf]
  %v197 = vld [vmem:[%s1 + $0x198] sm:$0xf]
  %v198 = vld [vmem:[%s1 + $0x19c] sm:$0xf]
  %v199 = vld [vmem:[%s1 + $0x1a0] sm:$0xf]
  %v200 = vld [vmem:[%s1 + $0x1a4] sm:$0xf]
  %v201 = vld [vmem:[%s1 + $0x1a8] sm:$0xf]
  %v202 = vld [vmem:[%s1 + $0x1ac] sm:$0xf]
  %v203 = vld [vmem:[%s1 + $0x1b0] sm:$0xf]
  %v204 = vld [vmem:[%s1 + $0x1b4] sm:$0xf]
  %v205 = vld [vmem:[%s1 + $0x1b8] sm:$0xf]
  %v206 = vld [vmem:[%s1 + $0x1bc] sm:$0xf]
  %v207 = vld [vmem:[%s1 + $0x1c0] sm:$0xf]
  %v208 = vld [vmem:[%s1 + $0x1c4] sm:$0xf]
  %v209 = vld [vmem:[%s1 + $0x1c8] sm:$0xf]
  %v210 = vld [vmem:[%s1 + $0x1cc] sm:$0xf]
  %v211 = vld [vmem:[%s1 + $0x1d0] sm:$0xf]
  %v212 = vld [vmem:[%s1 + $0x1d4] sm:$0xf]
  %v213 = vld [vmem:[%s1 + $0x1d8] sm:$0xf]
  %v214 = vld [vmem:[%s1 + $0x1dc] sm:$0xf]
  %v215 = vld [vmem:[%s1 + $0x1e0] sm:$0xf]
  %v216 = vld [vmem:[%s1 + $0x1e4] sm:$0xf]
  %v217 = vld [vmem:[%s1 + $0x1e8] sm:$0xf]
  %v218 = vld [vmem:[%s1 + $0x1ec] sm:$0xf]
  %v219 = vld [vmem:[%s1 + $0x1f0] sm:$0xf]
  %v220 = vld [vmem:[%s1 + $0x1f4] sm:$0xf]
  %v221 = vld [vmem:[%s1 + $0x1f8] sm:$0xf]
  %v222 = vld [vmem:[%s1 + $0x1fc] sm:$0xf]
  %v223 = vld [vmem:[%s1 + $0x200] sm:$0xf]
  %v224 = vld [vmem:[%s1 + $0x204] sm:$0xf]
  %v225 = vld [vmem:[%s1 + $0x208] sm:$0xf]
  %v226 = vld [vmem:[%s1 + $0x20c] sm:$0xf]
  %v227 = vld [vmem:[%s1 + $0x210] sm:$0xf]
  %v228 = vld [vmem:[%s1 + $0x214] sm:$0xf]
  %v229 = vld [vmem:[%s1 + $0x218] sm:$0xf]
  %v230 = vld [vmem:[%s1 + $0x21c] sm:$0xf]
  %v231 = vld [vmem:[%s1 + $0x220] sm:$0xf]
  %v232 = vld [vmem:[%s1 + $0x224] sm:$0xf]
  %v233 = vld [vmem:[%s1 + $0x228] sm:$0xf]
  %v234 = vld [vmem:[%s1 + $0x22c] sm:$0xf]
  %v235 = vld [vmem:[%s1 + $0x230] sm:$0xf]
  %v236 = vld [vmem:[%s1 + $0x234] sm:$0xf]
  %v237 = vld [vmem:[%s1 + $0x238] sm:$0xf]
  %v238 = vld [vmem:[%s1 + $0x23c] sm:$0xf]
  %v319 = vunpack.c.l.b16 %v15
  %v320 = vunpack.c.h.b16 %v15
  %v321 = vunpack.c.l.b16 %v16
  %v322 = vunpack.c.h.b16 %v16
  %v323 = vunpack.c.l.b16 %v17
  %v324 = vunpack.c.h.b16 %v17
  %v325 = vunpack.c.l.b16 %v18
  %v326 = vunpack.c.h.b16 %v18
  %v327 = vunpack.c.l.b16 %v19
  %v328 = vunpack.c.l.b16 %v20
  %v329 = vunpack.c.h.b16 %v20
  %v330 = vunpack.c.l.b16 %v21
  %v331 = vunpack.c.h.b16 %v21
  %v332 = vunpack.c.l.b16 %v22
  %v333 = vunpack.c.h.b16 %v22
  %v334 = vunpack.c.l.b16 %v23
  %v335 = vunpack.c.h.b16 %v23
  %v336 = vunpack.c.l.b16 %v24
  %v337 = vunpack.c.l.b16 %v25
  %v338 = vunpack.c.h.b16 %v25
  %v339 = vunpack.c.l.b16 %v26
  %v340 = vunpack.c.h.b16 %v26
  %v341 = vunpack.c.l.b16 %v27
  %v342 = vunpack.c.h.b16 %v27
  %v343 = vunpack.c.l.b16 %v28
  %v344 = vunpack.c.h.b16 %v28
  %v345 = vunpack.c.l.b16 %v29
  %v346 = vunpack.c.l.b16 %v30
  %v347 = vunpack.c.h.b16 %v30
  %v348 = vunpack.c.l.b16 %v31
  %v349 = vunpack.c.h.b16 %v31
  %v350 = vunpack.c.l.b16 %v32
  %v351 = vunpack.c.h.b16 %v32
  %v352 = vunpack.c.l.b16 %v33
  %v353 = vunpack.c.h.b16 %v33
  %v354 = vunpack.c.l.b16 %v34
  %v355 = vunpack.c.l.b16 %v35
  %v356 = vunpack.c.h.b16 %v35
  %v357 = vunpack.c.l.b16 %v36
  %v358 = vunpack.c.h.b16 %v36
  %v359 = vunpack.c.l.b16 %v37
  %v360 = vunpack.c.h.b16 %v37
  %v361 = vunpack.c.l.b16 %v38
  %v362 = vunpack.c.h.b16 %v38
  %v363 = vunpack.c.l.b16 %v39
  %v364 = vunpack.c.l.b16 %v40
  %v365 = vunpack.c.h.b16 %v40
  %v366 = vunpack.c.l.b16 %v41
  %v367 = vunpack.c.h.b16 %v41
  %v368 = vunpack.c.l.b16 %v42
  %v369 = vunpack.c.h.b16 %v42
  %v370 = vunpack.c.l.b16 %v43
  %v371 = vunpack.c.h.b16 %v43
  %v372 = vunpack.c.l.b16 %v44
  %v373 = vunpack.c.l.b16 %v45
  %v374 = vunpack.c.h.b16 %v45
  %v375 = vunpack.c.l.b16 %v46
  %v376 = vunpack.c.h.b16 %v46
  %v377 = vunpack.c.l.b16 %v47
  %v378 = vunpack.c.h.b16 %v47
  %v379 = vunpack.c.l.b16 %v48
  %v380 = vunpack.c.h.b16 %v48
  %v381 = vunpack.c.l.b16 %v49
  %v382 = vunpack.c.l.b16 %v50
  %v383 = vunpack.c.h.b16 %v50
  %v384 = vunpack.c.l.b16 %v51
  %v385 = vunpack.c.h.b16 %v51
  %v386 = vunpack.c.l.b16 %v52
  %v387 = vunpack.c.h.b16 %v52
  %v388 = vunpack.c.l.b16 %v53
  %v389 = vunpack.c.h.b16 %v53
  %v390 = vunpack.c.l.b16 %v54
  %v391 = vunpack.c.l.b16 %v55
  %v392 = vunpack.c.h.b16 %v55
  %v393 = vunpack.c.l.b16 %v56
  %v394 = vunpack.c.h.b16 %v56
  %v395 = vunpack.c.l.b16 %v57
  %v396 = vunpack.c.h.b16 %v57
  %v397 = vunpack.c.l.b16 %v58
  %v398 = vunpack.c.h.b16 %v58
  %v399 = vunpack.c.l.b16 %v59
  %v400 = vunpack.c.l.b16 %v60
  %v401 = vunpack.c.h.b16 %v60
  %v402 = vunpack.c.l.b16 %v61
  %v403 = vunpack.c.h.b16 %v61
  %v404 = vunpack.c.l.b16 %v62
  %v405 = vunpack.c.h.b16 %v62
  %v406 = vunpack.c.l.b16 %v63
  %v407 = vunpack.c.h.b16 %v63
  %v408 = vunpack.c.l.b16 %v64
  %v409 = vunpack.c.l.b16 %v65
  %v410 = vunpack.c.h.b16 %v65
  %v411 = vunpack.c.l.b16 %v66
  %v412 = vunpack.c.h.b16 %v66
  %v413 = vunpack.c.l.b16 %v67
  %v414 = vunpack.c.h.b16 %v67
  %v415 = vunpack.c.l.b16 %v68
  %v416 = vunpack.c.h.b16 %v68
  %v417 = vunpack.c.l.b16 %v69
  %v418 = vunpack.c.l.b16 %v70
  %v419 = vunpack.c.h.b16 %v70
  %v420 = vunpack.c.l.b16 %v71
  %v421 = vunpack.c.h.b16 %v71
  %v422 = vunpack.c.l.b16 %v72
  %v423 = vunpack.c.h.b16 %v72
  %v424 = vunpack.c.l.b16 %v73
  %v425 = vunpack.c.h.b16 %v73
  %v426 = vunpack.c.l.b16 %v74
  %v427 = vunpack.c.l.b16 %v75
  %v428 = vunpack.c.h.b16 %v75
  %v429 = vunpack.c.l.b16 %v76
  %v430 = vunpack.c.h.b16 %v76
  %v431 = vunpack.c.l.b16 %v77
  %v432 = vunpack.c.h.b16 %v77
  %v433 = vunpack.c.l.b16 %v78
  %v434 = vunpack.c.h.b16 %v78
  %v435 = vunpack.c.l.b16 %v79
  %v436 = vunpack.c.l.b16 %v80
  %v437 = vunpack.c.h.b16 %v80
  %v438 = vunpack.c.l.b16 %v81
  %v439 = vunpack.c.h.b16 %v81
  %v440 = vunpack.c.l.b16 %v82
  %v441 = vunpack.c.h.b16 %v82
  %v442 = vunpack.c.l.b16 %v83
  %v443 = vunpack.c.h.b16 %v83
  %v444 = vunpack.c.l.b16 %v84
  %v445 = vunpack.c.l.b16 %v85
  %v446 = vunpack.c.h.b16 %v85
  %v447 = vunpack.c.l.b16 %v86
  %v448 = vunpack.c.h.b16 %v86
  %v449 = vunpack.c.l.b16 %v87
  %v450 = vunpack.c.h.b16 %v87
  %v451 = vunpack.c.l.b16 %v88
  %v452 = vunpack.c.h.b16 %v88
  %v453 = vunpack.c.l.b16 %v89
  %v454 = vunpack.c.l.b16 %v90
  %v455 = vunpack.c.h.b16 %v90
  %v456 = vunpack.c.l.b16 %v91
  %v457 = vunpack.c.h.b16 %v91
  %v458 = vunpack.c.l.b16 %v92
  %v459 = vunpack.c.h.b16 %v92
  %v460 = vunpack.c.l.b16 %v93
  %v461 = vunpack.c.h.b16 %v93
  %v462 = vunpack.c.l.b16 %v94
  %v463 = vpack.c.b16 %v328, %v319
  %v464 = vpack.c.b16 %v329, %v320
  %v465 = vpack.c.b16 %v330, %v321
  %v466 = vpack.c.b16 %v331, %v322
  %v467 = vpack.c.b16 %v332, %v323
  %v468 = vpack.c.b16 %v333, %v324
  %v469 = vpack.c.b16 %v334, %v325
  %v470 = vpack.c.b16 %v335, %v326
  %v471 = vpack.c.b16 %v336, %v327
  %v472 = vpack.c.b16 %v346, %v337
  %v473 = vpack.c.b16 %v347, %v338
  %v474 = vpack.c.b16 %v348, %v339
  %v475 = vpack.c.b16 %v349, %v340
  %v476 = vpack.c.b16 %v350, %v341
  %v477 = vpack.c.b16 %v351, %v342
  %v478 = vpack.c.b16 %v352, %v343
  %v479 = vpack.c.b16 %v353, %v344
  %v480 = vpack.c.b16 %v354, %v345
  %v481 = vpack.c.b16 %v364, %v355
  %v482 = vpack.c.b16 %v365, %v356
  %v483 = vpack.c.b16 %v366, %v357
  %v484 = vpack.c.b16 %v367, %v358
  %v485 = vpack.c.b16 %v368, %v359
  %v486 = vpack.c.b16 %v369, %v360
  %v487 = vpack.c.b16 %v370, %v361
  %v488 = vpack.c.b16 %v371, %v362
  %v489 = vpack.c.b16 %v372, %v363
  %v490 = vpack.c.b16 %v382, %v373
  %v491 = vpack.c.b16 %v383, %v374
  %v492 = vpack.c.b16 %v384, %v375
  %v493 = vpack.c.b16 %v385, %v376
  %v494 = vpack.c.b16 %v386, %v377
  %v495 = vpack.c.b16 %v387, %v378
  %v496 = vpack.c.b16 %v388, %v379
  %v497 = vpack.c.b16 %v389, %v380
  %v498 = vpack.c.b16 %v390, %v381
  %v499 = vpack.c.b16 %v400, %v391
  %v500 = vpack.c.b16 %v401, %v392
  %v501 = vpack.c.b16 %v402, %v393
  %v502 = vpack.c.b16 %v403, %v394
  %v503 = vpack.c.b16 %v404, %v395
  %v504 = vpack.c.b16 %v405, %v396
  %v505 = vpack.c.b16 %v406, %v397
  %v506 = vpack.c.b16 %v407, %v398
  %v507 = vpack.c.b16 %v408, %v399
  %v508 = vpack.c.b16 %v418, %v409
  %v509 = vpack.c.b16 %v419, %v410
  %v510 = vpack.c.b16 %v420, %v411
  %v511 = vpack.c.b16 %v421, %v412
  %v512 = vpack.c.b16 %v422, %v413
  %v513 = vpack.c.b16 %v423, %v414
  %v514 = vpack.c.b16 %v424, %v415
  %v515 = vpack.c.b16 %v425, %v416
  %v516 = vpack.c.b16 %v426, %v417
  %v517 = vpack.c.b16 %v436, %v427
  %v518 = vpack.c.b16 %v437, %v428
  %v519 = vpack.c.b16 %v438, %v429
  %v520 = vpack.c.b16 %v439, %v430
  %v521 = vpack.c.b16 %v440, %v431
  %v522 = vpack.c.b16 %v441, %v432
  %v523 = vpack.c.b16 %v442, %v433
  %v524 = vpack.c.b16 %v443, %v434
  %v525 = vpack.c.b16 %v444, %v435
  %v526 = vpack.c.b16 %v454, %v445
  %v527 = vpack.c.b16 %v455, %v446
  %v528 = vpack.c.b16 %v456, %v447
  %v529 = vpack.c.b16 %v457, %v448
  %v530 = vpack.c.b16 %v458, %v449
  %v531 = vpack.c.b16 %v459, %v450
  %v532 = vpack.c.b16 %v460, %v451
  %v533 = vpack.c.b16 %v461, %v452
  %v534 = vpack.c.b16 %v462, %v453
  %v751 = vunpack.c.l.b16 %v95
  %v752 = vunpack.c.l.b16 %v96
  %v753 = vunpack.c.l.b16 %v97
  %v754 = vunpack.c.l.b16 %v98
  %v755 = vunpack.c.l.b16 %v99
  %v756 = vunpack.c.l.b16 %v100
  %v757 = vunpack.c.l.b16 %v101
  %v758 = vunpack.c.l.b16 %v102
  %v759 = vunpack.c.l.b16 %v103
  %v760 = vunpack.c.l.b16 %v104
  %v761 = vunpack.c.l.b16 %v105
  %v762 = vunpack.c.l.b16 %v106
  %v763 = vunpack.c.l.b16 %v107
  %v764 = vunpack.c.l.b16 %v108
  %v765 = vunpack.c.l.b16 %v109
  %v766 = vunpack.c.l.b16 %v110
  %v767 = vunpack.c.l.b16 %v111
  %v768 = vunpack.c.l.b16 %v112
  %v769 = vunpack.c.l.b16 %v113
  %v770 = vunpack.c.l.b16 %v114
  %v771 = vunpack.c.l.b16 %v115
  %v772 = vunpack.c.l.b16 %v116
  %v773 = vunpack.c.l.b16 %v117
  %v774 = vunpack.c.l.b16 %v118
  %v775 = vunpack.c.l.b16 %v119
  %v776 = vunpack.c.l.b16 %v120
  %v777 = vunpack.c.l.b16 %v121
  %v778 = vunpack.c.l.b16 %v122
  %v779 = vunpack.c.l.b16 %v123
  %v780 = vunpack.c.l.b16 %v124
  %v781 = vunpack.c.l.b16 %v125
  %v782 = vunpack.c.l.b16 %v126
  %v783 = vunpack.c.l.b16 %v127
  %v784 = vunpack.c.l.b16 %v128
  %v785 = vunpack.c.l.b16 %v129
  %v786 = vunpack.c.l.b16 %v130
  %v787 = vunpack.c.l.b16 %v131
  %v788 = vunpack.c.l.b16 %v132
  %v789 = vunpack.c.l.b16 %v133
  %v790 = vunpack.c.l.b16 %v134
  %v791 = vunpack.c.l.b16 %v135
  %v792 = vunpack.c.l.b16 %v136
  %v793 = vunpack.c.l.b16 %v137
  %v794 = vunpack.c.l.b16 %v138
  %v795 = vunpack.c.l.b16 %v139
  %v796 = vunpack.c.l.b16 %v140
  %v797 = vunpack.c.l.b16 %v141
  %v798 = vunpack.c.l.b16 %v142
  %v799 = vunpack.c.l.b16 %v143
  %v800 = vunpack.c.l.b16 %v144
  %v801 = vunpack.c.l.b16 %v145
  %v802 = vunpack.c.l.b16 %v146
  %v803 = vunpack.c.l.b16 %v147
  %v804 = vunpack.c.l.b16 %v148
  %v805 = vunpack.c.l.b16 %v149
  %v806 = vunpack.c.l.b16 %v150
  %v807 = vunpack.c.l.b16 %v151
  %v808 = vunpack.c.l.b16 %v152
  %v809 = vunpack.c.l.b16 %v153
  %v810 = vunpack.c.l.b16 %v154
  %v811 = vunpack.c.l.b16 %v155
  %v812 = vunpack.c.l.b16 %v156
  %v813 = vunpack.c.l.b16 %v157
  %v814 = vunpack.c.l.b16 %v158
  %v815 = vunpack.c.l.b16 %v159
  %v816 = vunpack.c.l.b16 %v160
  %v817 = vunpack.c.l.b16 %v161
  %v818 = vunpack.c.l.b16 %v162
  %v819 = vunpack.c.l.b16 %v163
  %v820 = vunpack.c.l.b16 %v164
  %v821 = vunpack.c.l.b16 %v165
  %v822 = vunpack.c.l.b16 %v166
  %v823 = vunpack.c.l.b16 %v167
  %v824 = vunpack.c.l.b16 %v168
  %v825 = vunpack.c.l.b16 %v169
  %v826 = vunpack.c.l.b16 %v170
  %v827 = vunpack.c.l.b16 %v171
  %v828 = vunpack.c.l.b16 %v172
  %v829 = vunpack.c.l.b16 %v173
  %v830 = vunpack.c.l.b16 %v174
  %v831 = vunpack.c.l.b16 %v175
  %v832 = vunpack.c.l.b16 %v176
  %v833 = vunpack.c.l.b16 %v177
  %v834 = vunpack.c.l.b16 %v178
  %v835 = vunpack.c.l.b16 %v179
  %v836 = vunpack.c.l.b16 %v180
  %v837 = vunpack.c.l.b16 %v181
  %v838 = vunpack.c.l.b16 %v182
  %v839 = vunpack.c.l.b16 %v183
  %v840 = vunpack.c.l.b16 %v184
  %v841 = vunpack.c.l.b16 %v185
  %v842 = vunpack.c.l.b16 %v186
  %v843 = vunpack.c.l.b16 %v187
  %v844 = vunpack.c.l.b16 %v188
  %v845 = vunpack.c.l.b16 %v189
  %v846 = vunpack.c.l.b16 %v190
  %v847 = vunpack.c.l.b16 %v191
  %v848 = vunpack.c.l.b16 %v192
  %v849 = vunpack.c.l.b16 %v193
  %v850 = vunpack.c.l.b16 %v194
  %v851 = vunpack.c.l.b16 %v195
  %v852 = vunpack.c.l.b16 %v196
  %v853 = vunpack.c.l.b16 %v197
  %v854 = vunpack.c.l.b16 %v198
  %v855 = vunpack.c.l.b16 %v199
  %v856 = vunpack.c.l.b16 %v200
  %v857 = vunpack.c.l.b16 %v201
  %v858 = vunpack.c.l.b16 %v202
  %v859 = vunpack.c.l.b16 %v203
  %v860 = vunpack.c.l.b16 %v204
  %v861 = vunpack.c.l.b16 %v205
  %v862 = vunpack.c.l.b16 %v206
  %v863 = vunpack.c.l.b16 %v207
  %v864 = vunpack.c.l.b16 %v208
  %v865 = vunpack.c.l.b16 %v209
  %v866 = vunpack.c.l.b16 %v210
  %v867 = vunpack.c.l.b16 %v211
  %v868 = vunpack.c.l.b16 %v212
  %v869 = vunpack.c.l.b16 %v213
  %v870 = vunpack.c.l.b16 %v214
  %v871 = vunpack.c.l.b16 %v215
  %v872 = vunpack.c.l.b16 %v216
  %v873 = vunpack.c.l.b16 %v217
  %v874 = vunpack.c.l.b16 %v218
  %v875 = vunpack.c.l.b16 %v219
  %v876 = vunpack.c.l.b16 %v220
  %v877 = vunpack.c.l.b16 %v221
  %v878 = vunpack.c.l.b16 %v222
  %v879 = vunpack.c.l.b16 %v223
  %v880 = vunpack.c.l.b16 %v224
  %v881 = vunpack.c.l.b16 %v225
  %v882 = vunpack.c.l.b16 %v226
  %v883 = vunpack.c.l.b16 %v227
  %v884 = vunpack.c.l.b16 %v228
  %v885 = vunpack.c.l.b16 %v229
  %v886 = vunpack.c.l.b16 %v230
  %v887 = vunpack.c.l.b16 %v231
  %v888 = vunpack.c.l.b16 %v232
  %v889 = vunpack.c.l.b16 %v233
  %v890 = vunpack.c.l.b16 %v234
  %v891 = vunpack.c.l.b16 %v235
  %v892 = vunpack.c.l.b16 %v236
  %v893 = vunpack.c.l.b16 %v237
  %v894 = vunpack.c.l.b16 %v238
  %v895 = vpack.c.b16 %v752, %v751
  %v896 = vpack.c.b16 %v754, %v753
  %v897 = vpack.c.b16 %v756, %v755
  %v898 = vpack.c.b16 %v758, %v757
  %v899 = vpack.c.b16 %v760, %v759
  %v900 = vpack.c.b16 %v762, %v761
  %v901 = vpack.c.b16 %v764, %v763
  %v902 = vpack.c.b16 %v766, %v765
  %v903 = vpack.c.b16 %v768, %v767
  %v904 = vpack.c.b16 %v770, %v769
  %v905 = vpack.c.b16 %v772, %v771
  %v906 = vpack.c.b16 %v774, %v773
  %v907 = vpack.c.b16 %v776, %v775
  %v908 = vpack.c.b16 %v778, %v777
  %v909 = vpack.c.b16 %v780, %v779
  %v910 = vpack.c.b16 %v782, %v781
  %v911 = vpack.c.b16 %v784, %v783
  %v912 = vpack.c.b16 %v786, %v785
  %v913 = vpack.c.b16 %v788, %v787
  %v914 = vpack.c.b16 %v790, %v789
  %v915 = vpack.c.b16 %v792, %v791
  %v916 = vpack.c.b16 %v794, %v793
  %v917 = vpack.c.b16 %v796, %v795
  %v918 = vpack.c.b16 %v798, %v797
  %v919 = vpack.c.b16 %v800, %v799
  %v920 = vpack.c.b16 %v802, %v801
  %v921 = vpack.c.b16 %v804, %v803
  %v922 = vpack.c.b16 %v806, %v805
  %v923 = vpack.c.b16 %v808, %v807
  %v924 = vpack.c.b16 %v810, %v809
  %v925 = vpack.c.b16 %v812, %v811
  %v926 = vpack.c.b16 %v814, %v813
  %v927 = vpack.c.b16 %v816, %v815
  %v928 = vpack.c.b16 %v818, %v817
  %v929 = vpack.c.b16 %v820, %v819
  %v930 = vpack.c.b16 %v822, %v821
  %v931 = vpack.c.b16 %v824, %v823
  %v932 = vpack.c.b16 %v826, %v825
  %v933 = vpack.c.b16 %v828, %v827
  %v934 = vpack.c.b16 %v830, %v829
  %v935 = vpack.c.b16 %v832, %v831
  %v936 = vpack.c.b16 %v834, %v833
  %v937 = vpack.c.b16 %v836, %v835
  %v938 = vpack.c.b16 %v838, %v837
  %v939 = vpack.c.b16 %v840, %v839
  %v940 = vpack.c.b16 %v842, %v841
  %v941 = vpack.c.b16 %v844, %v843
  %v942 = vpack.c.b16 %v846, %v845
  %v943 = vpack.c.b16 %v848, %v847
  %v944 = vpack.c.b16 %v850, %v849
  %v945 = vpack.c.b16 %v852, %v851
  %v946 = vpack.c.b16 %v854, %v853
  %v947 = vpack.c.b16 %v856, %v855
  %v948 = vpack.c.b16 %v858, %v857
  %v949 = vpack.c.b16 %v860, %v859
  %v950 = vpack.c.b16 %v862, %v861
  %v951 = vpack.c.b16 %v864, %v863
  %v952 = vpack.c.b16 %v866, %v865
  %v953 = vpack.c.b16 %v868, %v867
  %v954 = vpack.c.b16 %v870, %v869
  %v955 = vpack.c.b16 %v872, %v871
  %v956 = vpack.c.b16 %v874, %v873
  %v957 = vpack.c.b16 %v876, %v875
  %v958 = vpack.c.b16 %v878, %v877
  %v959 = vpack.c.b16 %v880, %v879
  %v960 = vpack.c.b16 %v882, %v881
  %v961 = vpack.c.b16 %v884, %v883
  %v962 = vpack.c.b16 %v886, %v885
  %v963 = vpack.c.b16 %v888, %v887
  %v964 = vpack.c.b16 %v890, %v889
  %v965 = vpack.c.b16 %v892, %v891
  %v966 = vpack.c.b16 %v894, %v893
  %1039 = vmatprep.subr.bf16.mxu0 0
  %1040 = vmatpush1.bf16.msra.mxu0 %v902
  %1041 = vmatprep.subr.bf16.mxu0 0
  %1042 = vmatpush1.bf16.msra.mxu0 %v901
  %1043 = vmatprep.subr.bf16.mxu0 0
  %1044 = vmatpush1.bf16.msra.mxu0 %v900
  %1045 = vmatprep.subr.bf16.mxu0 0
  %1046 = vmatpush1.bf16.msra.mxu0 %v899
  %1047 = vmatprep.subr.bf16.mxu0 0
  %1048 = vmatpush1.bf16.msra.mxu0 %v898
  %1049 = vmatprep.subr.bf16.mxu0 0
  %1050 = vmatpush1.bf16.msra.mxu0 %v897
  %1051 = vmatprep.subr.bf16.mxu0 0
  %1052 = vmatpush1.bf16.msra.mxu0 %v896
  %1053 = vmatprep.subr.bf16.mxu0 0
  %1054 = vmatpush1.bf16.msra.mxu0 %v895
  %1055 = vmatprep.subr.bf16.mxu0 0
  %1056 = vmatpush2.bf16.msra.mxu0 %v910
  %1057 = vmatprep.subr.bf16.mxu0 0
  %1058 = vmatpush2.bf16.msra.mxu0 %v909
  %1059 = vmatprep.subr.bf16.mxu0 0
  %1060 = vmatpush2.bf16.msra.mxu0 %v908
  %1061 = vmatprep.subr.bf16.mxu0 0
  %1062 = vmatpush2.bf16.msra.mxu0 %v907
  %1063 = vmatprep.subr.bf16.mxu0 0
  %1064 = vmatpush2.bf16.msra.mxu0 %v906
  %1065 = vmatprep.subr.bf16.mxu0 0
  %1066 = vmatpush2.bf16.msra.mxu0 %v905
  %1067 = vmatprep.subr.bf16.mxu0 0
  %1068 = vmatpush2.bf16.msra.mxu0 %v904
  %1069 = vmatprep.subr.bf16.mxu0 0
  %1070 = vmatpush2.bf16.msra.mxu0 %v903
  %1071 = vmatprep.mubr.bf16.mxu0 %v464
  %1072 = vmatmul.mubr.bf16.gmra.mxu0 %v463
  %v1073 = vpop.f32.mrf.mxu0
  %v1074 = vadd.f32 0.0, %v1073
  %v1075 = vpop.f32.mrf.mxu0
  %v1076 = vpop.f32.mrf.mxu0
  %v1077 = vadd.f32 0.0, %v1076
  %v1078 = vpop.f32.mrf.mxu0
  %1079 = vmatprep.mubr.bf16.mxu0 %v473
  %1080 = vmatmul.mubr.bf16.gmra.mxu0 %v472
  %v1081 = vpop.f32.mrf.mxu0
  %v1082 = vadd.f32 0.0, %v1081
  %v1083 = vpop.f32.mrf.mxu0
  %v1084 = vpop.f32.mrf.mxu0
  %v1085 = vadd.f32 0.0, %v1084
  %v1086 = vpop.f32.mrf.mxu0
  %1087 = vmatprep.mubr.bf16.mxu0 %v482
  %1088 = vmatmul.mubr.bf16.gmra.mxu0 %v481
  %v1089 = vpop.f32.mrf.mxu0
  %v1090 = vadd.f32 0.0, %v1089
  %v1091 = vpop.f32.mrf.mxu0
  %v1092 = vpop.f32.mrf.mxu0
  %v1093 = vadd.f32 0.0, %v1092
  %v1094 = vpop.f32.mrf.mxu0
  %1095 = vmatprep.mubr.bf16.mxu0 %v491
  %1096 = vmatmul.mubr.bf16.gmra.mxu0 %v490
  %v1097 = vpop.f32.mrf.mxu0
  %v1098 = vadd.f32 0.0, %v1097
  %v1099 = vpop.f32.mrf.mxu0
  %v1100 = vpop.f32.mrf.mxu0
  %v1101 = vadd.f32 0.0, %v1100
  %v1102 = vpop.f32.mrf.mxu0
  %1103 = vmatprep.mubr.bf16.mxu0 %v500
  %1104 = vmatmul.mubr.bf16.gmra.mxu0 %v499
  %v1105 = vpop.f32.mrf.mxu0
  %v1106 = vadd.f32 0.0, %v1105
  %v1107 = vpop.f32.mrf.mxu0
  %v1108 = vpop.f32.mrf.mxu0
  %v1109 = vadd.f32 0.0, %v1108
  %v1110 = vpop.f32.mrf.mxu0
  %1111 = vmatprep.mubr.bf16.mxu0 %v509
  %1112 = vmatmul.mubr.bf16.gmra.mxu0 %v508
  %v1113 = vpop.f32.mrf.mxu0
  %v1114 = vadd.f32 0.0, %v1113
  %v1115 = vpop.f32.mrf.mxu0
  %v1116 = vpop.f32.mrf.mxu0
  %v1117 = vadd.f32 0.0, %v1116
  %v1118 = vpop.f32.mrf.mxu0
  %1119 = vmatprep.mubr.bf16.mxu0 %v518
  %1120 = vmatmul.mubr.bf16.gmra.mxu0 %v517
  %v1121 = vpop.f32.mrf.mxu0
  %v1122 = vadd.f32 0.0, %v1121
  %v1123 = vpop.f32.mrf.mxu0
  %v1124 = vpop.f32.mrf.mxu0
  %v1125 = vadd.f32 0.0, %v1124
  %v1126 = vpop.f32.mrf.mxu0
  %1127 = vmatprep.mubr.bf16.mxu0 %v527
  %1128 = vmatmul.mubr.bf16.gmra.mxu0 %v526
  %v1129 = vpop.f32.mrf.mxu0
  %v1130 = vadd.f32 0.0, %v1129
  %v1131 = vpop.f32.mrf.mxu0
  %v1132 = vpop.f32.mrf.mxu0
  %v1133 = vadd.f32 0.0, %v1132
  %v1134 = vpop.f32.mrf.mxu0
  %1135 = vdwg.mxu0
  %1136 = vmatprep.subr.bf16.mxu0 0
  %1137 = vmatpush1.bf16.msra.mxu0 %v918
  %1138 = vmatprep.subr.bf16.mxu0 0
  %1139 = vmatpush1.bf16.msra.mxu0 %v917
  %1140 = vmatprep.subr.bf16.mxu0 0
  %1141 = vmatpush1.bf16.msra.mxu0 %v916
  %1142 = vmatprep.subr.bf16.mxu0 0
  %1143 = vmatpush1.bf16.msra.mxu0 %v915
  %1144 = vmatprep.subr.bf16.mxu0 0
  %1145 = vmatpush1.bf16.msra.mxu0 %v914
  %1146 = vmatprep.subr.bf16.mxu0 0
  %1147 = vmatpush1.bf16.msra.mxu0 %v913
  %1148 = vmatprep.subr.bf16.mxu0 0
  %1149 = vmatpush1.bf16.msra.mxu0 %v912
  %1150 = vmatprep.subr.bf16.mxu0 0
  %1151 = vmatpush1.bf16.msra.mxu0 %v911
  %1152 = vmatprep.subr.bf16.mxu0 0
  %1153 = vmatpush2.bf16.msra.mxu0 %v926
  %1154 = vmatprep.subr.bf16.mxu0 0
  %1155 = vmatpush2.bf16.msra.mxu0 %v925
  %1156 = vmatprep.subr.bf16.mxu0 0
  %1157 = vmatpush2.bf16.msra.mxu0 %v924
  %1158 = vmatprep.subr.bf16.mxu0 0
  %1159 = vmatpush2.bf16.msra.mxu0 %v923
  %1160 = vmatprep.subr.bf16.mxu0 0
  %1161 = vmatpush2.bf16.msra.mxu0 %v922
  %1162 = vmatprep.subr.bf16.mxu0 0
  %1163 = vmatpush2.bf16.msra.mxu0 %v921
  %1164 = vmatprep.subr.bf16.mxu0 0
  %1165 = vmatpush2.bf16.msra.mxu0 %v920
  %1166 = vmatprep.subr.bf16.mxu0 0
  %1167 = vmatpush2.bf16.msra.mxu0 %v919
  %1168 = vmatprep.mubr.bf16.mxu0 %v466
  %1169 = vmatmul.mubr.bf16.gmra.mxu0 %v465
  %v1170 = vpop.f32.mrf.mxu0
  %v1171 = vadd.f32 %v1074, %v1170
  %v1172 = vpop.f32.mrf.mxu0
  %v1173 = vpop.f32.mrf.mxu0
  %v1174 = vadd.f32 %v1077, %v1173
  %v1175 = vpop.f32.mrf.mxu0
  %1176 = vmatprep.mubr.bf16.mxu0 %v475
  %1177 = vmatmul.mubr.bf16.gmra.mxu0 %v474
  %v1178 = vpop.f32.mrf.mxu0
  %v1179 = vadd.f32 %v1082, %v1178
  %v1180 = vpop.f32.mrf.mxu0
  %v1181 = vpop.f32.mrf.mxu0
  %v1182 = vadd.f32 %v1085, %v1181
  %v1183 = vpop.f32.mrf.mxu0
  %1184 = vmatprep.mubr.bf16.mxu0 %v484
  %1185 = vmatmul.mubr.bf16.gmra.mxu0 %v483
  %v1186 = vpop.f32.mrf.mxu0
  %v1187 = vadd.f32 %v1090, %v1186
  %v1188 = vpop.f32.mrf.mxu0
  %v1189 = vpop.f32.mrf.mxu0
  %v1190 = vadd.f32 %v1093, %v1189
  %v1191 = vpop.f32.mrf.mxu0
  %1192 = vmatprep.mubr.bf16.mxu0 %v493
  %1193 = vmatmul.mubr.bf16.gmra.mxu0 %v492
  %v1194 = vpop.f32.mrf.mxu0
  %v1195 = vadd.f32 %v1098, %v1194
  %v1196 = vpop.f32.mrf.mxu0
  %v1197 = vpop.f32.mrf.mxu0
  %v1198 = vadd.f32 %v1101, %v1197
  %v1199 = vpop.f32.mrf.mxu0
  %1200 = vmatprep.mubr.bf16.mxu0 %v502
  %1201 = vmatmul.mubr.bf16.gmra.mxu0 %v501
  %v1202 = vpop.f32.mrf.mxu0
  %v1203 = vadd.f32 %v1106, %v1202
  %v1204 = vpop.f32.mrf.mxu0
  %v1205 = vpop.f32.mrf.mxu0
  %v1206 = vadd.f32 %v1109, %v1205
  %v1207 = vpop.f32.mrf.mxu0
  %1208 = vmatprep.mubr.bf16.mxu0 %v511
  %1209 = vmatmul.mubr.bf16.gmra.mxu0 %v510
  %v1210 = vpop.f32.mrf.mxu0
  %v1211 = vadd.f32 %v1114, %v1210
  %v1212 = vpop.f32.mrf.mxu0
  %v1213 = vpop.f32.mrf.mxu0
  %v1214 = vadd.f32 %v1117, %v1213
  %v1215 = vpop.f32.mrf.mxu0
  %1216 = vmatprep.mubr.bf16.mxu0 %v520
  %1217 = vmatmul.mubr.bf16.gmra.mxu0 %v519
  %v1218 = vpop.f32.mrf.mxu0
  %v1219 = vadd.f32 %v1122, %v1218
  %v1220 = vpop.f32.mrf.mxu0
  %v1221 = vpop.f32.mrf.mxu0
  %v1222 = vadd.f32 %v1125, %v1221
  %v1223 = vpop.f32.mrf.mxu0
  %1224 = vmatprep.mubr.bf16.mxu0 %v529
  %1225 = vmatmul.mubr.bf16.gmra.mxu0 %v528
  %v1226 = vpop.f32.mrf.mxu0
  %v1227 = vadd.f32 %v1130, %v1226
  %v1228 = vpop.f32.mrf.mxu0
  %v1229 = vpop.f32.mrf.mxu0
  %v1230 = vadd.f32 %v1133, %v1229
  %v1231 = vpop.f32.mrf.mxu0
  %1232 = vdwg.mxu0
  %1233 = vmatprep.subr.bf16.mxu0 0
  %1234 = vmatpush1.bf16.msra.mxu0 %v934
  %1235 = vmatprep.subr.bf16.mxu0 0
  %1236 = vmatpush1.bf16.msra.mxu0 %v933
  %1237 = vmatprep.subr.bf16.mxu0 0
  %1238 = vmatpush1.bf16.msra.mxu0 %v932
  %1239 = vmatprep.subr.bf16.mxu0 0
  %1240 = vmatpush1.bf16.msra.mxu0 %v931
  %1241 = vmatprep.subr.bf16.mxu0 0
  %1242 = vmatpush1.bf16.msra.mxu0 %v930
  %1243 = vmatprep.subr.bf16.mxu0 0
  %1244 = vmatpush1.bf16.msra.mxu0 %v929
  %1245 = vmatprep.subr.bf16.mxu0 0
  %1246 = vmatpush1.bf16.msra.mxu0 %v928
  %1247 = vmatprep.subr.bf16.mxu0 0
  %1248 = vmatpush1.bf16.msra.mxu0 %v927
  %1249 = vmatprep.subr.bf16.mxu0 0
  %1250 = vmatpush2.bf16.msra.mxu0 %v942
  %1251 = vmatprep.subr.bf16.mxu0 0
  %1252 = vmatpush2.bf16.msra.mxu0 %v941
  %1253 = vmatprep.subr.bf16.mxu0 0
  %1254 = vmatpush2.bf16.msra.mxu0 %v940
  %1255 = vmatprep.subr.bf16.mxu0 0
  %1256 = vmatpush2.bf16.msra.mxu0 %v939
  %1257 = vmatprep.subr.bf16.mxu0 0
  %1258 = vmatpush2.bf16.msra.mxu0 %v938
  %1259 = vmatprep.subr.bf16.mxu0 0
  %1260 = vmatpush2.bf16.msra.mxu0 %v937
  %1261 = vmatprep.subr.bf16.mxu0 0
  %1262 = vmatpush2.bf16.msra.mxu0 %v936
  %1263 = vmatprep.subr.bf16.mxu0 0
  %1264 = vmatpush2.bf16.msra.mxu0 %v935
  %1265 = vmatprep.mubr.bf16.mxu0 %v468
  %1266 = vmatmul.mubr.bf16.gmra.mxu0 %v467
  %v1267 = vpop.f32.mrf.mxu0
  %v1268 = vadd.f32 %v1171, %v1267
  %v1269 = vpop.f32.mrf.mxu0
  %v1270 = vpop.f32.mrf.mxu0
  %v1271 = vadd.f32 %v1174, %v1270
  %v1272 = vpop.f32.mrf.mxu0
  %1273 = vmatprep.mubr.bf16.mxu0 %v477
  %1274 = vmatmul.mubr.bf16.gmra.mxu0 %v476
  %v1275 = vpop.f32.mrf.mxu0
  %v1276 = vadd.f32 %v1179, %v1275
  %v1277 = vpop.f32.mrf.mxu0
  %v1278 = vpop.f32.mrf.mxu0
  %v1279 = vadd.f32 %v1182, %v1278
  %v1280 = vpop.f32.mrf.mxu0
  %1281 = vmatprep.mubr.bf16.mxu0 %v486
  %1282 = vmatmul.mubr.bf16.gmra.mxu0 %v485
  %v1283 = vpop.f32.mrf.mxu0
  %v1284 = vadd.f32 %v1187, %v1283
  %v1285 = vpop.f32.mrf.mxu0
  %v1286 = vpop.f32.mrf.mxu0
  %v1287 = vadd.f32 %v1190, %v1286
  %v1288 = vpop.f32.mrf.mxu0
  %1289 = vmatprep.mubr.bf16.mxu0 %v495
  %1290 = vmatmul.mubr.bf16.gmra.mxu0 %v494
  %v1291 = vpop.f32.mrf.mxu0
  %v1292 = vadd.f32 %v1195, %v1291
  %v1293 = vpop.f32.mrf.mxu0
  %v1294 = vpop.f32.mrf.mxu0
  %v1295 = vadd.f32 %v1198, %v1294
  %v1296 = vpop.f32.mrf.mxu0
  %1297 = vmatprep.mubr.bf16.mxu0 %v504
  %1298 = vmatmul.mubr.bf16.gmra.mxu0 %v503
  %v1299 = vpop.f32.mrf.mxu0
  %v1300 = vadd.f32 %v1203, %v1299
  %v1301 = vpop.f32.mrf.mxu0
  %v1302 = vpop.f32.mrf.mxu0
  %v1303 = vadd.f32 %v1206, %v1302
  %v1304 = vpop.f32.mrf.mxu0
  %1305 = vmatprep.mubr.bf16.mxu0 %v513
  %1306 = vmatmul.mubr.bf16.gmra.mxu0 %v512
  %v1307 = vpop.f32.mrf.mxu0
  %v1308 = vadd.f32 %v1211, %v1307
  %v1309 = vpop.f32.mrf.mxu0
  %v1310 = vpop.f32.mrf.mxu0
  %v1311 = vadd.f32 %v1214, %v1310
  %v1312 = vpop.f32.mrf.mxu0
  %1313 = vmatprep.mubr.bf16.mxu0 %v522
  %1314 = vmatmul.mubr.bf16.gmra.mxu0 %v521
  %v1315 = vpop.f32.mrf.mxu0
  %v1316 = vadd.f32 %v1219, %v1315
  %v1317 = vpop.f32.mrf.mxu0
  %v1318 = vpop.f32.mrf.mxu0
  %v1319 = vadd.f32 %v1222, %v1318
  %v1320 = vpop.f32.mrf.mxu0
  %1321 = vmatprep.mubr.bf16.mxu0 %v531
  %1322 = vmatmul.mubr.bf16.gmra.mxu0 %v530
  %v1323 = vpop.f32.mrf.mxu0
  %v1324 = vadd.f32 %v1227, %v1323
  %v1325 = vpop.f32.mrf.mxu0
  %v1326 = vpop.f32.mrf.mxu0
  %v1327 = vadd.f32 %v1230, %v1326
  %v1328 = vpop.f32.mrf.mxu0
  %1329 = vdwg.mxu0
  %1330 = vmatprep.subr.bf16.mxu0 0
  %1331 = vmatpush1.bf16.msra.mxu0 %v950
  %1332 = vmatprep.subr.bf16.mxu0 0
  %1333 = vmatpush1.bf16.msra.mxu0 %v949
  %1334 = vmatprep.subr.bf16.mxu0 0
  %1335 = vmatpush1.bf16.msra.mxu0 %v948
  %1336 = vmatprep.subr.bf16.mxu0 0
  %1337 = vmatpush1.bf16.msra.mxu0 %v947
  %1338 = vmatprep.subr.bf16.mxu0 0
  %1339 = vmatpush1.bf16.msra.mxu0 %v946
  %1340 = vmatprep.subr.bf16.mxu0 0
  %1341 = vmatpush1.bf16.msra.mxu0 %v945
  %1342 = vmatprep.subr.bf16.mxu0 0
  %1343 = vmatpush1.bf16.msra.mxu0 %v944
  %1344 = vmatprep.subr.bf16.mxu0 0
  %1345 = vmatpush1.bf16.msra.mxu0 %v943
  %1346 = vmatprep.subr.bf16.mxu0 0
  %1347 = vmatpush2.bf16.msra.mxu0 %v958
  %1348 = vmatprep.subr.bf16.mxu0 0
  %1349 = vmatpush2.bf16.msra.mxu0 %v957
  %1350 = vmatprep.subr.bf16.mxu0 0
  %1351 = vmatpush2.bf16.msra.mxu0 %v956
  %1352 = vmatprep.subr.bf16.mxu0 0
  %1353 = vmatpush2.bf16.msra.mxu0 %v955
  %1354 = vmatprep.subr.bf16.mxu0 0
  %1355 = vmatpush2.bf16.msra.mxu0 %v954
  %1356 = vmatprep.subr.bf16.mxu0 0
  %1357 = vmatpush2.bf16.msra.mxu0 %v953
  %1358 = vmatprep.subr.bf16.mxu0 0
  %1359 = vmatpush2.bf16.msra.mxu0 %v952
  %1360 = vmatprep.subr.bf16.mxu0 0
  %1361 = vmatpush2.bf16.msra.mxu0 %v951
  %1362 = vmatprep.mubr.bf16.mxu0 %v470
  %1363 = vmatmul.mubr.bf16.gmra.mxu0 %v469
  %v1364 = vpop.f32.mrf.mxu0
  %v1365 = vadd.f32 %v1268, %v1364
  %v1366 = vpop.f32.mrf.mxu0
  %v1367 = vpop.f32.mrf.mxu0
  %v1368 = vadd.f32 %v1271, %v1367
  %v1369 = vpop.f32.mrf.mxu0
  %1370 = vmatprep.mubr.bf16.mxu0 %v479
  %1371 = vmatmul.mubr.bf16.gmra.mxu0 %v478
  %v1372 = vpop.f32.mrf.mxu0
  %v1373 = vadd.f32 %v1276, %v1372
  %v1374 = vpop.f32.mrf.mxu0
  %v1375 = vpop.f32.mrf.mxu0
  %v1376 = vadd.f32 %v1279, %v1375
  %v1377 = vpop.f32.mrf.mxu0
  %1378 = vmatprep.mubr.bf16.mxu0 %v488
  %1379 = vmatmul.mubr.bf16.gmra.mxu0 %v487
  %v1380 = vpop.f32.mrf.mxu0
  %v1381 = vadd.f32 %v1284, %v1380
  %v1382 = vpop.f32.mrf.mxu0
  %v1383 = vpop.f32.mrf.mxu0
  %v1384 = vadd.f32 %v1287, %v1383
  %v1385 = vpop.f32.mrf.mxu0
  %1386 = vmatprep.mubr.bf16.mxu0 %v497
  %1387 = vmatmul.mubr.bf16.gmra.mxu0 %v496
  %v1388 = vpop.f32.mrf.mxu0
  %v1389 = vadd.f32 %v1292, %v1388
  %v1390 = vpop.f32.mrf.mxu0
  %v1391 = vpop.f32.mrf.mxu0
  %v1392 = vadd.f32 %v1295, %v1391
  %v1393 = vpop.f32.mrf.mxu0
  %1394 = vmatprep.mubr.bf16.mxu0 %v506
  %1395 = vmatmul.mubr.bf16.gmra.mxu0 %v505
  %v1396 = vpop.f32.mrf.mxu0
  %v1397 = vadd.f32 %v1300, %v1396
  %v1398 = vpop.f32.mrf.mxu0
  %v1399 = vpop.f32.mrf.mxu0
  %v1400 = vadd.f32 %v1303, %v1399
  %v1401 = vpop.f32.mrf.mxu0
  %1402 = vmatprep.mubr.bf16.mxu0 %v515
  %1403 = vmatmul.mubr.bf16.gmra.mxu0 %v514
  %v1404 = vpop.f32.mrf.mxu0
  %v1405 = vadd.f32 %v1308, %v1404
  %v1406 = vpop.f32.mrf.mxu0
  %v1407 = vpop.f32.mrf.mxu0
  %v1408 = vadd.f32 %v1311, %v1407
  %v1409 = vpop.f32.mrf.mxu0
  %1410 = vmatprep.mubr.bf16.mxu0 %v524
  %1411 = vmatmul.mubr.bf16.gmra.mxu0 %v523
  %v1412 = vpop.f32.mrf.mxu0
  %v1413 = vadd.f32 %v1316, %v1412
  %v1414 = vpop.f32.mrf.mxu0
  %v1415 = vpop.f32.mrf.mxu0
  %v1416 = vadd.f32 %v1319, %v1415
  %v1417 = vpop.f32.mrf.mxu0
  %1418 = vmatprep.mubr.bf16.mxu0 %v533
  %1419 = vmatmul.mubr.bf16.gmra.mxu0 %v532
  %v1420 = vpop.f32.mrf.mxu0
  %v1421 = vadd.f32 %v1324, %v1420
  %v1422 = vpop.f32.mrf.mxu0
  %v1423 = vpop.f32.mrf.mxu0
  %v1424 = vadd.f32 %v1327, %v1423
  %v1425 = vpop.f32.mrf.mxu0
  %1426 = vdwg.mxu0
  %1427 = vmatprep.subr.bf16.mxu0 0
  %1428 = vmatpush1.bf16.msra.mxu0 %v966
  %1429 = vmatprep.subr.bf16.mxu0 0
  %1430 = vmatpush1.bf16.msra.mxu0 %v965
  %1431 = vmatprep.subr.bf16.mxu0 0
  %1432 = vmatpush1.bf16.msra.mxu0 %v964
  %1433 = vmatprep.subr.bf16.mxu0 0
  %1434 = vmatpush1.bf16.msra.mxu0 %v963
  %1435 = vmatprep.subr.bf16.mxu0 0
  %1436 = vmatpush1.bf16.msra.mxu0 %v962
  %1437 = vmatprep.subr.bf16.mxu0 0
  %1438 = vmatpush1.bf16.msra.mxu0 %v961
  %1439 = vmatprep.subr.bf16.mxu0 0
  %1440 = vmatpush1.bf16.msra.mxu0 %v960
  %1441 = vmatprep.subr.bf16.mxu0 0
  %1442 = vmatpush1.bf16.msra.mxu0 %v959
  %1443 = vmatprep.subr.bf16.mxu0 0
  %1444 = vmatpush2.bf16.msra.mxu0 0
  %1445 = vmatprep.subr.bf16.mxu0 0
  %1446 = vmatpush2.bf16.msra.mxu0 0
  %1447 = vmatprep.subr.bf16.mxu0 0
  %1448 = vmatpush2.bf16.msra.mxu0 0
  %1449 = vmatprep.subr.bf16.mxu0 0
  %1450 = vmatpush2.bf16.msra.mxu0 0
  %1451 = vmatprep.subr.bf16.mxu0 0
  %1452 = vmatpush2.bf16.msra.mxu0 0
  %1453 = vmatprep.subr.bf16.mxu0 0
  %1454 = vmatpush2.bf16.msra.mxu0 0
  %1455 = vmatprep.subr.bf16.mxu0 0
  %1456 = vmatpush2.bf16.msra.mxu0 0
  %1457 = vmatprep.subr.bf16.mxu0 0
  %1458 = vmatpush2.bf16.msra.mxu0 0
  %1459 = vmatprep.mubr.bf16.mxu0 0
  %1460 = vmatmul.mubr.bf16.gmra.mxu0 %v471
  %v1461 = vpop.f32.mrf.mxu0
  %v1462 = vadd.f32 %v1365, %v1461
  %v1463 = vpop.f32.mrf.mxu0
  %v1464 = vpop.f32.mrf.mxu0
  %v1465 = vadd.f32 %v1368, %v1464
  %v1466 = vpop.f32.mrf.mxu0
  %1467 = vmatprep.mubr.bf16.mxu0 0
  %1468 = vmatmul.mubr.bf16.gmra.mxu0 %v480
  %v1469 = vpop.f32.mrf.mxu0
  %v1470 = vadd.f32 %v1373, %v1469
  %v1471 = vpop.f32.mrf.mxu0
  %v1472 = vpop.f32.mrf.mxu0
  %v1473 = vadd.f32 %v1376, %v1472
  %v1474 = vpop.f32.mrf.mxu0
  %1475 = vmatprep.mubr.bf16.mxu0 0
  %1476 = vmatmul.mubr.bf16.gmra.mxu0 %v489
  %v1477 = vpop.f32.mrf.mxu0
  %v1478 = vadd.f32 %v1381, %v1477
  %v1479 = vpop.f32.mrf.mxu0
  %v1480 = vpop.f32.mrf.mxu0
  %v1481 = vadd.f32 %v1384, %v1480
  %v1482 = vpop.f32.mrf.mxu0
  %1483 = vmatprep.mubr.bf16.mxu0 0
  %1484 = vmatmul.mubr.bf16.gmra.mxu0 %v498
  %v1485 = vpop.f32.mrf.mxu0
  %v1486 = vadd.f32 %v1389, %v1485
  %v1487 = vpop.f32.mrf.mxu0
  %v1488 = vpop.f32.mrf.mxu0
  %v1489 = vadd.f32 %v1392, %v1488
  %v1490 = vpop.f32.mrf.mxu0
  %1491 = vmatprep.mubr.bf16.mxu0 0
  %1492 = vmatmul.mubr.bf16.gmra.mxu0 %v507
  %v1493 = vpop.f32.mrf.mxu0
  %v1494 = vadd.f32 %v1397, %v1493
  %v1495 = vpop.f32.mrf.mxu0
  %v1496 = vpop.f32.mrf.mxu0
  %v1497 = vadd.f32 %v1400, %v1496
  %v1498 = vpop.f32.mrf.mxu0
  %1499 = vmatprep.mubr.bf16.mxu0 0
  %1500 = vmatmul.mubr.bf16.gmra.mxu0 %v516
  %v1501 = vpop.f32.mrf.mxu0
  %v1502 = vadd.f32 %v1405, %v1501
  %v1503 = vpop.f32.mrf.mxu0
  %v1504 = vpop.f32.mrf.mxu0
  %v1505 = vadd.f32 %v1408, %v1504
  %v1506 = vpop.f32.mrf.mxu0
  %1507 = vmatprep.mubr.bf16.mxu0 0
  %1508 = vmatmul.mubr.bf16.gmra.mxu0 %v525
  %v1509 = vpop.f32.mrf.mxu0
  %v1510 = vadd.f32 %v1413, %v1509
  %v1511 = vpop.f32.mrf.mxu0
  %v1512 = vpop.f32.mrf.mxu0
  %v1513 = vadd.f32 %v1416, %v1512
  %v1514 = vpop.f32.mrf.mxu0
  %1515 = vmatprep.mubr.bf16.mxu0 0
  %1516 = vmatmul.mubr.bf16.gmra.mxu0 %v534
  %v1517 = vpop.f32.mrf.mxu0
  %v1518 = vadd.f32 %v1421, %v1517
  %v1519 = vpop.f32.mrf.mxu0
  %v1520 = vpop.f32.mrf.mxu0
  %v1521 = vadd.f32 %v1424, %v1520
  %v1522 = vpop.f32.mrf.mxu0
  %1523 = vdwg.mxu0
  %1524 = vst [vmem:[%s2] sm:$0xff] %v1462
  %1525 = vst [vmem:[%s2 + $0x8] sm:$0xff] %v1465
  %1526 = vst [vmem:[%s2 + $0x10] sm:$0xff] %v1470
  %1527 = vst [vmem:[%s2 + $0x18] sm:$0xff] %v1473
  %1528 = vst [vmem:[%s2 + $0x20] sm:$0xff] %v1478
  %1529 = vst [vmem:[%s2 + $0x28] sm:$0xff] %v1481
  %1530 = vst [vmem:[%s2 + $0x30] sm:$0xff] %v1486
  %1531 = vst [vmem:[%s2 + $0x38] sm:$0xff] %v1489
  %1532 = vst [vmem:[%s2 + $0x40] sm:$0xff] %v1494
  %1533 = vst [vmem:[%s2 + $0x48] sm:$0xff] %v1497
  %1534 = vst [vmem:[%s2 + $0x50] sm:$0xff] %v1502
  %1535 = vst [vmem:[%s2 + $0x58] sm:$0xff] %v1505
  %1536 = vst [vmem:[%s2 + $0x60] sm:$0xff] %v1510
  %1537 = vst [vmem:[%s2 + $0x68] sm:$0xff] %v1513
  %1538 = vst [vmem:[%s2 + $0x70] sm:$0xff] %v1518
  %1539 = vst [vmem:[%s2 + $0x78] sm:$0xff] %v1521
  %v1540 = vadd.f32 %v1462, %v1465
  %v1541 = vadd.f32 %v1540, %v1470
  %v1542 = vadd.f32 %v1541, %v1473
  %v1543 = vadd.f32 %v1542, %v1478
  %v1544 = vadd.f32 %v1543, %v1481
  %v1545 = vadd.f32 %v1544, %v1486
  %v1546 = vadd.f32 %v1545, %v1489
  %v1547 = vadd.f32 %v1546, %v1494
  %v1548 = vadd.f32 %v1547, %v1497
  %v1549 = vadd.f32 %v1548, %v1502
  %v1550 = vadd.f32 %v1549, %v1505
  %v1551 = vadd.f32 %v1550, %v1510
  %v1552 = vadd.f32 %v1551, %v1513
  %v1553 = vadd.f32 %v1552, %v1518
  %v1554 = vadd.f32 %v1553, %v1521
  %v1555 = vrot.slane %v1554, 4
  %v1556 = vadd.f32 %v1554, %v1555
  %v1557 = vrot.slane %v1556, 2
  %v1558 = vadd.f32 %v1556, %v1557
  %v1559 = vrot.slane %v1558, 1
  %v1560 = vadd.f32 %v1558, %v1559
  %1561 = vst [vmem:[%s3] sm:$0x1] %v1560
  %v1562 = vmul.f32 %v1462, %v1462
  %v1563 = vmul.f32 %v1465, %v1465
  %v1564 = vmul.f32 %v1470, %v1470
  %v1565 = vmul.f32 %v1473, %v1473
  %v1566 = vmul.f32 %v1478, %v1478
  %v1567 = vmul.f32 %v1481, %v1481
  %v1568 = vmul.f32 %v1486, %v1486
  %v1569 = vmul.f32 %v1489, %v1489
  %v1570 = vmul.f32 %v1494, %v1494
  %v1571 = vmul.f32 %v1497, %v1497
  %v1572 = vmul.f32 %v1502, %v1502
  %v1573 = vmul.f32 %v1505, %v1505
  %v1574 = vmul.f32 %v1510, %v1510
  %v1575 = vmul.f32 %v1513, %v1513
  %v1576 = vmul.f32 %v1518, %v1518
  %v1577 = vmul.f32 %v1521, %v1521
  %v1578 = vadd.f32 %v1562, %v1563
  %v1579 = vadd.f32 %v1578, %v1564
  %v1580 = vadd.f32 %v1579, %v1565
  %v1581 = vadd.f32 %v1580, %v1566
  %v1582 = vadd.f32 %v1581, %v1567
  %v1583 = vadd.f32 %v1582, %v1568
  %v1584 = vadd.f32 %v1583, %v1569
  %v1585 = vadd.f32 %v1584, %v1570
  %v1586 = vadd.f32 %v1585, %v1571
  %v1587 = vadd.f32 %v1586, %v1572
  %v1588 = vadd.f32 %v1587, %v1573
  %v1589 = vadd.f32 %v1588, %v1574
  %v1590 = vadd.f32 %v1589, %v1575
  %v1591 = vadd.f32 %v1590, %v1576
  %v1592 = vadd.f32 %v1591, %v1577
  %v1593 = vrot.slane %v1592, 4
  %v1594 = vadd.f32 %v1592, %v1593
  %v1595 = vrot.slane %v1594, 2
  %v1596 = vadd.f32 %v1594, %v1595
  %v1597 = vrot.slane %v1596, 1
  %v1598 = vadd.f32 %v1596, %v1597
  %1599 = vst [vmem:[%s4] sm:$0x1] %v1598
  // Predicated region
  $region10: #{bottleneck_forward.8} parent=0 // pred_check
    _
  $region11: #{bottleneck_forward.8} parent=0 // pred_check_branch
    %1601 = sbr.rel (0) target = $region13
  $region12: #{bottleneck_forward.8} parent=0 // pred_region
    _
  $region13: #{bottleneck_forward.8} parent=0 // pred_fallthru
    _
  // Predicated region
  $region14: #{bottleneck_forward.8} parent=0 // pred_check
    _
  $region15: #{bottleneck_forward.8} parent=0 // pred_check_branch
    %1603 = sbr.rel (0) target = $region17
  $region16: #{bottleneck_forward.8} parent=0 // pred_region
    _
  $region17: #{bottleneck_forward.8} parent=0 // pred_fallthru
    _
  // Predicated region
  $region18: #{bottleneck_forward.8} parent=0 // pred_check
    _
  $region19: #{bottleneck_forward.8} parent=0 // pred_check_branch
    %1605 = sbr.rel (0) target = $region21
  $region20: #{bottleneck_forward.8} parent=0 // pred_region
    _
  $region21: #{bottleneck_forward.8} parent=0 // pred_fallthru
    _
  // Predicated region
  $region22: #{bottleneck_forward.8} parent=0 // pred_check
    _
  $region23: #{bottleneck_forward.8} parent=0 // pred_check_branch
    %1607 = sbr.rel (0) target = $region25
  $region24: #{bottleneck_forward.8} parent=0 // pred_region
    _
  $region25: #{bottleneck_forward.8} parent=0 // pred_fallthru
    _
  // Predicated region
  $region26: #{bottleneck_forward.8} parent=0 // pred_check
    _
  $region27: #{bottleneck_forward.8} parent=0 // pred_check_branch
    %1609 = sbr.rel (0) target = $region29
  $region28: #{bottleneck_forward.8} parent=0 // pred_region
    _
  $region29: #{bottleneck_forward.8} parent=0 // pred_fallthru
    _
  // Predicated region
  $region30: #{bottleneck_forward.8} parent=0 // pred_check
    _
  $region31: #{bottleneck_forward.8} parent=0 // pred_check_branch
    %1611 = sbr.rel (0) target = $region33
  $region32: #{bottleneck_forward.8} parent=0 // pred_region
    _
  $region33: #{bottleneck_forward.8} parent=0 // pred_fallthru
    _

</llo_original>
